<compile_context>
chip_gen: v7x
topology: tpu7x:2x2x1
jax: 0.10.0
libtpu: 0.0.40
codegen_flags: <defaults>
</compile_context>

<pallas_src>
import jax
import jax.numpy as jnp
from jax.experimental import pallas as pl
from jax.experimental.pallas import tpu as pltpu

_LANE = 128
_SUBLANE = 8


def _round_up(x, m):
    return ((x + m - 1) // m) * m


def _vmem_budget_bytes():
    """~75% of physical per-core VMEM (48 MiB fallback if query unavailable)."""
    try:
        cap = int(pltpu.get_tpu_info().vmem_capacity_bytes)
    except Exception:
        cap = 64 * 1024 * 1024
    return int(cap * 3 // 4)


# ----------------------------------------------------------------------------
# Shared tiled linear kernel:  y = x @ w_t + b   (bf16 operands, f32 accumulate)
# Used for the hoisted LSTM input projection and for the decoder.
# ----------------------------------------------------------------------------
def linear_kernel(x_ref, w_ref, b_ref, o_ref):
    o_ref[...] = (jnp.dot(x_ref[...], w_ref[...],
                          preferred_element_type=jnp.float32)
                  + b_ref[...]).astype(o_ref.dtype)


def _pick_tile(dim, cap, align):
    if dim <= cap:
        return dim
    return max(align, (cap // align) * align)


def linear(x2d, w_t, b, out_dtype=jnp.bfloat16):
    """x2d: (M, K) @ w_t: (K, N) [bf16, pre-transposed] + b: (N,) -> (M, N)."""
    M, K = x2d.shape
    N = w_t.shape[1]
    x_b = x2d.astype(jnp.bfloat16)
    b2 = b.reshape(1, N).astype(jnp.float32)

    budget = _vmem_budget_bytes()
    tn_cap = 1024 if budget >= (80 << 20) else 512      # bigger tiles on v5e/v6e
    tm = _pick_tile(M, 512, _SUBLANE)
    tn = _pick_tile(N, tn_cap, _LANE)

    # Grid order: N tiles OUTER, M tiles INNER -> the (K, tn) weight block stays
    # VMEM-resident across the whole inner M sweep (read from HBM exactly once).
    grid = (pl.cdiv(N, tn), pl.cdiv(M, tm))
    return pl.pallas_call(
        linear_kernel,
        out_shape=jax.ShapeDtypeStruct((M, N), out_dtype),
        grid=grid,
        in_specs=[pl.BlockSpec((tm, K), lambda j, i: (i, 0)),
                  pl.BlockSpec((K, tn), lambda j, i: (0, j)),
                  pl.BlockSpec((1, tn), lambda j, i: (0, j))],
        out_specs=pl.BlockSpec((tm, tn), lambda j, i: (i, j)),
        compiler_params=pltpu.CompilerParams(
            dimension_semantics=("parallel", "parallel"),
            vmem_limit_bytes=min(budget, 112 << 20)),
    )(x_b, w_t, b2)


# ----------------------------------------------------------------------------
# LSTM recurrence kernel: grid = (batch_blocks, time_chunks); h/c carried in
# the VMEM-resident hn/cn output refs; W_hh^T single-buffered via manual DMA.
# ----------------------------------------------------------------------------
def lstm_chunk_kernel(xp_ref, h0_ref, c0_ref, whh_hbm,
                      y_ref, hn_ref, cn_ref,
                      whh_vmem, dma_sem):
    t = pl.program_id(1)

    @pl.when(t == 0)
    def _():
        # Loop-invariant W_hh^T: copy once into a SINGLE-buffered VMEM scratch.
        cp = pltpu.make_async_copy(whh_hbm, whh_vmem, dma_sem)
        cp.start()
        cp.wait()
        hn_ref[...] = h0_ref[...]
        cn_ref[...] = c0_ref[...]

    Hp = hn_ref.shape[-1]
    TT = xp_ref.shape[0]
    whh = whh_vmem[...]                                   # (Hp, 4*Hp) bf16

    def step(k, carry):
        h, c = carry                                      # (bb, Hp) f32 state
        gates = (xp_ref[k].astype(jnp.float32)
                 + jnp.dot(h.astype(whh.dtype), whh,
                           preferred_element_type=jnp.float32))
        # PyTorch gate ordering (i, f, g, o); gate-major padding puts every
        # gate on a 128-lane boundary so these slices are lane-aligned.
        i_g = jax.nn.sigmoid(gates[:, 0 * Hp:1 * Hp])
        f_g = jax.nn.sigmoid(gates[:, 1 * Hp:2 * Hp])
        g_g = jnp.tanh(gates[:, 2 * Hp:3 * Hp])
        o_g = jax.nn.sigmoid(gates[:, 3 * Hp:4 * Hp])
        c_new = f_g * c + i_g * g_g
        h_new = o_g * jnp.tanh(c_new)
        y_ref[k] = h_new.astype(y_ref.dtype)
        return h_new, c_new

    h, c = jax.lax.fori_loop(0, TT, step, (hn_ref[...], cn_ref[...]),
                             unroll=min(8, TT))
    hn_ref[...] = h
    cn_ref[...] = c


def _pick_time_chunk(T, bb, Hp, budget, cap=64):
    """Largest divisor of T whose double-buffered chunk footprint fits VMEM."""
    fixed = (Hp * 4 * Hp * 2            # W_hh^T scratch (single buffer, bf16)
             + 4 * 2 * bb * Hp * 4      # h0/c0 inputs + hn/cn outputs (f32, x2)
             + (4 << 20))               # margin for Mosaic internal scratch
    per_tt = 2 * bb * (4 * Hp) * 2 + 2 * bb * Hp * 2      # xp + y, double-buffered
    tt = max(1, min(T, cap, (budget - fixed) // max(per_tt, 1)))
    # TODO(synk): pad/mask T instead of falling back to small divisors (prime T).
    while T % tt:
        tt -= 1
    return max(tt, 1)


def lstm_recurrence(xproj, h0, c0, whh_t):
    """One LSTM layer recurrence.  xproj: (T, B_pad, 4*Hp) bf16 (bias folded)."""
    T, B_pad, G = xproj.shape
    Hp = whh_t.shape[0]
    budget = _vmem_budget_bytes()

    # Batch split across the two v7x TensorCores when sublanes stay full.
    nb = 2 if (B_pad >= 16 and B_pad % 16 == 0) else 1
    bb = B_pad // nb

    TT = _pick_time_chunk(T, bb, Hp, budget)
    nt = T // TT

    y, hn, cn = pl.pallas_call(
        lstm_chunk_kernel,
        out_shape=(jax.ShapeDtypeStruct((T, B_pad, Hp), jnp.bfloat16),   # y
                   jax.ShapeDtypeStruct((B_pad, Hp), jnp.float32),       # h_n
                   jax.ShapeDtypeStruct((B_pad, Hp), jnp.float32)),      # c_n
        grid=(nb, nt),
        in_specs=[
            pl.BlockSpec((TT, bb, G), lambda b, t: (t, b, 0)),   # xproj chunk
            pl.BlockSpec((bb, Hp), lambda b, t: (b, 0)),         # h0
            pl.BlockSpec((bb, Hp), lambda b, t: (b, 0)),         # c0
            pl.BlockSpec(memory_space=pl.ANY),                   # W_hh^T (HBM)
        ],
        out_specs=(
            pl.BlockSpec((TT, bb, Hp), lambda b, t: (t, b, 0)),  # y chunk
            pl.BlockSpec((bb, Hp), lambda b, t: (b, 0)),         # h state (resident)
            pl.BlockSpec((bb, Hp), lambda b, t: (b, 0)),         # c state (resident)
        ),
        scratch_shapes=[pltpu.VMEM((Hp, G), jnp.bfloat16),       # single-buffer W_hh^T
                        pltpu.SemaphoreType.DMA],
        compiler_params=pltpu.CompilerParams(
            dimension_semantics=("parallel", "arbitrary"),
            vmem_limit_bytes=min(budget, 112 << 20)),
    )(xproj, h0, c0, whh_t)
    return y, hn, cn


# ----------------------------------------------------------------------------
# Parameter init (deterministic, mirrors RNNModel.__init__ / init_weights)
# ----------------------------------------------------------------------------
def init_params(key, ntoken, ninp, nhid, nlayers):
    initrange = 0.1
    keys = jax.random.split(key, 2 + nlayers)
    params = {
        "encoder_weight": jax.random.uniform(
            keys[0], (ntoken, ninp), jnp.float32, -initrange, initrange),
        "decoder_weight": jax.random.uniform(
            keys[1], (ntoken, nhid), jnp.float32, -initrange, initrange),
        "decoder_bias": jnp.zeros((ntoken,), jnp.float32),
    }
    stdv = 1.0 / (nhid ** 0.5)          # PyTorch default LSTM init
    layers = []
    for l in range(nlayers):
        kin = ninp if l == 0 else nhid
        k0, k1, k2, k3 = jax.random.split(keys[2 + l], 4)
        layers.append(dict(
            w_ih=jax.random.uniform(k0, (4 * nhid, kin), jnp.float32, -stdv, stdv),
            w_hh=jax.random.uniform(k1, (4 * nhid, nhid), jnp.float32, -stdv, stdv),
            b_ih=jax.random.uniform(k2, (4 * nhid,), jnp.float32, -stdv, stdv),
            b_hh=jax.random.uniform(k3, (4 * nhid,), jnp.float32, -stdv, stdv),
        ))
    params["lstm_layers"] = layers
    return params


# ----------------------------------------------------------------------------
# One-time weight prep: gate-major 128-lane padding, pre-transpose, bf16 cast,
# bias folding — so the jitted forward never re-copies / re-transposes weights.
# ----------------------------------------------------------------------------
def _pad_gate_rows(w, H, Hp):
    """(4H, K) -> (4Hp, K), each gate block zero-padded to Hp rows."""
    K = w.shape[-1]
    return jnp.pad(w.reshape(4, H, K),
                   ((0, 0), (0, Hp - H), (0, 0))).reshape(4 * Hp, K)


def _pad_gate_vec(b, H, Hp):
    return jnp.pad(b.reshape(4, H), ((0, 0), (0, Hp - H))).reshape(4 * Hp)


def prepare_params(params, nhid):
    H = nhid
    Hp = _round_up(H, _LANE)
    prep = {
        "encoder_weight": params["encoder_weight"].astype(jnp.bfloat16),
        "decoder_w_t": jnp.pad(params["decoder_weight"],
                               ((0, 0), (0, Hp - H))).T.astype(jnp.bfloat16),
        "decoder_bias": params["decoder_bias"].astype(jnp.float32),
    }
    layers = []
    for l, lp in enumerate(params["lstm_layers"]):
        w_ih = _pad_gate_rows(lp["w_ih"], H, Hp)              # (4Hp, Kin)
        if l > 0:                                             # pad hidden input dim
            w_ih = jnp.pad(w_ih, ((0, 0), (0, Hp - H)))
        w_hh = jnp.pad(lp["w_hh"], ((0, 0), (0, Hp - H)))     # (4H, Hp)
        w_hh = _pad_gate_rows(w_hh, H, Hp)                    # (4Hp, Hp)
        bias = _pad_gate_vec(lp["b_ih"] + lp["b_hh"], H, Hp)
        layers.append(dict(
            w_ih_t=w_ih.T.astype(jnp.bfloat16),               # (Kin, 4Hp)
            whh_t=w_hh.T.astype(jnp.bfloat16),                # (Hp, 4Hp)
            bias=bias.astype(jnp.float32),
        ))
    prep["lstm_layers"] = layers
    return prep


# ----------------------------------------------------------------------------
# Forward pass equivalent to RNNModel.forward (rnn_type='LSTM', eval mode)
# ----------------------------------------------------------------------------
@jax.jit
def rnn_model_forward(prep, tokens, hidden):
    h0, c0 = hidden                        # each (nlayers, B, H) f32
    T, B = tokens.shape
    H = h0.shape[-1]
    Hp = prep["lstm_layers"][0]["whh_t"].shape[0]
    ntoken = prep["decoder_w_t"].shape[1]
    B_pad = _round_up(max(B, _SUBLANE), _SUBLANE)

    # Embedding gather straight to bf16 (encoder weights pre-cast at prep time).
    # TODO(synk): fuse the gather into the input-projection kernel via
    # PrefetchScalarGridSpec + pl.Element row gather to skip one HBM roundtrip.
    emb = jnp.take(prep["encoder_weight"], tokens.reshape(-1), axis=0)
    x = emb.reshape(T, B, -1)
    if B_pad != B:
        x = jnp.pad(x, ((0, 0), (0, B_pad - B), (0, 0)))

    # Zero-pad carried state to (B_pad, Hp); padded lanes provably stay zero.
    h0p = jnp.pad(h0, ((0, 0), (0, B_pad - B), (0, Hp - H)))
    c0p = jnp.pad(c0, ((0, 0), (0, B_pad - B), (0, Hp - H)))

    # Dropout == identity (inference / eval mode).
    hn_list, cn_list = [], []
    # TODO(synk): fuse the per-layer recurrences into a layer wavefront
    # (layer l+1 on step t-1 while layer l runs step t) to raise MXU occupancy.
    for l, lp in enumerate(prep["lstm_layers"]):
        xproj = linear(x.reshape(T * B_pad, -1), lp["w_ih_t"], lp["bias"],
                       out_dtype=jnp.bfloat16).reshape(T, B_pad, 4 * Hp)
        x, hn, cn = lstm_recurrence(xproj, h0p[l], c0p[l], lp["whh_t"])
        hn_list.append(hn)
        cn_list.append(cn)

    # Decoder is HBM-writeback bound -> emit bf16 logits (f32 accumulation).
    decoded = linear(x.reshape(T * B_pad, Hp), prep["decoder_w_t"],
                     prep["decoder_bias"], out_dtype=jnp.bfloat16)
    decoded = decoded.reshape(T, B_pad, ntoken)[:, :B, :]
    hn = jnp.stack(hn_list)[:, :B, :H]
    cn = jnp.stack(cn_list)[:, :B, :H]
    return decoded, (hn, cn)


# ----------------------------------------------------------------------------
# Pure-JAX f32 reference (for correctness checking only)
# ----------------------------------------------------------------------------
def _lstm_layer_ref(x, h0, c0, w_ih, w_hh, b_ih, b_hh):
    H = h0.shape[-1]

    def step(carry, x_t):
        h, c = carry
        gates = x_t @ w_ih.T + h @ w_hh.T + b_ih + b_hh
        i = jax.nn.sigmoid(gates[:, :H])
        f = jax.nn.sigmoid(gates[:, H:2 * H])
        g = jnp.tanh(gates[:, 2 * H:3 * H])
        o = jax.nn.sigmoid(gates[:, 3 * H:])
        c = f * c + i * g
        h = o * jnp.tanh(c)
        return (h, c), h

    (hn, cn), ys = jax.lax.scan(step, (h0, c0), x)
    return ys, hn, cn


def _forward_ref(params, tokens, hidden):
    h0, c0 = hidden
    T, B = tokens.shape
    x = jnp.take(params["encoder_weight"], tokens.reshape(-1), axis=0)
    x = x.reshape(T, B, -1)
    hn_list, cn_list = [], []
    for l, lp in enumerate(params["lstm_layers"]):
        x, hn, cn = _lstm_layer_ref(x, h0[l], c0[l],
                                    lp["w_ih"], lp["w_hh"], lp["b_ih"], lp["b_hh"])
        hn_list.append(hn)
        cn_list.append(cn)
    decoded = (x.reshape(T * B, -1) @ params["decoder_weight"].T
               + params["decoder_bias"])
    return decoded.reshape(T, B, -1), (jnp.stack(hn_list), jnp.stack(cn_list))


if __name__ == "__main__":
    # Small shapes consistent with the module: LSTM language model.
    ntoken, ninp, nhid, nlayers = 64, 32, 32, 2
    T, B = 8, 2

    key = jax.random.PRNGKey(0)
    kp, kt = jax.random.split(key)
    params = init_params(kp, ntoken, ninp, nhid, nlayers)
    prep = prepare_params(params, nhid)            # one-time weight prep
    tokens = jax.random.randint(kt, (T, B), 0, ntoken, dtype=jnp.int32)
    hidden = (jnp.zeros((nlayers, B, nhid), jnp.float32),   # init_hidden()
              jnp.zeros((nlayers, B, nhid), jnp.float32))

    decoded, (hn, cn) = rnn_model_forward(prep, tokens, hidden)
    jax.block_until_ready((decoded, hn, cn))

    # Correctness check vs pure-JAX f32 reference (tolerance accounts for the
    # bf16 weights / bf16 xproj / bf16 logits used in the Pallas path).
    ref_dec, (ref_hn, ref_cn) = _forward_ref(params, tokens, hidden)
    assert decoded.shape == (T, B, ntoken)
    assert hn.shape == (nlayers, B, nhid) and cn.shape == (nlayers, B, nhid)
    assert jnp.allclose(decoded.astype(jnp.float32), ref_dec, atol=5e-2, rtol=5e-2)
    assert jnp.allclose(hn, ref_hn, atol=5e-2, rtol=5e-2)
    assert jnp.allclose(cn, ref_cn, atol=5e-2, rtol=5e-2)

    print("KERNEL_OK")
</pallas_src>

<mosaic_0001>
module attributes {stable_mosaic.version = 11 : i64} {
  func.func @linear_kernel(%arg0: i32, %arg1: i32, %arg2: memref<64x32xbf16, #tpu.memory_space<vmem>>, %arg3: memref<32x512xbf16, #tpu.memory_space<vmem>>, %arg4: memref<1x512xf32, #tpu.memory_space<vmem>>, %arg5: memref<64x512xbf16, #tpu.memory_space<vmem>>) attributes {dimension_semantics = [#tpu.dimension_semantics<parallel>, #tpu.dimension_semantics<parallel>], iteration_bounds = array<i64: 1, 1>, scalar_prefetch = 0 : i64, scratch_operands = 0 : i64, tpu.core_type = #tpu.core_type<tc>, window_params = [{transform_indices = @transform_0, window_bounds = array<i64: 64, 32>}, {transform_indices = @transform_1, window_bounds = array<i64: 32, 512>}, {transform_indices = @transform_2, window_bounds = array<i64: 1, 512>}, {transform_indices = @transform_3, window_bounds = array<i64: 64, 512>}]} {
    %c0 = arith.constant 0 : index
    %c0_0 = arith.constant 0 : index
    %0 = vector.load %arg2[%c0, %c0_0] : memref<64x32xbf16, #tpu.memory_space<vmem>>, vector<64x32xbf16>
    %c0_1 = arith.constant 0 : index
    %c0_2 = arith.constant 0 : index
    %1 = vector.load %arg3[%c0_1, %c0_2] : memref<32x512xbf16, #tpu.memory_space<vmem>>, vector<32x512xbf16>
    %cst = arith.constant dense<0.000000e+00> : vector<64x512xf32>
    %2 = tpu.matmul %0, %1, %cst {dimension_numbers = #tpu.dot_dimension_numbers<[1], [0], [0], [1], [0, 0, 1, 1], [], []>} : vector<64x32xbf16>, vector<32x512xbf16>, vector<64x512xf32> -> vector<64x512xf32>
    %c0_3 = arith.constant 0 : index
    %c0_4 = arith.constant 0 : index
    %3 = vector.load %arg4[%c0_3, %c0_4] : memref<1x512xf32, #tpu.memory_space<vmem>>, vector<1x512xf32>
    %4 = vector.broadcast %3 : vector<1x512xf32> to vector<64x512xf32>
    %5 = arith.addf %2, %4 : vector<64x512xf32>
    %6 = arith.truncf %5 : vector<64x512xf32> to vector<64x512xbf16>
    %c0_5 = arith.constant 0 : index
    %c0_6 = arith.constant 0 : index
    %7 = vector.load %arg5[%c0_5, %c0_6] : memref<64x512xbf16, #tpu.memory_space<vmem>>, vector<64x512xbf16>
    tpu.vector_store %arg5[%c0_5, %c0_6], %6 {strides = array<i32>} : memref<64x512xbf16, #tpu.memory_space<vmem>>, vector<64x512xbf16>,
    return
  }
  func.func @transform_0(%arg0: i32, %arg1: i32) -> (i32, i32) {
    %c0_i32 = arith.constant 0 : i32
    %c0_i32_0 = arith.constant 0 : i32
    return %arg1, %c0_i32 : i32, i32
  }
  func.func @transform_1(%arg0: i32, %arg1: i32) -> (i32, i32) {
    %c0_i32 = arith.constant 0 : i32
    %c0_i32_0 = arith.constant 0 : i32
    return %c0_i32, %arg0 : i32, i32
  }
  func.func @transform_2(%arg0: i32, %arg1: i32) -> (i32, i32) {
    %c0_i32 = arith.constant 0 : i32
    %c0_i32_0 = arith.constant 0 : i32
    return %c0_i32, %arg0 : i32, i32
  }
  func.func @transform_3(%arg0: i32, %arg1: i32) -> (i32, i32) {
    %c0_i32 = arith.constant 0 : i32
    return %arg1, %arg0 : i32, i32
  }
}

module attributes {stable_mosaic.version = 11 : i64} {
  func.func @linear_kernel(%arg0: i32, %arg1: i32, %arg2: memref<64x128xbf16, #tpu.memory_space<vmem>>, %arg3: memref<128x512xbf16, #tpu.memory_space<vmem>>, %arg4: memref<1x512xf32, #tpu.memory_space<vmem>>, %arg5: memref<64x512xbf16, #tpu.memory_space<vmem>>) attributes {dimension_semantics = [#tpu.dimension_semantics<parallel>, #tpu.dimension_semantics<parallel>], iteration_bounds = array<i64: 1, 1>, scalar_prefetch = 0 : i64, scratch_operands = 0 : i64, tpu.core_type = #tpu.core_type<tc>, window_params = [{transform_indices = @transform_0, window_bounds = array<i64: 64, 128>}, {transform_indices = @transform_1, window_bounds = array<i64: 128, 512>}, {transform_indices = @transform_2, window_bounds = array<i64: 1, 512>}, {transform_indices = @transform_3, window_bounds = array<i64: 64, 512>}]} {
    %c0 = arith.constant 0 : index
    %c0_0 = arith.constant 0 : index
    %0 = vector.load %arg2[%c0, %c0_0] : memref<64x128xbf16, #tpu.memory_space<vmem>>, vector<64x128xbf16>
    %c0_1 = arith.constant 0 : index
    %c0_2 = arith.constant 0 : index
    %1 = vector.load %arg3[%c0_1, %c0_2] : memref<128x512xbf16, #tpu.memory_space<vmem>>, vector<128x512xbf16>
    %cst = arith.constant dense<0.000000e+00> : vector<64x512xf32>
    %2 = tpu.matmul %0, %1, %cst {dimension_numbers = #tpu.dot_dimension_numbers<[1], [0], [0], [1], [0, 0, 1, 1], [], []>} : vector<64x128xbf16>, vector<128x512xbf16>, vector<64x512xf32> -> vector<64x512xf32>
    %c0_3 = arith.constant 0 : index
    %c0_4 = arith.constant 0 : index
    %3 = vector.load %arg4[%c0_3, %c0_4] : memref<1x512xf32, #tpu.memory_space<vmem>>, vector<1x512xf32>
    %4 = vector.broadcast %3 : vector<1x512xf32> to vector<64x512xf32>
    %5 = arith.addf %2, %4 : vector<64x512xf32>
    %6 = arith.truncf %5 : vector<64x512xf32> to vector<64x512xbf16>
    %c0_5 = arith.constant 0 : index
    %c0_6 = arith.constant 0 : index
    %7 = vector.load %arg5[%c0_5, %c0_6] : memref<64x512xbf16, #tpu.memory_space<vmem>>, vector<64x512xbf16>
    tpu.vector_store %arg5[%c0_5, %c0_6], %6 {strides = array<i32>} : memref<64x512xbf16, #tpu.memory_space<vmem>>, vector<64x512xbf16>,
    return
  }
  func.func @transform_0(%arg0: i32, %arg1: i32) -> (i32, i32) {
    %c0_i32 = arith.constant 0 : i32
    %c0_i32_0 = arith.constant 0 : i32
    return %arg1, %c0_i32 : i32, i32
  }
  func.func @transform_1(%arg0: i32, %arg1: i32) -> (i32, i32) {
    %c0_i32 = arith.constant 0 : i32
    %c0_i32_0 = arith.constant 0 : i32
    return %c0_i32, %arg0 : i32, i32
  }
  func.func @transform_2(%arg0: i32, %arg1: i32) -> (i32, i32) {
    %c0_i32 = arith.constant 0 : i32
    %c0_i32_0 = arith.constant 0 : i32
    return %c0_i32, %arg0 : i32, i32
  }
  func.func @transform_3(%arg0: i32, %arg1: i32) -> (i32, i32) {
    %c0_i32 = arith.constant 0 : i32
    return %arg1, %arg0 : i32, i32
  }
}

module attributes {stable_mosaic.version = 11 : i64} {
  func.func @lstm_chunk_kernel(%arg0: i32, %arg1: i32, %arg2: memref<8x8x512xbf16, #tpu.memory_space<vmem>>, %arg3: memref<8x128xf32, #tpu.memory_space<vmem>>, %arg4: memref<8x128xf32, #tpu.memory_space<vmem>>, %arg5: memref<128x512xbf16, #tpu.memory_space<any>>, %arg6: memref<8x8x128xbf16, #tpu.memory_space<vmem>>, %arg7: memref<8x128xf32, #tpu.memory_space<vmem>>, %arg8: memref<8x128xf32, #tpu.memory_space<vmem>>, %arg9: memref<128x512xbf16, #tpu.memory_space<vmem>>, %arg10: memref<!tpu.dma_semaphore, #tpu.memory_space<semaphore_mem>>) attributes {dimension_semantics = [#tpu.dimension_semantics<parallel>, #tpu.dimension_semantics<arbitrary>], iteration_bounds = array<i64: 1, 1>, scalar_prefetch = 0 : i64, scratch_operands = 2 : i64, tpu.core_type = #tpu.core_type<tc>, window_params = [{transform_indices = @transform_0, window_bounds = array<i64: 8, 8, 512>}, {transform_indices = @transform_1, window_bounds = array<i64: 8, 128>}, {transform_indices = @transform_2, window_bounds = array<i64: 8, 128>}, {}, {transform_indices = @transform_4, window_bounds = array<i64: 8, 8, 128>}, {transform_indices = @transform_5, window_bounds = array<i64: 8, 128>}, {transform_indices = @transform_6, window_bounds = array<i64: 8, 128>}]} {
    %c0_i32 = arith.constant 0 : i32
    %0 = arith.cmpi eq, %arg1, %c0_i32 : i32
    %1 = arith.extui %0 : i1 to i32
    %c0_i32_0 = arith.constant 0 : i32
    %2 = arith.cmpi ne, %1, %c0_i32_0 : i32
    scf.if %2 {
      tpu.enqueue_dma source(%arg5 : memref<128x512xbf16, #tpu.memory_space<any>>) target(%arg9 : memref<128x512xbf16, #tpu.memory_space<vmem>>) target_semaphore(%arg10 : memref<!tpu.dma_semaphore, #tpu.memory_space<semaphore_mem>>)
      tpu.wait_dma2 semaphore(%arg10 : memref<!tpu.dma_semaphore, #tpu.memory_space<semaphore_mem>>) src(%arg5 : memref<128x512xbf16, #tpu.memory_space<any>>) dst(%arg9 : memref<128x512xbf16, #tpu.memory_space<vmem>>)
      %c0_74 = arith.constant 0 : index
      %c0_75 = arith.constant 0 : index
      %304 = vector.load %arg3[%c0_74, %c0_75] : memref<8x128xf32, #tpu.memory_space<vmem>>, vector<8x128xf32>
      %c0_76 = arith.constant 0 : index
      %c0_77 = arith.constant 0 : index
      %305 = vector.load %arg7[%c0_76, %c0_77] : memref<8x128xf32, #tpu.memory_space<vmem>>, vector<8x128xf32>
      tpu.vector_store %arg7[%c0_76, %c0_77], %304 {strides = array<i32>} : memref<8x128xf32, #tpu.memory_space<vmem>>, vector<8x128xf32>,
      %c0_78 = arith.constant 0 : index
      %c0_79 = arith.constant 0 : index
      %306 = vector.load %arg4[%c0_78, %c0_79] : memref<8x128xf32, #tpu.memory_space<vmem>>, vector<8x128xf32>
      %c0_80 = arith.constant 0 : index
      %c0_81 = arith.constant 0 : index
      %307 = vector.load %arg8[%c0_80, %c0_81] : memref<8x128xf32, #tpu.memory_space<vmem>>, vector<8x128xf32>
      tpu.vector_store %arg8[%c0_80, %c0_81], %306 {strides = array<i32>} : memref<8x128xf32, #tpu.memory_space<vmem>>, vector<8x128xf32>,
    } else {
    }
    %c0 = arith.constant 0 : index
    %c0_1 = arith.constant 0 : index
    %3 = vector.load %arg9[%c0, %c0_1] : memref<128x512xbf16, #tpu.memory_space<vmem>>, vector<128x512xbf16>
    %c0_2 = arith.constant 0 : index
    %c0_3 = arith.constant 0 : index
    %4 = vector.load %arg7[%c0_2, %c0_3] : memref<8x128xf32, #tpu.memory_space<vmem>>, vector<8x128xf32>
    %c0_4 = arith.constant 0 : index
    %c0_5 = arith.constant 0 : index
    %5 = vector.load %arg8[%c0_4, %c0_5] : memref<8x128xf32, #tpu.memory_space<vmem>>, vector<8x128xf32>
    %c0_i32_6 = arith.constant 0 : i32
    %6 = arith.index_cast %c0_i32_6 : i32 to index
    %c0_7 = arith.constant 0 : index
    %c0_8 = arith.constant 0 : index
    %7 = vector.load %arg2[%6, %c0_7, %c0_8] : memref<8x8x512xbf16, #tpu.memory_space<vmem>>, vector<1x8x512xbf16>
    %8 = vector.shape_cast %7 : vector<1x8x512xbf16> to vector<8x512xbf16>
    %9 = arith.extf %8 : vector<8x512xbf16> to vector<8x512xf32>
    %10 = arith.truncf %4 : vector<8x128xf32> to vector<8x128xbf16>
    %cst = arith.constant dense<0.000000e+00> : vector<8x512xf32>
    %11 = tpu.matmul %10, %3, %cst {dimension_numbers = #tpu.dot_dimension_numbers<[1], [0], [0], [1], [0, 0, 1, 1], [], []>} : vector<8x128xbf16>, vector<128x512xbf16>, vector<8x512xf32> -> vector<8x512xf32>
    %12 = arith.addf %9, %11 : vector<8x512xf32>
    %13 = vector.extract_strided_slice %12 {offsets = [0, 0], sizes = [8, 128], strides = [1, 1]} : vector<8x512xf32> to vector<8x128xf32>
    %14 = arith.negf %13 : vector<8x128xf32>
    %15 = math.exp %14 : vector<8x128xf32>
    %cst_9 = arith.constant 1.000000e+00 : f32
    %16 = vector.broadcast %cst_9 : f32 to vector<8x128xf32>
    %17 = arith.addf %16, %15 : vector<8x128xf32>
    %18 = arith.divf %16, %17 : vector<8x128xf32>
    %19 = vector.extract_strided_slice %12 {offsets = [0, 128], sizes = [8, 128], strides = [1, 1]} : vector<8x512xf32> to vector<8x128xf32>
    %20 = arith.negf %19 : vector<8x128xf32>
    %21 = math.exp %20 : vector<8x128xf32>
    %cst_10 = arith.constant 1.000000e+00 : f32
    %22 = vector.broadcast %cst_10 : f32 to vector<8x128xf32>
    %23 = arith.addf %22, %21 : vector<8x128xf32>
    %24 = arith.divf %22, %23 : vector<8x128xf32>
    %25 = vector.extract_strided_slice %12 {offsets = [0, 256], sizes = [8, 128], strides = [1, 1]} : vector<8x512xf32> to vector<8x128xf32>
    %26 = math.tanh %25 : vector<8x128xf32>
    %27 = vector.extract_strided_slice %12 {offsets = [0, 384], sizes = [8, 128], strides = [1, 1]} : vector<8x512xf32> to vector<8x128xf32>
    %28 = arith.negf %27 : vector<8x128xf32>
    %29 = math.exp %28 : vector<8x128xf32>
    %cst_11 = arith.constant 1.000000e+00 : f32
    %30 = vector.broadcast %cst_11 : f32 to vector<8x128xf32>
    %31 = arith.addf %30, %29 : vector<8x128xf32>
    %32 = arith.divf %30, %31 : vector<8x128xf32>
    %33 = arith.mulf %24, %5 : vector<8x128xf32>
    %34 = arith.mulf %18, %26 : vector<8x128xf32>
    %35 = arith.addf %33, %34 : vector<8x128xf32>
    %36 = math.tanh %35 : vector<8x128xf32>
    %37 = arith.mulf %32, %36 : vector<8x128xf32>
    %38 = arith.truncf %37 : vector<8x128xf32> to vector<8x128xbf16>
    %39 = arith.index_cast %c0_i32_6 : i32 to index
    %c0_12 = arith.constant 0 : index
    %c0_13 = arith.constant 0 : index
    %40 = vector.load %arg6[%39, %c0_12, %c0_13] : memref<8x8x128xbf16, #tpu.memory_space<vmem>>, vector<1x8x128xbf16>
    %41 = vector.shape_cast %40 : vector<1x8x128xbf16> to vector<8x128xbf16>
    %42 = vector.shape_cast %38 : vector<8x128xbf16> to vector<1x8x128xbf16>
    tpu.vector_store %arg6[%39, %c0_12, %c0_13], %42 {strides = array<i32>} : memref<8x8x128xbf16, #tpu.memory_space<vmem>>, vector<1x8x128xbf16>,
    %c1_i32 = arith.constant 1 : i32
    %43 = arith.index_cast %c1_i32 : i32 to index
    %c0_14 = arith.constant 0 : index
    %c0_15 = arith.constant 0 : index
    %44 = vector.load %arg2[%43, %c0_14, %c0_15] : memref<8x8x512xbf16, #tpu.memory_space<vmem>>, vector<1x8x512xbf16>
    %45 = vector.shape_cast %44 : vector<1x8x512xbf16> to vector<8x512xbf16>
    %46 = arith.extf %45 : vector<8x512xbf16> to vector<8x512xf32>
    %47 = arith.truncf %37 : vector<8x128xf32> to vector<8x128xbf16>
    %cst_16 = arith.constant dense<0.000000e+00> : vector<8x512xf32>
    %48 = tpu.matmul %47, %3, %cst_16 {dimension_numbers = #tpu.dot_dimension_numbers<[1], [0], [0], [1], [0, 0, 1, 1], [], []>} : vector<8x128xbf16>, vector<128x512xbf16>, vector<8x512xf32> -> vector<8x512xf32>
    %49 = arith.addf %46, %48 : vector<8x512xf32>
    %50 = vector.extract_strided_slice %49 {offsets = [0, 0], sizes = [8, 128], strides = [1, 1]} : vector<8x512xf32> to vector<8x128xf32>
    %51 = arith.negf %50 : vector<8x128xf32>
    %52 = math.exp %51 : vector<8x128xf32>
    %cst_17 = arith.constant 1.000000e+00 : f32
    %53 = vector.broadcast %cst_17 : f32 to vector<8x128xf32>
    %54 = arith.addf %53, %52 : vector<8x128xf32>
    %55 = arith.divf %53, %54 : vector<8x128xf32>
    %56 = vector.extract_strided_slice %49 {offsets = [0, 128], sizes = [8, 128], strides = [1, 1]} : vector<8x512xf32> to vector<8x128xf32>
    %57 = arith.negf %56 : vector<8x128xf32>
    %58 = math.exp %57 : vector<8x128xf32>
    %cst_18 = arith.constant 1.000000e+00 : f32
    %59 = vector.broadcast %cst_18 : f32 to vector<8x128xf32>
    %60 = arith.addf %59, %58 : vector<8x128xf32>
    %61 = arith.divf %59, %60 : vector<8x128xf32>
    %62 = vector.extract_strided_slice %49 {offsets = [0, 256], sizes = [8, 128], strides = [1, 1]} : vector<8x512xf32> to vector<8x128xf32>
    %63 = math.tanh %62 : vector<8x128xf32>
    %64 = vector.extract_strided_slice %49 {offsets = [0, 384], sizes = [8, 128], strides = [1, 1]} : vector<8x512xf32> to vector<8x128xf32>
    %65 = arith.negf %64 : vector<8x128xf32>
    %66 = math.exp %65 : vector<8x128xf32>
    %cst_19 = arith.constant 1.000000e+00 : f32
    %67 = vector.broadcast %cst_19 : f32 to vector<8x128xf32>
    %68 = arith.addf %67, %66 : vector<8x128xf32>
    %69 = arith.divf %67, %68 : vector<8x128xf32>
    %70 = arith.mulf %61, %35 : vector<8x128xf32>
    %71 = arith.mulf %55, %63 : vector<8x128xf32>
    %72 = arith.addf %70, %71 : vector<8x128xf32>
    %73 = math.tanh %72 : vector<8x128xf32>
    %74 = arith.mulf %69, %73 : vector<8x128xf32>
    %75 = arith.truncf %74 : vector<8x128xf32> to vector<8x128xbf16>
    %76 = arith.index_cast %c1_i32 : i32 to index
    %c0_20 = arith.constant 0 : index
    %c0_21 = arith.constant 0 : index
    %77 = vector.load %arg6[%76, %c0_20, %c0_21] : memref<8x8x128xbf16, #tpu.memory_space<vmem>>, vector<1x8x128xbf16>
    %78 = vector.shape_cast %77 : vector<1x8x128xbf16> to vector<8x128xbf16>
    %79 = vector.shape_cast %75 : vector<8x128xbf16> to vector<1x8x128xbf16>
    tpu.vector_store %arg6[%76, %c0_20, %c0_21], %79 {strides = array<i32>} : memref<8x8x128xbf16, #tpu.memory_space<vmem>>, vector<1x8x128xbf16>,
    %c2_i32 = arith.constant 2 : i32
    %80 = arith.index_cast %c2_i32 : i32 to index
    %c0_22 = arith.constant 0 : index
    %c0_23 = arith.constant 0 : index
    %81 = vector.load %arg2[%80, %c0_22, %c0_23] : memref<8x8x512xbf16, #tpu.memory_space<vmem>>, vector<1x8x512xbf16>
    %82 = vector.shape_cast %81 : vector<1x8x512xbf16> to vector<8x512xbf16>
    %83 = arith.extf %82 : vector<8x512xbf16> to vector<8x512xf32>
    %84 = arith.truncf %74 : vector<8x128xf32> to vector<8x128xbf16>
    %cst_24 = arith.constant dense<0.000000e+00> : vector<8x512xf32>
    %85 = tpu.matmul %84, %3, %cst_24 {dimension_numbers = #tpu.dot_dimension_numbers<[1], [0], [0], [1], [0, 0, 1, 1], [], []>} : vector<8x128xbf16>, vector<128x512xbf16>, vector<8x512xf32> -> vector<8x512xf32>
    %86 = arith.addf %83, %85 : vector<8x512xf32>
    %87 = vector.extract_strided_slice %86 {offsets = [0, 0], sizes = [8, 128], strides = [1, 1]} : vector<8x512xf32> to vector<8x128xf32>
    %88 = arith.negf %87 : vector<8x128xf32>
    %89 = math.exp %88 : vector<8x128xf32>
    %cst_25 = arith.constant 1.000000e+00 : f32
    %90 = vector.broadcast %cst_25 : f32 to vector<8x128xf32>
    %91 = arith.addf %90, %89 : vector<8x128xf32>
    %92 = arith.divf %90, %91 : vector<8x128xf32>
    %93 = vector.extract_strided_slice %86 {offsets = [0, 128], sizes = [8, 128], strides = [1, 1]} : vector<8x512xf32> to vector<8x128xf32>
    %94 = arith.negf %93 : vector<8x128xf32>
    %95 = math.exp %94 : vector<8x128xf32>
    %cst_26 = arith.constant 1.000000e+00 : f32
    %96 = vector.broadcast %cst_26 : f32 to vector<8x128xf32>
    %97 = arith.addf %96, %95 : vector<8x128xf32>
    %98 = arith.divf %96, %97 : vector<8x128xf32>
    %99 = vector.extract_strided_slice %86 {offsets = [0, 256], sizes = [8, 128], strides = [1, 1]} : vector<8x512xf32> to vector<8x128xf32>
    %100 = math.tanh %99 : vector<8x128xf32>
    %101 = vector.extract_strided_slice %86 {offsets = [0, 384], sizes = [8, 128], strides = [1, 1]} : vector<8x512xf32> to vector<8x128xf32>
    %102 = arith.negf %101 : vector<8x128xf32>
    %103 = math.exp %102 : vector<8x128xf32>
    %cst_27 = arith.constant 1.000000e+00 : f32
    %104 = vector.broadcast %cst_27 : f32 to vector<8x128xf32>
    %105 = arith.addf %104, %103 : vector<8x128xf32>
    %106 = arith.divf %104, %105 : vector<8x128xf32>
    %107 = arith.mulf %98, %72 : vector<8x128xf32>
    %108 = arith.mulf %92, %100 : vector<8x128xf32>
    %109 = arith.addf %107, %108 : vector<8x128xf32>
    %110 = math.tanh %109 : vector<8x128xf32>
    %111 = arith.mulf %106, %110 : vector<8x128xf32>
    %112 = arith.truncf %111 : vector<8x128xf32> to vector<8x128xbf16>
    %113 = arith.index_cast %c2_i32 : i32 to index
    %c0_28 = arith.constant 0 : index
    %c0_29 = arith.constant 0 : index
    %114 = vector.load %arg6[%113, %c0_28, %c0_29] : memref<8x8x128xbf16, #tpu.memory_space<vmem>>, vector<1x8x128xbf16>
    %115 = vector.shape_cast %114 : vector<1x8x128xbf16> to vector<8x128xbf16>
    %116 = vector.shape_cast %112 : vector<8x128xbf16> to vector<1x8x128xbf16>
    tpu.vector_store %arg6[%113, %c0_28, %c0_29], %116 {strides = array<i32>} : memref<8x8x128xbf16, #tpu.memory_space<vmem>>, vector<1x8x128xbf16>,
    %c3_i32 = arith.constant 3 : i32
    %117 = arith.index_cast %c3_i32 : i32 to index
    %c0_30 = arith.constant 0 : index
    %c0_31 = arith.constant 0 : index
    %118 = vector.load %arg2[%117, %c0_30, %c0_31] : memref<8x8x512xbf16, #tpu.memory_space<vmem>>, vector<1x8x512xbf16>
    %119 = vector.shape_cast %118 : vector<1x8x512xbf16> to vector<8x512xbf16>
    %120 = arith.extf %119 : vector<8x512xbf16> to vector<8x512xf32>
    %121 = arith.truncf %111 : vector<8x128xf32> to vector<8x128xbf16>
    %cst_32 = arith.constant dense<0.000000e+00> : vector<8x512xf32>
    %122 = tpu.matmul %121, %3, %cst_32 {dimension_numbers = #tpu.dot_dimension_numbers<[1], [0], [0], [1], [0, 0, 1, 1], [], []>} : vector<8x128xbf16>, vector<128x512xbf16>, vector<8x512xf32> -> vector<8x512xf32>
    %123 = arith.addf %120, %122 : vector<8x512xf32>
    %124 = vector.extract_strided_slice %123 {offsets = [0, 0], sizes = [8, 128], strides = [1, 1]} : vector<8x512xf32> to vector<8x128xf32>
    %125 = arith.negf %124 : vector<8x128xf32>
    %126 = math.exp %125 : vector<8x128xf32>
    %cst_33 = arith.constant 1.000000e+00 : f32
    %127 = vector.broadcast %cst_33 : f32 to vector<8x128xf32>
    %128 = arith.addf %127, %126 : vector<8x128xf32>
    %129 = arith.divf %127, %128 : vector<8x128xf32>
    %130 = vector.extract_strided_slice %123 {offsets = [0, 128], sizes = [8, 128], strides = [1, 1]} : vector<8x512xf32> to vector<8x128xf32>
    %131 = arith.negf %130 : vector<8x128xf32>
    %132 = math.exp %131 : vector<8x128xf32>
    %cst_34 = arith.constant 1.000000e+00 : f32
    %133 = vector.broadcast %cst_34 : f32 to vector<8x128xf32>
    %134 = arith.addf %133, %132 : vector<8x128xf32>
    %135 = arith.divf %133, %134 : vector<8x128xf32>
    %136 = vector.extract_strided_slice %123 {offsets = [0, 256], sizes = [8, 128], strides = [1, 1]} : vector<8x512xf32> to vector<8x128xf32>
    %137 = math.tanh %136 : vector<8x128xf32>
    %138 = vector.extract_strided_slice %123 {offsets = [0, 384], sizes = [8, 128], strides = [1, 1]} : vector<8x512xf32> to vector<8x128xf32>
    %139 = arith.negf %138 : vector<8x128xf32>
    %140 = math.exp %139 : vector<8x128xf32>
    %cst_35 = arith.constant 1.000000e+00 : f32
    %141 = vector.broadcast %cst_35 : f32 to vector<8x128xf32>
    %142 = arith.addf %141, %140 : vector<8x128xf32>
    %143 = arith.divf %141, %142 : vector<8x128xf32>
    %144 = arith.mulf %135, %109 : vector<8x128xf32>
    %145 = arith.mulf %129, %137 : vector<8x128xf32>
    %146 = arith.addf %144, %145 : vector<8x128xf32>
    %147 = math.tanh %146 : vector<8x128xf32>
    %148 = arith.mulf %143, %147 : vector<8x128xf32>
    %149 = arith.truncf %148 : vector<8x128xf32> to vector<8x128xbf16>
    %150 = arith.index_cast %c3_i32 : i32 to index
    %c0_36 = arith.constant 0 : index
    %c0_37 = arith.constant 0 : index
    %151 = vector.load %arg6[%150, %c0_36, %c0_37] : memref<8x8x128xbf16, #tpu.memory_space<vmem>>, vector<1x8x128xbf16>
    %152 = vector.shape_cast %151 : vector<1x8x128xbf16> to vector<8x128xbf16>
    %153 = vector.shape_cast %149 : vector<8x128xbf16> to vector<1x8x128xbf16>
    tpu.vector_store %arg6[%150, %c0_36, %c0_37], %153 {strides = array<i32>} : memref<8x8x128xbf16, #tpu.memory_space<vmem>>, vector<1x8x128xbf16>,
    %c4_i32 = arith.constant 4 : i32
    %154 = arith.index_cast %c4_i32 : i32 to index
    %c0_38 = arith.constant 0 : index
    %c0_39 = arith.constant 0 : index
    %155 = vector.load %arg2[%154, %c0_38, %c0_39] : memref<8x8x512xbf16, #tpu.memory_space<vmem>>, vector<1x8x512xbf16>
    %156 = vector.shape_cast %155 : vector<1x8x512xbf16> to vector<8x512xbf16>
    %157 = arith.extf %156 : vector<8x512xbf16> to vector<8x512xf32>
    %158 = arith.truncf %148 : vector<8x128xf32> to vector<8x128xbf16>
    %cst_40 = arith.constant dense<0.000000e+00> : vector<8x512xf32>
    %159 = tpu.matmul %158, %3, %cst_40 {dimension_numbers = #tpu.dot_dimension_numbers<[1], [0], [0], [1], [0, 0, 1, 1], [], []>} : vector<8x128xbf16>, vector<128x512xbf16>, vector<8x512xf32> -> vector<8x512xf32>
    %160 = arith.addf %157, %159 : vector<8x512xf32>
    %161 = vector.extract_strided_slice %160 {offsets = [0, 0], sizes = [8, 128], strides = [1, 1]} : vector<8x512xf32> to vector<8x128xf32>
    %162 = arith.negf %161 : vector<8x128xf32>
    %163 = math.exp %162 : vector<8x128xf32>
    %cst_41 = arith.constant 1.000000e+00 : f32
    %164 = vector.broadcast %cst_41 : f32 to vector<8x128xf32>
    %165 = arith.addf %164, %163 : vector<8x128xf32>
    %166 = arith.divf %164, %165 : vector<8x128xf32>
    %167 = vector.extract_strided_slice %160 {offsets = [0, 128], sizes = [8, 128], strides = [1, 1]} : vector<8x512xf32> to vector<8x128xf32>
    %168 = arith.negf %167 : vector<8x128xf32>
    %169 = math.exp %168 : vector<8x128xf32>
    %cst_42 = arith.constant 1.000000e+00 : f32
    %170 = vector.broadcast %cst_42 : f32 to vector<8x128xf32>
    %171 = arith.addf %170, %169 : vector<8x128xf32>
    %172 = arith.divf %170, %171 : vector<8x128xf32>
    %173 = vector.extract_strided_slice %160 {offsets = [0, 256], sizes = [8, 128], strides = [1, 1]} : vector<8x512xf32> to vector<8x128xf32>
    %174 = math.tanh %173 : vector<8x128xf32>
    %175 = vector.extract_strided_slice %160 {offsets = [0, 384], sizes = [8, 128], strides = [1, 1]} : vector<8x512xf32> to vector<8x128xf32>
    %176 = arith.negf %175 : vector<8x128xf32>
    %177 = math.exp %176 : vector<8x128xf32>
    %cst_43 = arith.constant 1.000000e+00 : f32
    %178 = vector.broadcast %cst_43 : f32 to vector<8x128xf32>
    %179 = arith.addf %178, %177 : vector<8x128xf32>
    %180 = arith.divf %178, %179 : vector<8x128xf32>
    %181 = arith.mulf %172, %146 : vector<8x128xf32>
    %182 = arith.mulf %166, %174 : vector<8x128xf32>
    %183 = arith.addf %181, %182 : vector<8x128xf32>
    %184 = math.tanh %183 : vector<8x128xf32>
    %185 = arith.mulf %180, %184 : vector<8x128xf32>
    %186 = arith.truncf %185 : vector<8x128xf32> to vector<8x128xbf16>
    %187 = arith.index_cast %c4_i32 : i32 to index
    %c0_44 = arith.constant 0 : index
    %c0_45 = arith.constant 0 : index
    %188 = vector.load %arg6[%187, %c0_44, %c0_45] : memref<8x8x128xbf16, #tpu.memory_space<vmem>>, vector<1x8x128xbf16>
    %189 = vector.shape_cast %188 : vector<1x8x128xbf16> to vector<8x128xbf16>
    %190 = vector.shape_cast %186 : vector<8x128xbf16> to vector<1x8x128xbf16>
    tpu.vector_store %arg6[%187, %c0_44, %c0_45], %190 {strides = array<i32>} : memref<8x8x128xbf16, #tpu.memory_space<vmem>>, vector<1x8x128xbf16>,
    %c5_i32 = arith.constant 5 : i32
    %191 = arith.index_cast %c5_i32 : i32 to index
    %c0_46 = arith.constant 0 : index
    %c0_47 = arith.constant 0 : index
    %192 = vector.load %arg2[%191, %c0_46, %c0_47] : memref<8x8x512xbf16, #tpu.memory_space<vmem>>, vector<1x8x512xbf16>
    %193 = vector.shape_cast %192 : vector<1x8x512xbf16> to vector<8x512xbf16>
    %194 = arith.extf %193 : vector<8x512xbf16> to vector<8x512xf32>
    %195 = arith.truncf %185 : vector<8x128xf32> to vector<8x128xbf16>
    %cst_48 = arith.constant dense<0.000000e+00> : vector<8x512xf32>
    %196 = tpu.matmul %195, %3, %cst_48 {dimension_numbers = #tpu.dot_dimension_numbers<[1], [0], [0], [1], [0, 0, 1, 1], [], []>} : vector<8x128xbf16>, vector<128x512xbf16>, vector<8x512xf32> -> vector<8x512xf32>
    %197 = arith.addf %194, %196 : vector<8x512xf32>
    %198 = vector.extract_strided_slice %197 {offsets = [0, 0], sizes = [8, 128], strides = [1, 1]} : vector<8x512xf32> to vector<8x128xf32>
    %199 = arith.negf %198 : vector<8x128xf32>
    %200 = math.exp %199 : vector<8x128xf32>
    %cst_49 = arith.constant 1.000000e+00 : f32
    %201 = vector.broadcast %cst_49 : f32 to vector<8x128xf32>
    %202 = arith.addf %201, %200 : vector<8x128xf32>
    %203 = arith.divf %201, %202 : vector<8x128xf32>
    %204 = vector.extract_strided_slice %197 {offsets = [0, 128], sizes = [8, 128], strides = [1, 1]} : vector<8x512xf32> to vector<8x128xf32>
    %205 = arith.negf %204 : vector<8x128xf32>
    %206 = math.exp %205 : vector<8x128xf32>
    %cst_50 = arith.constant 1.000000e+00 : f32
    %207 = vector.broadcast %cst_50 : f32 to vector<8x128xf32>
    %208 = arith.addf %207, %206 : vector<8x128xf32>
    %209 = arith.divf %207, %208 : vector<8x128xf32>
    %210 = vector.extract_strided_slice %197 {offsets = [0, 256], sizes = [8, 128], strides = [1, 1]} : vector<8x512xf32> to vector<8x128xf32>
    %211 = math.tanh %210 : vector<8x128xf32>
    %212 = vector.extract_strided_slice %197 {offsets = [0, 384], sizes = [8, 128], strides = [1, 1]} : vector<8x512xf32> to vector<8x128xf32>
    %213 = arith.negf %212 : vector<8x128xf32>
    %214 = math.exp %213 : vector<8x128xf32>
    %cst_51 = arith.constant 1.000000e+00 : f32
    %215 = vector.broadcast %cst_51 : f32 to vector<8x128xf32>
    %216 = arith.addf %215, %214 : vector<8x128xf32>
    %217 = arith.divf %215, %216 : vector<8x128xf32>
    %218 = arith.mulf %209, %183 : vector<8x128xf32>
    %219 = arith.mulf %203, %211 : vector<8x128xf32>
    %220 = arith.addf %218, %219 : vector<8x128xf32>
    %221 = math.tanh %220 : vector<8x128xf32>
    %222 = arith.mulf %217, %221 : vector<8x128xf32>
    %223 = arith.truncf %222 : vector<8x128xf32> to vector<8x128xbf16>
    %224 = arith.index_cast %c5_i32 : i32 to index
    %c0_52 = arith.constant 0 : index
    %c0_53 = arith.constant 0 : index
    %225 = vector.load %arg6[%224, %c0_52, %c0_53] : memref<8x8x128xbf16, #tpu.memory_space<vmem>>, vector<1x8x128xbf16>
    %226 = vector.shape_cast %225 : vector<1x8x128xbf16> to vector<8x128xbf16>
    %227 = vector.shape_cast %223 : vector<8x128xbf16> to vector<1x8x128xbf16>
    tpu.vector_store %arg6[%224, %c0_52, %c0_53], %227 {strides = array<i32>} : memref<8x8x128xbf16, #tpu.memory_space<vmem>>, vector<1x8x128xbf16>,
    %c6_i32 = arith.constant 6 : i32
    %228 = arith.index_cast %c6_i32 : i32 to index
    %c0_54 = arith.constant 0 : index
    %c0_55 = arith.constant 0 : index
    %229 = vector.load %arg2[%228, %c0_54, %c0_55] : memref<8x8x512xbf16, #tpu.memory_space<vmem>>, vector<1x8x512xbf16>
    %230 = vector.shape_cast %229 : vector<1x8x512xbf16> to vector<8x512xbf16>
    %231 = arith.extf %230 : vector<8x512xbf16> to vector<8x512xf32>
    %232 = arith.truncf %222 : vector<8x128xf32> to vector<8x128xbf16>
    %cst_56 = arith.constant dense<0.000000e+00> : vector<8x512xf32>
    %233 = tpu.matmul %232, %3, %cst_56 {dimension_numbers = #tpu.dot_dimension_numbers<[1], [0], [0], [1], [0, 0, 1, 1], [], []>} : vector<8x128xbf16>, vector<128x512xbf16>, vector<8x512xf32> -> vector<8x512xf32>
    %234 = arith.addf %231, %233 : vector<8x512xf32>
    %235 = vector.extract_strided_slice %234 {offsets = [0, 0], sizes = [8, 128], strides = [1, 1]} : vector<8x512xf32> to vector<8x128xf32>
    %236 = arith.negf %235 : vector<8x128xf32>
    %237 = math.exp %236 : vector<8x128xf32>
    %cst_57 = arith.constant 1.000000e+00 : f32
    %238 = vector.broadcast %cst_57 : f32 to vector<8x128xf32>
    %239 = arith.addf %238, %237 : vector<8x128xf32>
    %240 = arith.divf %238, %239 : vector<8x128xf32>
    %241 = vector.extract_strided_slice %234 {offsets = [0, 128], sizes = [8, 128], strides = [1, 1]} : vector<8x512xf32> to vector<8x128xf32>
    %242 = arith.negf %241 : vector<8x128xf32>
    %243 = math.exp %242 : vector<8x128xf32>
    %cst_58 = arith.constant 1.000000e+00 : f32
    %244 = vector.broadcast %cst_58 : f32 to vector<8x128xf32>
    %245 = arith.addf %244, %243 : vector<8x128xf32>
    %246 = arith.divf %244, %245 : vector<8x128xf32>
    %247 = vector.extract_strided_slice %234 {offsets = [0, 256], sizes = [8, 128], strides = [1, 1]} : vector<8x512xf32> to vector<8x128xf32>
    %248 = math.tanh %247 : vector<8x128xf32>
    %249 = vector.extract_strided_slice %234 {offsets = [0, 384], sizes = [8, 128], strides = [1, 1]} : vector<8x512xf32> to vector<8x128xf32>
    %250 = arith.negf %249 : vector<8x128xf32>
    %251 = math.exp %250 : vector<8x128xf32>
    %cst_59 = arith.constant 1.000000e+00 : f32
    %252 = vector.broadcast %cst_59 : f32 to vector<8x128xf32>
    %253 = arith.addf %252, %251 : vector<8x128xf32>
    %254 = arith.divf %252, %253 : vector<8x128xf32>
    %255 = arith.mulf %246, %220 : vector<8x128xf32>
    %256 = arith.mulf %240, %248 : vector<8x128xf32>
    %257 = arith.addf %255, %256 : vector<8x128xf32>
    %258 = math.tanh %257 : vector<8x128xf32>
    %259 = arith.mulf %254, %258 : vector<8x128xf32>
    %260 = arith.truncf %259 : vector<8x128xf32> to vector<8x128xbf16>
    %261 = arith.index_cast %c6_i32 : i32 to index
    %c0_60 = arith.constant 0 : index
    %c0_61 = arith.constant 0 : index
    %262 = vector.load %arg6[%261, %c0_60, %c0_61] : memref<8x8x128xbf16, #tpu.memory_space<vmem>>, vector<1x8x128xbf16>
    %263 = vector.shape_cast %262 : vector<1x8x128xbf16> to vector<8x128xbf16>
    %264 = vector.shape_cast %260 : vector<8x128xbf16> to vector<1x8x128xbf16>
    tpu.vector_store %arg6[%261, %c0_60, %c0_61], %264 {strides = array<i32>} : memref<8x8x128xbf16, #tpu.memory_space<vmem>>, vector<1x8x128xbf16>,
    %c7_i32 = arith.constant 7 : i32
    %265 = arith.index_cast %c7_i32 : i32 to index
    %c0_62 = arith.constant 0 : index
    %c0_63 = arith.constant 0 : index
    %266 = vector.load %arg2[%265, %c0_62, %c0_63] : memref<8x8x512xbf16, #tpu.memory_space<vmem>>, vector<1x8x512xbf16>
    %267 = vector.shape_cast %266 : vector<1x8x512xbf16> to vector<8x512xbf16>
    %268 = arith.extf %267 : vector<8x512xbf16> to vector<8x512xf32>
    %269 = arith.truncf %259 : vector<8x128xf32> to vector<8x128xbf16>
    %cst_64 = arith.constant dense<0.000000e+00> : vector<8x512xf32>
    %270 = tpu.matmul %269, %3, %cst_64 {dimension_numbers = #tpu.dot_dimension_numbers<[1], [0], [0], [1], [0, 0, 1, 1], [], []>} : vector<8x128xbf16>, vector<128x512xbf16>, vector<8x512xf32> -> vector<8x512xf32>
    %271 = arith.addf %268, %270 : vector<8x512xf32>
    %272 = vector.extract_strided_slice %271 {offsets = [0, 0], sizes = [8, 128], strides = [1, 1]} : vector<8x512xf32> to vector<8x128xf32>
    %273 = arith.negf %272 : vector<8x128xf32>
    %274 = math.exp %273 : vector<8x128xf32>
    %cst_65 = arith.constant 1.000000e+00 : f32
    %275 = vector.broadcast %cst_65 : f32 to vector<8x128xf32>
    %276 = arith.addf %275, %274 : vector<8x128xf32>
    %277 = arith.divf %275, %276 : vector<8x128xf32>
    %278 = vector.extract_strided_slice %271 {offsets = [0, 128], sizes = [8, 128], strides = [1, 1]} : vector<8x512xf32> to vector<8x128xf32>
    %279 = arith.negf %278 : vector<8x128xf32>
    %280 = math.exp %279 : vector<8x128xf32>
    %cst_66 = arith.constant 1.000000e+00 : f32
    %281 = vector.broadcast %cst_66 : f32 to vector<8x128xf32>
    %282 = arith.addf %281, %280 : vector<8x128xf32>
    %283 = arith.divf %281, %282 : vector<8x128xf32>
    %284 = vector.extract_strided_slice %271 {offsets = [0, 256], sizes = [8, 128], strides = [1, 1]} : vector<8x512xf32> to vector<8x128xf32>
    %285 = math.tanh %284 : vector<8x128xf32>
    %286 = vector.extract_strided_slice %271 {offsets = [0, 384], sizes = [8, 128], strides = [1, 1]} : vector<8x512xf32> to vector<8x128xf32>
    %287 = arith.negf %286 : vector<8x128xf32>
    %288 = math.exp %287 : vector<8x128xf32>
    %cst_67 = arith.constant 1.000000e+00 : f32
    %289 = vector.broadcast %cst_67 : f32 to vector<8x128xf32>
    %290 = arith.addf %289, %288 : vector<8x128xf32>
    %291 = arith.divf %289, %290 : vector<8x128xf32>
    %292 = arith.mulf %283, %257 : vector<8x128xf32>
    %293 = arith.mulf %277, %285 : vector<8x128xf32>
    %294 = arith.addf %292, %293 : vector<8x128xf32>
    %295 = math.tanh %294 : vector<8x128xf32>
    %296 = arith.mulf %291, %295 : vector<8x128xf32>
    %297 = arith.truncf %296 : vector<8x128xf32> to vector<8x128xbf16>
    %298 = arith.index_cast %c7_i32 : i32 to index
    %c0_68 = arith.constant 0 : index
    %c0_69 = arith.constant 0 : index
    %299 = vector.load %arg6[%298, %c0_68, %c0_69] : memref<8x8x128xbf16, #tpu.memory_space<vmem>>, vector<1x8x128xbf16>
    %300 = vector.shape_cast %299 : vector<1x8x128xbf16> to vector<8x128xbf16>
    %301 = vector.shape_cast %297 : vector<8x128xbf16> to vector<1x8x128xbf16>
    tpu.vector_store %arg6[%298, %c0_68, %c0_69], %301 {strides = array<i32>} : memref<8x8x128xbf16, #tpu.memory_space<vmem>>, vector<1x8x128xbf16>,
    %c8_i32 = arith.constant 8 : i32
    %c0_70 = arith.constant 0 : index
    %c0_71 = arith.constant 0 : index
    %302 = vector.load %arg7[%c0_70, %c0_71] : memref<8x128xf32, #tpu.memory_space<vmem>>, vector<8x128xf32>
    tpu.vector_store %arg7[%c0_70, %c0_71], %296 {strides = array<i32>} : memref<8x128xf32, #tpu.memory_space<vmem>>, vector<8x128xf32>,
    %c0_72 = arith.constant 0 : index
    %c0_73 = arith.constant 0 : index
    %303 = vector.load %arg8[%c0_72, %c0_73] : memref<8x128xf32, #tpu.memory_space<vmem>>, vector<8x128xf32>
    tpu.vector_store %arg8[%c0_72, %c0_73], %294 {strides = array<i32>} : memref<8x128xf32, #tpu.memory_space<vmem>>, vector<8x128xf32>,
    return
  }
  func.func @transform_0(%arg0: i32, %arg1: i32) -> (i32, i32, i32) {
    %c0_i32 = arith.constant 0 : i32
    %c0_i32_0 = arith.constant 0 : i32
    return %arg1, %arg0, %c0_i32 : i32, i32, i32
  }
  func.func @transform_1(%arg0: i32, %arg1: i32) -> (i32, i32) {
    %c0_i32 = arith.constant 0 : i32
    %c0_i32_0 = arith.constant 0 : i32
    return %arg0, %c0_i32 : i32, i32
  }
  func.func @transform_2(%arg0: i32, %arg1: i32) -> (i32, i32) {
    %c0_i32 = arith.constant 0 : i32
    %c0_i32_0 = arith.constant 0 : i32
    return %arg0, %c0_i32 : i32, i32
  }
  func.func @transform_4(%arg0: i32, %arg1: i32) -> (i32, i32, i32) {
    %c0_i32 = arith.constant 0 : i32
    %c0_i32_0 = arith.constant 0 : i32
    return %arg1, %arg0, %c0_i32 : i32, i32, i32
  }
  func.func @transform_5(%arg0: i32, %arg1: i32) -> (i32, i32) {
    %c0_i32 = arith.constant 0 : i32
    %c0_i32_0 = arith.constant 0 : i32
    return %arg0, %c0_i32 : i32, i32
  }
  func.func @transform_6(%arg0: i32, %arg1: i32) -> (i32, i32) {
    %c0_i32 = arith.constant 0 : i32
    %c0_i32_0 = arith.constant 0 : i32
    return %arg0, %c0_i32 : i32, i32
  }
}

module attributes {stable_mosaic.version = 11 : i64} {
  func.func @linear_kernel(%arg0: i32, %arg1: i32, %arg2: memref<64x128xbf16, #tpu.memory_space<vmem>>, %arg3: memref<128x64xbf16, #tpu.memory_space<vmem>>, %arg4: memref<1x64xf32, #tpu.memory_space<vmem>>, %arg5: memref<64x64xbf16, #tpu.memory_space<vmem>>) attributes {dimension_semantics = [#tpu.dimension_semantics<parallel>, #tpu.dimension_semantics<parallel>], iteration_bounds = array<i64: 1, 1>, scalar_prefetch = 0 : i64, scratch_operands = 0 : i64, tpu.core_type = #tpu.core_type<tc>, window_params = [{transform_indices = @transform_0, window_bounds = array<i64: 64, 128>}, {transform_indices = @transform_1, window_bounds = array<i64: 128, 64>}, {transform_indices = @transform_2, window_bounds = array<i64: 1, 64>}, {transform_indices = @transform_3, window_bounds = array<i64: 64, 64>}]} {
    %c0 = arith.constant 0 : index
    %c0_0 = arith.constant 0 : index
    %0 = vector.load %arg2[%c0, %c0_0] : memref<64x128xbf16, #tpu.memory_space<vmem>>, vector<64x128xbf16>
    %c0_1 = arith.constant 0 : index
    %c0_2 = arith.constant 0 : index
    %1 = vector.load %arg3[%c0_1, %c0_2] : memref<128x64xbf16, #tpu.memory_space<vmem>>, vector<128x64xbf16>
    %cst = arith.constant dense<0.000000e+00> : vector<64x64xf32>
    %2 = tpu.matmul %0, %1, %cst {dimension_numbers = #tpu.dot_dimension_numbers<[1], [0], [0], [1], [0, 0, 1, 1], [], []>} : vector<64x128xbf16>, vector<128x64xbf16>, vector<64x64xf32> -> vector<64x64xf32>
    %c0_3 = arith.constant 0 : index
    %c0_4 = arith.constant 0 : index
    %3 = vector.load %arg4[%c0_3, %c0_4] : memref<1x64xf32, #tpu.memory_space<vmem>>, vector<1x64xf32>
    %4 = vector.broadcast %3 : vector<1x64xf32> to vector<64x64xf32>
    %5 = arith.addf %2, %4 : vector<64x64xf32>
    %6 = arith.truncf %5 : vector<64x64xf32> to vector<64x64xbf16>
    %c0_5 = arith.constant 0 : index
    %c0_6 = arith.constant 0 : index
    %7 = vector.load %arg5[%c0_5, %c0_6] : memref<64x64xbf16, #tpu.memory_space<vmem>>, vector<64x64xbf16>
    tpu.vector_store %arg5[%c0_5, %c0_6], %6 {strides = array<i32>} : memref<64x64xbf16, #tpu.memory_space<vmem>>, vector<64x64xbf16>,
    return
  }
  func.func @transform_0(%arg0: i32, %arg1: i32) -> (i32, i32) {
    %c0_i32 = arith.constant 0 : i32
    %c0_i32_0 = arith.constant 0 : i32
    return %arg1, %c0_i32 : i32, i32
  }
  func.func @transform_1(%arg0: i32, %arg1: i32) -> (i32, i32) {
    %c0_i32 = arith.constant 0 : i32
    %c0_i32_0 = arith.constant 0 : i32
    return %c0_i32, %arg0 : i32, i32
  }
  func.func @transform_2(%arg0: i32, %arg1: i32) -> (i32, i32) {
    %c0_i32 = arith.constant 0 : i32
    %c0_i32_0 = arith.constant 0 : i32
    return %c0_i32, %arg0 : i32, i32
  }
  func.func @transform_3(%arg0: i32, %arg1: i32) -> (i32, i32) {
    %c0_i32 = arith.constant 0 : i32
    return %arg1, %arg0 : i32, i32
  }
}

</mosaic_0001>

<llo_original>
// kernel: rnn_model_forward.7
$region0: #{rnn_model_forward.7}
  #allocation0 [shape = 'u32[]', space=smem, size = 0x4, offset = 0x4, fixed_abs, tag = 'smem constant byte address 0x4 - core index']
  #allocation1 [shape = 'u32[144,128]{1,0:T(1,128)}', space=vmem, size = 0x12000, scoped, tag = 'internal scratch']
  %s0 = inlined_call_operand.vmem [shape: bf16[64,128], index: 0, kind: input, shape index: {}]
  %s1 = inlined_call_operand.vmem [shape: bf16[128,512], index: 1, kind: input, shape index: {}]
  %s2 = inlined_call_operand.vmem [shape: f32[1,512], index: 2, kind: input, shape index: {}]
  %s3 = inlined_call_operand.vmem [shape: bf16[64,512], index: 3, kind: output, shape index: {}]
  %s4 = sld [smem:[#allocation0]]
  $region22: #{rnn_model_forward.7} parent=0
    _
  %s6 = ssub.s32 1, %s4
  %s7 = scalar_select 0, %s6, %s4
  // Predicated region
  $region2: #{rnn_model_forward.7} parent=0 // pred_check
    _
  $region3: #{rnn_model_forward.7} parent=0 // pred_check_branch
    %9 = sbr.rel (0) target = $region5
  $region4: #{rnn_model_forward.7} parent=0 // pred_region
    _
  $region5: #{rnn_model_forward.7} parent=0 // pred_fallthru
    _
  // Predicated region
  $region6: #{rnn_model_forward.7} parent=0 // pred_check
    _
  $region7: #{rnn_model_forward.7} parent=0 // pred_check_branch
    %11 = sbr.rel (0) target = $region9
  $region8: #{rnn_model_forward.7} parent=0 // pred_region
    _
  $region9: #{rnn_model_forward.7} parent=0 // pred_fallthru
    _
  // Predicated region
  $region10: #{rnn_model_forward.7} parent=0 // pred_check
    _
  $region11: #{rnn_model_forward.7} parent=0 // pred_check_branch
    %13 = sbr.rel (0) target = $region13
  $region12: #{rnn_model_forward.7} parent=0 // pred_region
    _
  $region13: #{rnn_model_forward.7} parent=0 // pred_fallthru
    _
  %v15 = vld [vmem:[%s0] sm:$0xf]
  %v16 = vld [vmem:[%s0 + $0x4] sm:$0xf]
  %v17 = vld [vmem:[%s0 + $0x8] sm:$0xf]
  %v18 = vld [vmem:[%s0 + $0xc] sm:$0xf]
  %v19 = vld [vmem:[%s0 + $0x10] sm:$0xf]
  %v20 = vld [vmem:[%s0 + $0x14] sm:$0xf]
  %v21 = vld [vmem:[%s0 + $0x18] sm:$0xf]
  %v22 = vld [vmem:[%s0 + $0x1c] sm:$0xf]
  %v23 = vld [vmem:[%s1] sm:$0xff]
  %v24 = vld [vmem:[%s1 + $0x8] sm:$0xff]
  %v25 = vld [vmem:[%s1 + $0x10] sm:$0xff]
  %v26 = vld [vmem:[%s1 + $0x18] sm:$0xff]
  %v27 = vld [vmem:[%s1 + $0x20] sm:$0xff]
  %v28 = vld [vmem:[%s1 + $0x28] sm:$0xff]
  %v29 = vld [vmem:[%s1 + $0x30] sm:$0xff]
  %v30 = vld [vmem:[%s1 + $0x38] sm:$0xff]
  %v31 = vld [vmem:[%s1 + $0x40] sm:$0xff]
  %v32 = vld [vmem:[%s1 + $0x48] sm:$0xff]
  %v33 = vld [vmem:[%s1 + $0x50] sm:$0xff]
  %v34 = vld [vmem:[%s1 + $0x58] sm:$0xff]
  %v35 = vld [vmem:[%s1 + $0x60] sm:$0xff]
  %v36 = vld [vmem:[%s1 + $0x68] sm:$0xff]
  %v37 = vld [vmem:[%s1 + $0x70] sm:$0xff]
  %v38 = vld [vmem:[%s1 + $0x78] sm:$0xff]
  %v39 = vld [vmem:[%s1 + $0x80] sm:$0xff]
  %v40 = vld [vmem:[%s1 + $0x88] sm:$0xff]
  %v41 = vld [vmem:[%s1 + $0x90] sm:$0xff]
  %v42 = vld [vmem:[%s1 + $0x98] sm:$0xff]
  %v43 = vld [vmem:[%s1 + $0xa0] sm:$0xff]
  %v44 = vld [vmem:[%s1 + $0xa8] sm:$0xff]
  %v45 = vld [vmem:[%s1 + $0xb0] sm:$0xff]
  %v46 = vld [vmem:[%s1 + $0xb8] sm:$0xff]
  %v47 = vld [vmem:[%s1 + $0xc0] sm:$0xff]
  %v48 = vld [vmem:[%s1 + $0xc8] sm:$0xff]
  %v49 = vld [vmem:[%s1 + $0xd0] sm:$0xff]
  %v50 = vld [vmem:[%s1 + $0xd8] sm:$0xff]
  %v51 = vld [vmem:[%s1 + $0xe0] sm:$0xff]
  %v52 = vld [vmem:[%s1 + $0xe8] sm:$0xff]
  %v53 = vld [vmem:[%s1 + $0xf0] sm:$0xff]
  %v54 = vld [vmem:[%s1 + $0xf8] sm:$0xff]
  %v55 = vld [vmem:[%s2] sm:$0xf]
  %v57 = vlaneseq
  %v58 = vshrl.u32 %v57, 7
  %v59 = vsub.s32 0, %v58
  %v60 = vrot.slane %v55, %v59
  %v61 = vlaneseq
  %v62 = vshrl.u32 %v61, 7
  %v63 = vsub.s32 1, %v62
  %v64 = vrot.slane %v55, %v63
  %v65 = vlaneseq
  %v66 = vshrl.u32 %v65, 7
  %v67 = vsub.s32 2, %v66
  %v68 = vrot.slane %v55, %v67
  %v69 = vlaneseq
  %v70 = vshrl.u32 %v69, 7
  %v71 = vsub.s32 3, %v70
  %v72 = vrot.slane %v55, %v71
  %v85 = vunpack.c.l.b16 %v15
  %v86 = vunpack.c.l.b16 %v16
  %v87 = vunpack.c.l.b16 %v17
  %v88 = vunpack.c.l.b16 %v18
  %v89 = vunpack.c.l.b16 %v19
  %v90 = vunpack.c.l.b16 %v20
  %v91 = vunpack.c.l.b16 %v21
  %v92 = vunpack.c.l.b16 %v22
  %v93 = vpack.c.b16 %v86, %v85
  %v94 = vpack.c.b16 %v88, %v87
  %v95 = vpack.c.b16 %v90, %v89
  %v96 = vpack.c.b16 %v92, %v91
  %v133 = vunpack.c.l.b16 %v23
  %v134 = vunpack.c.h.b16 %v23
  %v135 = vunpack.c.l.b16 %v24
  %v136 = vunpack.c.h.b16 %v24
  %v137 = vunpack.c.l.b16 %v25
  %v138 = vunpack.c.h.b16 %v25
  %v139 = vunpack.c.l.b16 %v26
  %v140 = vunpack.c.h.b16 %v26
  %v141 = vunpack.c.l.b16 %v27
  %v142 = vunpack.c.h.b16 %v27
  %v143 = vunpack.c.l.b16 %v28
  %v144 = vunpack.c.h.b16 %v28
  %v145 = vunpack.c.l.b16 %v29
  %v146 = vunpack.c.h.b16 %v29
  %v147 = vunpack.c.l.b16 %v30
  %v148 = vunpack.c.h.b16 %v30
  %v149 = vunpack.c.l.b16 %v31
  %v150 = vunpack.c.h.b16 %v31
  %v151 = vunpack.c.l.b16 %v32
  %v152 = vunpack.c.h.b16 %v32
  %v153 = vunpack.c.l.b16 %v33
  %v154 = vunpack.c.h.b16 %v33
  %v155 = vunpack.c.l.b16 %v34
  %v156 = vunpack.c.h.b16 %v34
  %v157 = vunpack.c.l.b16 %v35
  %v158 = vunpack.c.h.b16 %v35
  %v159 = vunpack.c.l.b16 %v36
  %v160 = vunpack.c.h.b16 %v36
  %v161 = vunpack.c.l.b16 %v37
  %v162 = vunpack.c.h.b16 %v37
  %v163 = vunpack.c.l.b16 %v38
  %v164 = vunpack.c.h.b16 %v38
  %v165 = vunpack.c.l.b16 %v39
  %v166 = vunpack.c.h.b16 %v39
  %v167 = vunpack.c.l.b16 %v40
  %v168 = vunpack.c.h.b16 %v40
  %v169 = vunpack.c.l.b16 %v41
  %v170 = vunpack.c.h.b16 %v41
  %v171 = vunpack.c.l.b16 %v42
  %v172 = vunpack.c.h.b16 %v42
  %v173 = vunpack.c.l.b16 %v43
  %v174 = vunpack.c.h.b16 %v43
  %v175 = vunpack.c.l.b16 %v44
  %v176 = vunpack.c.h.b16 %v44
  %v177 = vunpack.c.l.b16 %v45
  %v178 = vunpack.c.h.b16 %v45
  %v179 = vunpack.c.l.b16 %v46
  %v180 = vunpack.c.h.b16 %v46
  %v181 = vunpack.c.l.b16 %v47
  %v182 = vunpack.c.h.b16 %v47
  %v183 = vunpack.c.l.b16 %v48
  %v184 = vunpack.c.h.b16 %v48
  %v185 = vunpack.c.l.b16 %v49
  %v186 = vunpack.c.h.b16 %v49
  %v187 = vunpack.c.l.b16 %v50
  %v188 = vunpack.c.h.b16 %v50
  %v189 = vunpack.c.l.b16 %v51
  %v190 = vunpack.c.h.b16 %v51
  %v191 = vunpack.c.l.b16 %v52
  %v192 = vunpack.c.h.b16 %v52
  %v193 = vunpack.c.l.b16 %v53
  %v194 = vunpack.c.h.b16 %v53
  %v195 = vunpack.c.l.b16 %v54
  %v196 = vunpack.c.h.b16 %v54
  %v197 = vpack.c.b16 %v137, %v133
  %v198 = vpack.c.b16 %v138, %v134
  %v199 = vpack.c.b16 %v139, %v135
  %v200 = vpack.c.b16 %v140, %v136
  %v201 = vpack.c.b16 %v145, %v141
  %v202 = vpack.c.b16 %v146, %v142
  %v203 = vpack.c.b16 %v147, %v143
  %v204 = vpack.c.b16 %v148, %v144
  %v205 = vpack.c.b16 %v153, %v149
  %v206 = vpack.c.b16 %v154, %v150
  %v207 = vpack.c.b16 %v155, %v151
  %v208 = vpack.c.b16 %v156, %v152
  %v209 = vpack.c.b16 %v161, %v157
  %v210 = vpack.c.b16 %v162, %v158
  %v211 = vpack.c.b16 %v163, %v159
  %v212 = vpack.c.b16 %v164, %v160
  %v213 = vpack.c.b16 %v169, %v165
  %v214 = vpack.c.b16 %v170, %v166
  %v215 = vpack.c.b16 %v171, %v167
  %v216 = vpack.c.b16 %v172, %v168
  %v217 = vpack.c.b16 %v177, %v173
  %v218 = vpack.c.b16 %v178, %v174
  %v219 = vpack.c.b16 %v179, %v175
  %v220 = vpack.c.b16 %v180, %v176
  %v221 = vpack.c.b16 %v185, %v181
  %v222 = vpack.c.b16 %v186, %v182
  %v223 = vpack.c.b16 %v187, %v183
  %v224 = vpack.c.b16 %v188, %v184
  %v225 = vpack.c.b16 %v193, %v189
  %v226 = vpack.c.b16 %v194, %v190
  %v227 = vpack.c.b16 %v195, %v191
  %v228 = vpack.c.b16 %v196, %v192
  %261 = vmatprep.subr.bf16.mxu0 %v198
  %262 = vmatpush1.bf16.msra.mxu0 %v197
  %263 = vmatprep.subr.bf16.mxu0 %v202
  %264 = vmatpush1.bf16.msra.mxu0 %v201
  %265 = vmatprep.subr.bf16.mxu0 %v206
  %266 = vmatpush1.bf16.msra.mxu0 %v205
  %267 = vmatprep.subr.bf16.mxu0 %v210
  %268 = vmatpush1.bf16.msra.mxu0 %v209
  %269 = vmatprep.subr.bf16.mxu0 %v214
  %270 = vmatpush1.bf16.msra.mxu0 %v213
  %271 = vmatprep.subr.bf16.mxu0 %v218
  %272 = vmatpush1.bf16.msra.mxu0 %v217
  %273 = vmatprep.subr.bf16.mxu0 %v222
  %274 = vmatpush1.bf16.msra.mxu0 %v221
  %275 = vmatprep.subr.bf16.mxu0 %v226
  %276 = vmatpush1.bf16.msra.mxu0 %v225
  %277 = vmatprep.subr.bf16.mxu0 0
  %278 = vmatpush1.bf16.msra.mxu0 0
  %279 = vmatprep.subr.bf16.mxu0 0
  %280 = vmatpush1.bf16.msra.mxu0 0
  %281 = vmatprep.subr.bf16.mxu0 0
  %282 = vmatpush1.bf16.msra.mxu0 0
  %283 = vmatprep.subr.bf16.mxu0 0
  %284 = vmatpush1.bf16.msra.mxu0 0
  %285 = vmatprep.subr.bf16.mxu0 0
  %286 = vmatpush1.bf16.msra.mxu0 0
  %287 = vmatprep.subr.bf16.mxu0 0
  %288 = vmatpush1.bf16.msra.mxu0 0
  %289 = vmatprep.subr.bf16.mxu0 0
  %290 = vmatpush1.bf16.msra.mxu0 0
  %291 = vmatprep.subr.bf16.mxu0 0
  %292 = vmatpush1.bf16.msra.mxu0 0
  %293 = vmatprep.mubr.bf16.mxu0 0
  %294 = vmatmul.mubr.bf16.gmra.mrb[0].mxu0 %v93
  %v295 = vpop.f32.mrb[0].mxu0
  %v296 = vadd.f32 %v60, %v295
  %v297 = vpop.f32.mrb[0].mxu0
  %v298 = vadd.f32 %v64, %v297
  %v299 = vpop.f32.mrb[0].mxu0
  %v300 = vadd.f32 %v60, %v299
  %v301 = vpop.f32.mrb[0].mxu0
  %v302 = vadd.f32 %v64, %v301
  %303 = vmatprep.mubr.bf16.mxu0 0
  %304 = vmatmul.mubr.bf16.gmra.mrb[0].mxu0 %v94
  %v305 = vpop.f32.mrb[0].mxu0
  %v306 = vadd.f32 %v60, %v305
  %v307 = vpop.f32.mrb[0].mxu0
  %v308 = vadd.f32 %v64, %v307
  %v309 = vpop.f32.mrb[0].mxu0
  %v310 = vadd.f32 %v60, %v309
  %v311 = vpop.f32.mrb[0].mxu0
  %v312 = vadd.f32 %v64, %v311
  %313 = vmatprep.mubr.bf16.mxu0 0
  %314 = vmatmul.mubr.bf16.gmra.mrb[0].mxu0 %v95
  %v315 = vpop.f32.mrb[0].mxu0
  %v316 = vadd.f32 %v60, %v315
  %v317 = vpop.f32.mrb[0].mxu0
  %v318 = vadd.f32 %v64, %v317
  %v319 = vpop.f32.mrb[0].mxu0
  %v320 = vadd.f32 %v60, %v319
  %v321 = vpop.f32.mrb[0].mxu0
  %v322 = vadd.f32 %v64, %v321
  %323 = vmatprep.mubr.bf16.mxu0 0
  %324 = vmatmul.mubr.bf16.gmra.mrb[0].mxu0 %v96
  %v325 = vpop.f32.mrb[0].mxu0
  %v326 = vadd.f32 %v60, %v325
  %v327 = vpop.f32.mrb[0].mxu0
  %v328 = vadd.f32 %v64, %v327
  %v329 = vpop.f32.mrb[0].mxu0
  %v330 = vadd.f32 %v60, %v329
  %v331 = vpop.f32.mrb[0].mxu0
  %v332 = vadd.f32 %v64, %v331
  %333 = vdwg.mxu0
  %334 = vmatprep.subr.bf16.mxu0 %v200
  %335 = vmatpush1.bf16.msra.mxu0 %v199
  %336 = vmatprep.subr.bf16.mxu0 %v204
  %337 = vmatpush1.bf16.msra.mxu0 %v203
  %338 = vmatprep.subr.bf16.mxu0 %v208
  %339 = vmatpush1.bf16.msra.mxu0 %v207
  %340 = vmatprep.subr.bf16.mxu0 %v212
  %341 = vmatpush1.bf16.msra.mxu0 %v211
  %342 = vmatprep.subr.bf16.mxu0 %v216
  %343 = vmatpush1.bf16.msra.mxu0 %v215
  %344 = vmatprep.subr.bf16.mxu0 %v220
  %345 = vmatpush1.bf16.msra.mxu0 %v219
  %346 = vmatprep.subr.bf16.mxu0 %v224
  %347 = vmatpush1.bf16.msra.mxu0 %v223
  %348 = vmatprep.subr.bf16.mxu0 %v228
  %349 = vmatpush1.bf16.msra.mxu0 %v227
  %350 = vmatprep.subr.bf16.mxu0 0
  %351 = vmatpush1.bf16.msra.mxu0 0
  %352 = vmatprep.subr.bf16.mxu0 0
  %353 = vmatpush1.bf16.msra.mxu0 0
  %354 = vmatprep.subr.bf16.mxu0 0
  %355 = vmatpush1.bf16.msra.mxu0 0
  %356 = vmatprep.subr.bf16.mxu0 0
  %357 = vmatpush1.bf16.msra.mxu0 0
  %358 = vmatprep.subr.bf16.mxu0 0
  %359 = vmatpush1.bf16.msra.mxu0 0
  %360 = vmatprep.subr.bf16.mxu0 0
  %361 = vmatpush1.bf16.msra.mxu0 0
  %362 = vmatprep.subr.bf16.mxu0 0
  %363 = vmatpush1.bf16.msra.mxu0 0
  %364 = vmatprep.subr.bf16.mxu0 0
  %365 = vmatpush1.bf16.msra.mxu0 0
  %366 = vmatprep.mubr.bf16.mxu0 0
  %367 = vmatmul.mubr.bf16.gmra.mrb[0].mxu0 %v93
  %v368 = vpop.f32.mrb[0].mxu0
  %v369 = vadd.f32 %v68, %v368
  %v370 = vpop.f32.mrb[0].mxu0
  %v371 = vadd.f32 %v72, %v370
  %v372 = vpop.f32.mrb[0].mxu0
  %v373 = vadd.f32 %v68, %v372
  %v374 = vpop.f32.mrb[0].mxu0
  %v375 = vadd.f32 %v72, %v374
  %376 = vmatprep.mubr.bf16.mxu0 0
  %377 = vmatmul.mubr.bf16.gmra.mrb[0].mxu0 %v94
  %v378 = vpop.f32.mrb[0].mxu0
  %v379 = vadd.f32 %v68, %v378
  %v380 = vpop.f32.mrb[0].mxu0
  %v381 = vadd.f32 %v72, %v380
  %v382 = vpop.f32.mrb[0].mxu0
  %v383 = vadd.f32 %v68, %v382
  %v384 = vpop.f32.mrb[0].mxu0
  %v385 = vadd.f32 %v72, %v384
  %386 = vmatprep.mubr.bf16.mxu0 0
  %387 = vmatmul.mubr.bf16.gmra.mrb[0].mxu0 %v95
  %v388 = vpop.f32.mrb[0].mxu0
  %v389 = vadd.f32 %v68, %v388
  %v390 = vpop.f32.mrb[0].mxu0
  %v391 = vadd.f32 %v72, %v390
  %v392 = vpop.f32.mrb[0].mxu0
  %v393 = vadd.f32 %v68, %v392
  %v394 = vpop.f32.mrb[0].mxu0
  %v395 = vadd.f32 %v72, %v394
  %396 = vmatprep.mubr.bf16.mxu0 0
  %397 = vmatmul.mubr.bf16.gmra.mrb[0].mxu0 %v96
  %v398 = vpop.f32.mrb[0].mxu0
  %v399 = vadd.f32 %v68, %v398
  %v400 = vpop.f32.mrb[0].mxu0
  %v401 = vadd.f32 %v72, %v400
  %v402 = vpop.f32.mrb[0].mxu0
  %v403 = vadd.f32 %v68, %v402
  %v404 = vpop.f32.mrb[0].mxu0
  %v405 = vadd.f32 %v72, %v404
  %406 = vdwg.mxu0
  %v407 = vpack.c.bf16 %v300, %v296
  %v408 = vpack.c.bf16 %v302, %v298
  %v409 = vpack.c.bf16 %v373, %v369
  %v410 = vpack.c.bf16 %v375, %v371
  %v411 = vpack.c.bf16 %v310, %v306
  %v412 = vpack.c.bf16 %v312, %v308
  %v413 = vpack.c.bf16 %v383, %v379
  %v414 = vpack.c.bf16 %v385, %v381
  %v415 = vpack.c.bf16 %v320, %v316
  %v416 = vpack.c.bf16 %v322, %v318
  %v417 = vpack.c.bf16 %v393, %v389
  %v418 = vpack.c.bf16 %v395, %v391
  %v419 = vpack.c.bf16 %v330, %v326
  %v420 = vpack.c.bf16 %v332, %v328
  %v421 = vpack.c.bf16 %v403, %v399
  %v422 = vpack.c.bf16 %v405, %v401
  %v439 = vunpack.c.l.b16 %v407
  %v440 = vunpack.c.l.b16 %v408
  %v441 = vunpack.c.l.b16 %v409
  %v442 = vunpack.c.l.b16 %v410
  %v443 = vunpack.c.h.b16 %v407
  %v444 = vunpack.c.h.b16 %v408
  %v445 = vunpack.c.h.b16 %v409
  %v446 = vunpack.c.h.b16 %v410
  %v447 = vunpack.c.l.b16 %v411
  %v448 = vunpack.c.l.b16 %v412
  %v449 = vunpack.c.l.b16 %v413
  %v450 = vunpack.c.l.b16 %v414
  %v451 = vunpack.c.h.b16 %v411
  %v452 = vunpack.c.h.b16 %v412
  %v453 = vunpack.c.h.b16 %v413
  %v454 = vunpack.c.h.b16 %v414
  %v455 = vunpack.c.l.b16 %v415
  %v456 = vunpack.c.l.b16 %v416
  %v457 = vunpack.c.l.b16 %v417
  %v458 = vunpack.c.l.b16 %v418
  %v459 = vunpack.c.h.b16 %v415
  %v460 = vunpack.c.h.b16 %v416
  %v461 = vunpack.c.h.b16 %v417
  %v462 = vunpack.c.h.b16 %v418
  %v463 = vunpack.c.l.b16 %v419
  %v464 = vunpack.c.l.b16 %v420
  %v465 = vunpack.c.l.b16 %v421
  %v466 = vunpack.c.l.b16 %v422
  %v467 = vunpack.c.h.b16 %v419
  %v468 = vunpack.c.h.b16 %v420
  %v469 = vunpack.c.h.b16 %v421
  %v470 = vunpack.c.h.b16 %v422
  %v471 = vpack.c.b16 %v440, %v439
  %v472 = vpack.c.b16 %v442, %v441
  %v473 = vpack.c.b16 %v444, %v443
  %v474 = vpack.c.b16 %v446, %v445
  %v475 = vpack.c.b16 %v448, %v447
  %v476 = vpack.c.b16 %v450, %v449
  %v477 = vpack.c.b16 %v452, %v451
  %v478 = vpack.c.b16 %v454, %v453
  %v479 = vpack.c.b16 %v456, %v455
  %v480 = vpack.c.b16 %v458, %v457
  %v481 = vpack.c.b16 %v460, %v459
  %v482 = vpack.c.b16 %v462, %v461
  %v483 = vpack.c.b16 %v464, %v463
  %v484 = vpack.c.b16 %v466, %v465
  %v485 = vpack.c.b16 %v468, %v467
  %v486 = vpack.c.b16 %v470, %v469
  %503 = vst [vmem:[%s3] sm:$0xff] %v471
  %504 = vst [vmem:[%s3 + $0x8] sm:$0xff] %v472
  %505 = vst [vmem:[%s3 + $0x10] sm:$0xff] %v473
  %506 = vst [vmem:[%s3 + $0x18] sm:$0xff] %v474
  %507 = vst [vmem:[%s3 + $0x20] sm:$0xff] %v475
  %508 = vst [vmem:[%s3 + $0x28] sm:$0xff] %v476
  %509 = vst [vmem:[%s3 + $0x30] sm:$0xff] %v477
  %510 = vst [vmem:[%s3 + $0x38] sm:$0xff] %v478
  %511 = vst [vmem:[%s3 + $0x40] sm:$0xff] %v479
  %512 = vst [vmem:[%s3 + $0x48] sm:$0xff] %v480
  %513 = vst [vmem:[%s3 + $0x50] sm:$0xff] %v481
  %514 = vst [vmem:[%s3 + $0x58] sm:$0xff] %v482
  %515 = vst [vmem:[%s3 + $0x60] sm:$0xff] %v483
  %516 = vst [vmem:[%s3 + $0x68] sm:$0xff] %v484
  %517 = vst [vmem:[%s3 + $0x70] sm:$0xff] %v485
  %518 = vst [vmem:[%s3 + $0x78] sm:$0xff] %v486
  // Predicated region
  $region14: #{rnn_model_forward.7} parent=0 // pred_check
    _
  $region15: #{rnn_model_forward.7} parent=0 // pred_check_branch
    %520 = sbr.rel (0) target = $region17
  $region16: #{rnn_model_forward.7} parent=0 // pred_region
    _
  $region17: #{rnn_model_forward.7} parent=0 // pred_fallthru
    _
  // Predicated region
  $region18: #{rnn_model_forward.7} parent=0 // pred_check
    _
  $region19: #{rnn_model_forward.7} parent=0 // pred_check_branch
    %522 = sbr.rel (0) target = $region21
  $region20: #{rnn_model_forward.7} parent=0 // pred_region
    _
  $region21: #{rnn_model_forward.7} parent=0 // pred_fallthru
    _

// kernel: rnn_model_forward.5
$region0: #{rnn_model_forward.5}
  #allocation0 [shape = 'u32[]', space=smem, size = 0x4, offset = 0x4, fixed_abs, tag = 'smem constant byte address 0x4 - core index']
  #allocation1 [shape = 'u32[144,128]{1,0:T(1,128)}', space=vmem, size = 0x12000, scoped, tag = 'internal scratch']
  %s0 = inlined_call_operand.vmem [shape: bf16[64,32], index: 0, kind: input, shape index: {}]
  %s1 = inlined_call_operand.vmem [shape: bf16[32,512], index: 1, kind: input, shape index: {}]
  %s2 = inlined_call_operand.vmem [shape: f32[1,512], index: 2, kind: input, shape index: {}]
  %s3 = inlined_call_operand.vmem [shape: bf16[64,512], index: 3, kind: output, shape index: {}]
  %s4 = sld [smem:[#allocation0]]
  $region22: #{rnn_model_forward.5} parent=0
    _
  %s6 = ssub.s32 1, %s4
  %s7 = scalar_select 0, %s6, %s4
  // Predicated region
  $region2: #{rnn_model_forward.5} parent=0 // pred_check
    _
  $region3: #{rnn_model_forward.5} parent=0 // pred_check_branch
    %9 = sbr.rel (0) target = $region5
  $region4: #{rnn_model_forward.5} parent=0 // pred_region
    _
  $region5: #{rnn_model_forward.5} parent=0 // pred_fallthru
    _
  // Predicated region
  $region6: #{rnn_model_forward.5} parent=0 // pred_check
    _
  $region7: #{rnn_model_forward.5} parent=0 // pred_check_branch
    %11 = sbr.rel (0) target = $region9
  $region8: #{rnn_model_forward.5} parent=0 // pred_region
    _
  $region9: #{rnn_model_forward.5} parent=0 // pred_fallthru
    _
  // Predicated region
  $region10: #{rnn_model_forward.5} parent=0 // pred_check
    _
  $region11: #{rnn_model_forward.5} parent=0 // pred_check_branch
    %13 = sbr.rel (0) target = $region13
  $region12: #{rnn_model_forward.5} parent=0 // pred_region
    _
  $region13: #{rnn_model_forward.5} parent=0 // pred_fallthru
    _
  %v15 = vld [vmem:[%s0] sm:$0xf]
  %v16 = vld [vmem:[%s0 + $0x4] sm:$0xf]
  %v17 = vld [vmem:[%s0 + $0x8] sm:$0xf]
  %v18 = vld [vmem:[%s0 + $0xc] sm:$0xf]
  %v19 = vld [vmem:[%s0 + $0x10] sm:$0xf]
  %v20 = vld [vmem:[%s0 + $0x14] sm:$0xf]
  %v21 = vld [vmem:[%s0 + $0x18] sm:$0xf]
  %v22 = vld [vmem:[%s0 + $0x1c] sm:$0xf]
  %v23 = vld [vmem:[%s1] sm:$0xff]
  %v24 = vld [vmem:[%s1 + $0x8] sm:$0xff]
  %v25 = vld [vmem:[%s1 + $0x10] sm:$0xff]
  %v26 = vld [vmem:[%s1 + $0x18] sm:$0xff]
  %v27 = vld [vmem:[%s1 + $0x20] sm:$0xff]
  %v28 = vld [vmem:[%s1 + $0x28] sm:$0xff]
  %v29 = vld [vmem:[%s1 + $0x30] sm:$0xff]
  %v30 = vld [vmem:[%s1 + $0x38] sm:$0xff]
  %v31 = vld [vmem:[%s2] sm:$0xf]
  %v33 = vlaneseq
  %v34 = vshrl.u32 %v33, 7
  %v35 = vsub.s32 0, %v34
  %v36 = vrot.slane %v31, %v35
  %v37 = vlaneseq
  %v38 = vshrl.u32 %v37, 7
  %v39 = vsub.s32 1, %v38
  %v40 = vrot.slane %v31, %v39
  %v41 = vlaneseq
  %v42 = vshrl.u32 %v41, 7
  %v43 = vsub.s32 2, %v42
  %v44 = vrot.slane %v31, %v43
  %v45 = vlaneseq
  %v46 = vshrl.u32 %v45, 7
  %v47 = vsub.s32 3, %v46
  %v48 = vrot.slane %v31, %v47
  %v61 = vunpack.c.l.b16 %v15
  %v62 = vunpack.c.l.b16 %v16
  %v63 = vunpack.c.l.b16 %v17
  %v64 = vunpack.c.l.b16 %v18
  %v65 = vunpack.c.l.b16 %v19
  %v66 = vunpack.c.l.b16 %v20
  %v67 = vunpack.c.l.b16 %v21
  %v68 = vunpack.c.l.b16 %v22
  %v69 = vpack.c.b16 %v62, %v61
  %v70 = vpack.c.b16 %v64, %v63
  %v71 = vpack.c.b16 %v66, %v65
  %v72 = vpack.c.b16 %v68, %v67
  %v81 = vunpack.c.l.b16 %v23
  %v82 = vunpack.c.h.b16 %v23
  %v83 = vunpack.c.l.b16 %v24
  %v84 = vunpack.c.h.b16 %v24
  %v85 = vunpack.c.l.b16 %v25
  %v86 = vunpack.c.h.b16 %v25
  %v87 = vunpack.c.l.b16 %v26
  %v88 = vunpack.c.h.b16 %v26
  %v89 = vunpack.c.l.b16 %v27
  %v90 = vunpack.c.h.b16 %v27
  %v91 = vunpack.c.l.b16 %v28
  %v92 = vunpack.c.h.b16 %v28
  %v93 = vunpack.c.l.b16 %v29
  %v94 = vunpack.c.h.b16 %v29
  %v95 = vunpack.c.l.b16 %v30
  %v96 = vunpack.c.h.b16 %v30
  %v97 = vpack.c.b16 %v85, %v81
  %v98 = vpack.c.b16 %v86, %v82
  %v99 = vpack.c.b16 %v87, %v83
  %v100 = vpack.c.b16 %v88, %v84
  %v101 = vpack.c.b16 %v93, %v89
  %v102 = vpack.c.b16 %v94, %v90
  %v103 = vpack.c.b16 %v95, %v91
  %v104 = vpack.c.b16 %v96, %v92
  %vm113 = vcmask 261120
  %v115 = vsel %vm113, %v69, 0
  %v118 = vsel %vm113, %v70, 0
  %v121 = vsel %vm113, %v71, 0
  %v124 = vsel %vm113, %v72, 0
  %126 = vmatprep.subr.bf16.mxu0 %v98
  %127 = vmatpush1.bf16.msra.mxu0 %v97
  %128 = vmatprep.subr.bf16.mxu0 %v102
  %129 = vmatpush1.bf16.msra.mxu0 %v101
  %130 = vmatprep.subr.bf16.mxu0 0
  %131 = vmatpush1.bf16.msra.mxu0 0
  %132 = vmatprep.subr.bf16.mxu0 0
  %133 = vmatpush1.bf16.msra.mxu0 0
  %134 = vmatprep.subr.bf16.mxu0 0
  %135 = vmatpush1.bf16.msra.mxu0 0
  %136 = vmatprep.subr.bf16.mxu0 0
  %137 = vmatpush1.bf16.msra.mxu0 0
  %138 = vmatprep.subr.bf16.mxu0 0
  %139 = vmatpush1.bf16.msra.mxu0 0
  %140 = vmatprep.subr.bf16.mxu0 0
  %141 = vmatpush1.bf16.msra.mxu0 0
  %142 = vmatprep.subr.bf16.mxu0 0
  %143 = vmatpush1.bf16.msra.mxu0 0
  %144 = vmatprep.subr.bf16.mxu0 0
  %145 = vmatpush1.bf16.msra.mxu0 0
  %146 = vmatprep.subr.bf16.mxu0 0
  %147 = vmatpush1.bf16.msra.mxu0 0
  %148 = vmatprep.subr.bf16.mxu0 0
  %149 = vmatpush1.bf16.msra.mxu0 0
  %150 = vmatprep.subr.bf16.mxu0 0
  %151 = vmatpush1.bf16.msra.mxu0 0
  %152 = vmatprep.subr.bf16.mxu0 0
  %153 = vmatpush1.bf16.msra.mxu0 0
  %154 = vmatprep.subr.bf16.mxu0 0
  %155 = vmatpush1.bf16.msra.mxu0 0
  %156 = vmatprep.subr.bf16.mxu0 0
  %157 = vmatpush1.bf16.msra.mxu0 0
  %158 = vmatprep.mubr.bf16.mxu0 0
  %159 = vmatmul.mubr.bf16.gmra.mrb[0].mxu0 %v115
  %v160 = vpop.f32.mrb[0].mxu0
  %v161 = vadd.f32 %v36, %v160
  %v162 = vpop.f32.mrb[0].mxu0
  %v163 = vadd.f32 %v40, %v162
  %v164 = vpop.f32.mrb[0].mxu0
  %v165 = vadd.f32 %v36, %v164
  %v166 = vpop.f32.mrb[0].mxu0
  %v167 = vadd.f32 %v40, %v166
  %168 = vmatprep.mubr.bf16.mxu0 0
  %169 = vmatmul.mubr.bf16.gmra.mrb[0].mxu0 %v118
  %v170 = vpop.f32.mrb[0].mxu0
  %v171 = vadd.f32 %v36, %v170
  %v172 = vpop.f32.mrb[0].mxu0
  %v173 = vadd.f32 %v40, %v172
  %v174 = vpop.f32.mrb[0].mxu0
  %v175 = vadd.f32 %v36, %v174
  %v176 = vpop.f32.mrb[0].mxu0
  %v177 = vadd.f32 %v40, %v176
  %178 = vmatprep.mubr.bf16.mxu0 0
  %179 = vmatmul.mubr.bf16.gmra.mrb[0].mxu0 %v121
  %v180 = vpop.f32.mrb[0].mxu0
  %v181 = vadd.f32 %v36, %v180
  %v182 = vpop.f32.mrb[0].mxu0
  %v183 = vadd.f32 %v40, %v182
  %v184 = vpop.f32.mrb[0].mxu0
  %v185 = vadd.f32 %v36, %v184
  %v186 = vpop.f32.mrb[0].mxu0
  %v187 = vadd.f32 %v40, %v186
  %188 = vmatprep.mubr.bf16.mxu0 0
  %189 = vmatmul.mubr.bf16.gmra.mrb[0].mxu0 %v124
  %v190 = vpop.f32.mrb[0].mxu0
  %v191 = vadd.f32 %v36, %v190
  %v192 = vpop.f32.mrb[0].mxu0
  %v193 = vadd.f32 %v40, %v192
  %v194 = vpop.f32.mrb[0].mxu0
  %v195 = vadd.f32 %v36, %v194
  %v196 = vpop.f32.mrb[0].mxu0
  %v197 = vadd.f32 %v40, %v196
  %198 = vdwg.mxu0
  %199 = vmatprep.subr.bf16.mxu0 %v100
  %200 = vmatpush1.bf16.msra.mxu0 %v99
  %201 = vmatprep.subr.bf16.mxu0 %v104
  %202 = vmatpush1.bf16.msra.mxu0 %v103
  %203 = vmatprep.subr.bf16.mxu0 0
  %204 = vmatpush1.bf16.msra.mxu0 0
  %205 = vmatprep.subr.bf16.mxu0 0
  %206 = vmatpush1.bf16.msra.mxu0 0
  %207 = vmatprep.subr.bf16.mxu0 0
  %208 = vmatpush1.bf16.msra.mxu0 0
  %209 = vmatprep.subr.bf16.mxu0 0
  %210 = vmatpush1.bf16.msra.mxu0 0
  %211 = vmatprep.subr.bf16.mxu0 0
  %212 = vmatpush1.bf16.msra.mxu0 0
  %213 = vmatprep.subr.bf16.mxu0 0
  %214 = vmatpush1.bf16.msra.mxu0 0
  %215 = vmatprep.subr.bf16.mxu0 0
  %216 = vmatpush1.bf16.msra.mxu0 0
  %217 = vmatprep.subr.bf16.mxu0 0
  %218 = vmatpush1.bf16.msra.mxu0 0
  %219 = vmatprep.subr.bf16.mxu0 0
  %220 = vmatpush1.bf16.msra.mxu0 0
  %221 = vmatprep.subr.bf16.mxu0 0
  %222 = vmatpush1.bf16.msra.mxu0 0
  %223 = vmatprep.subr.bf16.mxu0 0
  %224 = vmatpush1.bf16.msra.mxu0 0
  %225 = vmatprep.subr.bf16.mxu0 0
  %226 = vmatpush1.bf16.msra.mxu0 0
  %227 = vmatprep.subr.bf16.mxu0 0
  %228 = vmatpush1.bf16.msra.mxu0 0
  %229 = vmatprep.subr.bf16.mxu0 0
  %230 = vmatpush1.bf16.msra.mxu0 0
  %231 = vmatprep.mubr.bf16.mxu0 0
  %232 = vmatmul.mubr.bf16.gmra.mrb[0].mxu0 %v115
  %v233 = vpop.f32.mrb[0].mxu0
  %v234 = vadd.f32 %v44, %v233
  %v235 = vpop.f32.mrb[0].mxu0
  %v236 = vadd.f32 %v48, %v235
  %v237 = vpop.f32.mrb[0].mxu0
  %v238 = vadd.f32 %v44, %v237
  %v239 = vpop.f32.mrb[0].mxu0
  %v240 = vadd.f32 %v48, %v239
  %241 = vmatprep.mubr.bf16.mxu0 0
  %242 = vmatmul.mubr.bf16.gmra.mrb[0].mxu0 %v118
  %v243 = vpop.f32.mrb[0].mxu0
  %v244 = vadd.f32 %v44, %v243
  %v245 = vpop.f32.mrb[0].mxu0
  %v246 = vadd.f32 %v48, %v245
  %v247 = vpop.f32.mrb[0].mxu0
  %v248 = vadd.f32 %v44, %v247
  %v249 = vpop.f32.mrb[0].mxu0
  %v250 = vadd.f32 %v48, %v249
  %251 = vmatprep.mubr.bf16.mxu0 0
  %252 = vmatmul.mubr.bf16.gmra.mrb[0].mxu0 %v121
  %v253 = vpop.f32.mrb[0].mxu0
  %v254 = vadd.f32 %v44, %v253
  %v255 = vpop.f32.mrb[0].mxu0
  %v256 = vadd.f32 %v48, %v255
  %v257 = vpop.f32.mrb[0].mxu0
  %v258 = vadd.f32 %v44, %v257
  %v259 = vpop.f32.mrb[0].mxu0
  %v260 = vadd.f32 %v48, %v259
  %261 = vmatprep.mubr.bf16.mxu0 0
  %262 = vmatmul.mubr.bf16.gmra.mrb[0].mxu0 %v124
  %v263 = vpop.f32.mrb[0].mxu0
  %v264 = vadd.f32 %v44, %v263
  %v265 = vpop.f32.mrb[0].mxu0
  %v266 = vadd.f32 %v48, %v265
  %v267 = vpop.f32.mrb[0].mxu0
  %v268 = vadd.f32 %v44, %v267
  %v269 = vpop.f32.mrb[0].mxu0
  %v270 = vadd.f32 %v48, %v269
  %271 = vdwg.mxu0
  %v272 = vpack.c.bf16 %v165, %v161
  %v273 = vpack.c.bf16 %v167, %v163
  %v274 = vpack.c.bf16 %v238, %v234
  %v275 = vpack.c.bf16 %v240, %v236
  %v276 = vpack.c.bf16 %v175, %v171
  %v277 = vpack.c.bf16 %v177, %v173
  %v278 = vpack.c.bf16 %v248, %v244
  %v279 = vpack.c.bf16 %v250, %v246
  %v280 = vpack.c.bf16 %v185, %v181
  %v281 = vpack.c.bf16 %v187, %v183
  %v282 = vpack.c.bf16 %v258, %v254
  %v283 = vpack.c.bf16 %v260, %v256
  %v284 = vpack.c.bf16 %v195, %v191
  %v285 = vpack.c.bf16 %v197, %v193
  %v286 = vpack.c.bf16 %v268, %v264
  %v287 = vpack.c.bf16 %v270, %v266
  %v304 = vunpack.c.l.b16 %v272
  %v305 = vunpack.c.l.b16 %v273
  %v306 = vunpack.c.l.b16 %v274
  %v307 = vunpack.c.l.b16 %v275
  %v308 = vunpack.c.h.b16 %v272
  %v309 = vunpack.c.h.b16 %v273
  %v310 = vunpack.c.h.b16 %v274
  %v311 = vunpack.c.h.b16 %v275
  %v312 = vunpack.c.l.b16 %v276
  %v313 = vunpack.c.l.b16 %v277
  %v314 = vunpack.c.l.b16 %v278
  %v315 = vunpack.c.l.b16 %v279
  %v316 = vunpack.c.h.b16 %v276
  %v317 = vunpack.c.h.b16 %v277
  %v318 = vunpack.c.h.b16 %v278
  %v319 = vunpack.c.h.b16 %v279
  %v320 = vunpack.c.l.b16 %v280
  %v321 = vunpack.c.l.b16 %v281
  %v322 = vunpack.c.l.b16 %v282
  %v323 = vunpack.c.l.b16 %v283
  %v324 = vunpack.c.h.b16 %v280
  %v325 = vunpack.c.h.b16 %v281
  %v326 = vunpack.c.h.b16 %v282
  %v327 = vunpack.c.h.b16 %v283
  %v328 = vunpack.c.l.b16 %v284
  %v329 = vunpack.c.l.b16 %v285
  %v330 = vunpack.c.l.b16 %v286
  %v331 = vunpack.c.l.b16 %v287
  %v332 = vunpack.c.h.b16 %v284
  %v333 = vunpack.c.h.b16 %v285
  %v334 = vunpack.c.h.b16 %v286
  %v335 = vunpack.c.h.b16 %v287
  %v336 = vpack.c.b16 %v305, %v304
  %v337 = vpack.c.b16 %v307, %v306
  %v338 = vpack.c.b16 %v309, %v308
  %v339 = vpack.c.b16 %v311, %v310
  %v340 = vpack.c.b16 %v313, %v312
  %v341 = vpack.c.b16 %v315, %v314
  %v342 = vpack.c.b16 %v317, %v316
  %v343 = vpack.c.b16 %v319, %v318
  %v344 = vpack.c.b16 %v321, %v320
  %v345 = vpack.c.b16 %v323, %v322
  %v346 = vpack.c.b16 %v325, %v324
  %v347 = vpack.c.b16 %v327, %v326
  %v348 = vpack.c.b16 %v329, %v328
  %v349 = vpack.c.b16 %v331, %v330
  %v350 = vpack.c.b16 %v333, %v332
  %v351 = vpack.c.b16 %v335, %v334
  %368 = vst [vmem:[%s3] sm:$0xff] %v336
  %369 = vst [vmem:[%s3 + $0x8] sm:$0xff] %v337
  %370 = vst [vmem:[%s3 + $0x10] sm:$0xff] %v338
  %371 = vst [vmem:[%s3 + $0x18] sm:$0xff] %v339
  %372 = vst [vmem:[%s3 + $0x20] sm:$0xff] %v340
  %373 = vst [vmem:[%s3 + $0x28] sm:$0xff] %v341
  %374 = vst [vmem:[%s3 + $0x30] sm:$0xff] %v342
  %375 = vst [vmem:[%s3 + $0x38] sm:$0xff] %v343
  %376 = vst [vmem:[%s3 + $0x40] sm:$0xff] %v344
  %377 = vst [vmem:[%s3 + $0x48] sm:$0xff] %v345
  %378 = vst [vmem:[%s3 + $0x50] sm:$0xff] %v346
  %379 = vst [vmem:[%s3 + $0x58] sm:$0xff] %v347
  %380 = vst [vmem:[%s3 + $0x60] sm:$0xff] %v348
  %381 = vst [vmem:[%s3 + $0x68] sm:$0xff] %v349
  %382 = vst [vmem:[%s3 + $0x70] sm:$0xff] %v350
  %383 = vst [vmem:[%s3 + $0x78] sm:$0xff] %v351
  // Predicated region
  $region14: #{rnn_model_forward.5} parent=0 // pred_check
    _
  $region15: #{rnn_model_forward.5} parent=0 // pred_check_branch
    %385 = sbr.rel (0) target = $region17
  $region16: #{rnn_model_forward.5} parent=0 // pred_region
    _
  $region17: #{rnn_model_forward.5} parent=0 // pred_fallthru
    _
  // Predicated region
  $region18: #{rnn_model_forward.5} parent=0 // pred_check
    _
  $region19: #{rnn_model_forward.5} parent=0 // pred_check_branch
    %387 = sbr.rel (0) target = $region21
  $region20: #{rnn_model_forward.5} parent=0 // pred_region
    _
  $region21: #{rnn_model_forward.5} parent=0 // pred_fallthru
    _

// kernel: rnn_model_forward.9
$region0: #{rnn_model_forward.9}
  #allocation0 [shape = 'u32[]', space=smem, size = 0x4, offset = 0x4, fixed_abs, tag = 'smem constant byte address 0x4 - core index']
  #allocation1 [shape = 'u32[144,128]{1,0:T(1,128)}', space=vmem, size = 0x12000, scoped, tag = 'internal scratch']
  %s0 = inlined_call_operand.vmem [shape: bf16[64,128], index: 0, kind: input, shape index: {}]
  %s1 = inlined_call_operand.vmem [shape: bf16[128,64], index: 1, kind: input, shape index: {}]
  %s2 = inlined_call_operand.vmem [shape: f32[1,64], index: 2, kind: input, shape index: {}]
  %s3 = inlined_call_operand.vmem [shape: bf16[64,64], index: 3, kind: output, shape index: {}]
  %s4 = sld [smem:[#allocation0]]
  $region22: #{rnn_model_forward.9} parent=0
    _
  %s6 = ssub.s32 1, %s4
  %s7 = scalar_select 0, %s6, %s4
  // Predicated region
  $region2: #{rnn_model_forward.9} parent=0 // pred_check
    _
  $region3: #{rnn_model_forward.9} parent=0 // pred_check_branch
    %9 = sbr.rel (0) target = $region5
  $region4: #{rnn_model_forward.9} parent=0 // pred_region
    _
  $region5: #{rnn_model_forward.9} parent=0 // pred_fallthru
    _
  // Predicated region
  $region6: #{rnn_model_forward.9} parent=0 // pred_check
    _
  $region7: #{rnn_model_forward.9} parent=0 // pred_check_branch
    %11 = sbr.rel (0) target = $region9
  $region8: #{rnn_model_forward.9} parent=0 // pred_region
    _
  $region9: #{rnn_model_forward.9} parent=0 // pred_fallthru
    _
  // Predicated region
  $region10: #{rnn_model_forward.9} parent=0 // pred_check
    _
  $region11: #{rnn_model_forward.9} parent=0 // pred_check_branch
    %13 = sbr.rel (0) target = $region13
  $region12: #{rnn_model_forward.9} parent=0 // pred_region
    _
  $region13: #{rnn_model_forward.9} parent=0 // pred_fallthru
    _
  %v15 = vld [vmem:[%s0] sm:$0xf]
  %v16 = vld [vmem:[%s0 + $0x4] sm:$0xf]
  %v17 = vld [vmem:[%s0 + $0x8] sm:$0xf]
  %v18 = vld [vmem:[%s0 + $0xc] sm:$0xf]
  %v19 = vld [vmem:[%s0 + $0x10] sm:$0xf]
  %v20 = vld [vmem:[%s0 + $0x14] sm:$0xf]
  %v21 = vld [vmem:[%s0 + $0x18] sm:$0xf]
  %v22 = vld [vmem:[%s0 + $0x1c] sm:$0xf]
  %v23 = vld [vmem:[%s1] sm:$0xf]
  %v24 = vld [vmem:[%s1 + $0x4] sm:$0xf]
  %v25 = vld [vmem:[%s1 + $0x8] sm:$0xf]
  %v26 = vld [vmem:[%s1 + $0xc] sm:$0xf]
  %v27 = vld [vmem:[%s1 + $0x10] sm:$0xf]
  %v28 = vld [vmem:[%s1 + $0x14] sm:$0xf]
  %v29 = vld [vmem:[%s1 + $0x18] sm:$0xf]
  %v30 = vld [vmem:[%s1 + $0x1c] sm:$0xf]
  %v31 = vld [vmem:[%s1 + $0x20] sm:$0xf]
  %v32 = vld [vmem:[%s1 + $0x24] sm:$0xf]
  %v33 = vld [vmem:[%s1 + $0x28] sm:$0xf]
  %v34 = vld [vmem:[%s1 + $0x2c] sm:$0xf]
  %v35 = vld [vmem:[%s1 + $0x30] sm:$0xf]
  %v36 = vld [vmem:[%s1 + $0x34] sm:$0xf]
  %v37 = vld [vmem:[%s1 + $0x38] sm:$0xf]
  %v38 = vld [vmem:[%s1 + $0x3c] sm:$0xf]
  %v39 = vld [vmem:[%s2] sm:$0x1]
  %v41 = vlaneseq
  %v42 = vshrl.u32 %v41, 7
  %v43 = vsub.s32 0, %v42
  %v44 = vrot.slane %v39, %v43
  %v54 = vunpack.c.l.b16 %v15
  %v55 = vunpack.c.l.b16 %v16
  %v56 = vunpack.c.l.b16 %v17
  %v57 = vunpack.c.l.b16 %v18
  %v58 = vunpack.c.l.b16 %v19
  %v59 = vunpack.c.l.b16 %v20
  %v60 = vunpack.c.l.b16 %v21
  %v61 = vunpack.c.l.b16 %v22
  %v62 = vpack.c.b16 %v55, %v54
  %v63 = vpack.c.b16 %v57, %v56
  %v64 = vpack.c.b16 %v59, %v58
  %v65 = vpack.c.b16 %v61, %v60
  %v86 = vunpack.c.l.b16 %v23
  %v87 = vunpack.c.l.b16 %v24
  %v88 = vunpack.c.l.b16 %v25
  %v89 = vunpack.c.l.b16 %v26
  %v90 = vunpack.c.l.b16 %v27
  %v91 = vunpack.c.l.b16 %v28
  %v92 = vunpack.c.l.b16 %v29
  %v93 = vunpack.c.l.b16 %v30
  %v94 = vunpack.c.l.b16 %v31
  %v95 = vunpack.c.l.b16 %v32
  %v96 = vunpack.c.l.b16 %v33
  %v97 = vunpack.c.l.b16 %v34
  %v98 = vunpack.c.l.b16 %v35
  %v99 = vunpack.c.l.b16 %v36
  %v100 = vunpack.c.l.b16 %v37
  %v101 = vunpack.c.l.b16 %v38
  %v102 = vpack.c.b16 %v87, %v86
  %v103 = vpack.c.b16 %v89, %v88
  %v104 = vpack.c.b16 %v91, %v90
  %v105 = vpack.c.b16 %v93, %v92
  %v106 = vpack.c.b16 %v95, %v94
  %v107 = vpack.c.b16 %v97, %v96
  %v108 = vpack.c.b16 %v99, %v98
  %v109 = vpack.c.b16 %v101, %v100
  %118 = vmatprep.subr.bf16.mxu0 0
  %119 = vmatpush1.bf16.msra.mxu0 %v102
  %120 = vmatprep.subr.bf16.mxu0 0
  %121 = vmatpush1.bf16.msra.mxu0 %v103
  %122 = vmatprep.subr.bf16.mxu0 0
  %123 = vmatpush1.bf16.msra.mxu0 %v104
  %124 = vmatprep.subr.bf16.mxu0 0
  %125 = vmatpush1.bf16.msra.mxu0 %v105
  %126 = vmatprep.subr.bf16.mxu0 0
  %127 = vmatpush1.bf16.msra.mxu0 %v106
  %128 = vmatprep.subr.bf16.mxu0 0
  %129 = vmatpush1.bf16.msra.mxu0 %v107
  %130 = vmatprep.subr.bf16.mxu0 0
  %131 = vmatpush1.bf16.msra.mxu0 %v108
  %132 = vmatprep.subr.bf16.mxu0 0
  %133 = vmatpush1.bf16.msra.mxu0 %v109
  %134 = vmatprep.subr.bf16.mxu0 0
  %135 = vmatpush1.bf16.msra.mxu0 0
  %136 = vmatprep.subr.bf16.mxu0 0
  %137 = vmatpush1.bf16.msra.mxu0 0
  %138 = vmatprep.subr.bf16.mxu0 0
  %139 = vmatpush1.bf16.msra.mxu0 0
  %140 = vmatprep.subr.bf16.mxu0 0
  %141 = vmatpush1.bf16.msra.mxu0 0
  %142 = vmatprep.subr.bf16.mxu0 0
  %143 = vmatpush1.bf16.msra.mxu0 0
  %144 = vmatprep.subr.bf16.mxu0 0
  %145 = vmatpush1.bf16.msra.mxu0 0
  %146 = vmatprep.subr.bf16.mxu0 0
  %147 = vmatpush1.bf16.msra.mxu0 0
  %148 = vmatprep.subr.bf16.mxu0 0
  %149 = vmatpush1.bf16.msra.mxu0 0
  %150 = vmatprep.mubr.bf16.mxu0 0
  %151 = vmatmul.mubr.bf16.gmra.mrb[0].mxu0 %v62
  %v152 = vpop.f32.mrb[0].mxu0
  %v153 = vadd.f32 %v44, %v152
  %v154 = vpop.f32.mrb[0].mxu0
  %v155 = vpop.f32.mrb[0].mxu0
  %v156 = vadd.f32 %v44, %v155
  %v157 = vpop.f32.mrb[0].mxu0
  %158 = vmatprep.mubr.bf16.mxu0 0
  %159 = vmatmul.mubr.bf16.gmra.mrb[0].mxu0 %v63
  %v160 = vpop.f32.mrb[0].mxu0
  %v161 = vadd.f32 %v44, %v160
  %v162 = vpop.f32.mrb[0].mxu0
  %v163 = vpop.f32.mrb[0].mxu0
  %v164 = vadd.f32 %v44, %v163
  %v165 = vpop.f32.mrb[0].mxu0
  %166 = vmatprep.mubr.bf16.mxu0 0
  %167 = vmatmul.mubr.bf16.gmra.mrb[0].mxu0 %v64
  %v168 = vpop.f32.mrb[0].mxu0
  %v169 = vadd.f32 %v44, %v168
  %v170 = vpop.f32.mrb[0].mxu0
  %v171 = vpop.f32.mrb[0].mxu0
  %v172 = vadd.f32 %v44, %v171
  %v173 = vpop.f32.mrb[0].mxu0
  %174 = vmatprep.mubr.bf16.mxu0 0
  %175 = vmatmul.mubr.bf16.gmra.mrb[0].mxu0 %v65
  %v176 = vpop.f32.mrb[0].mxu0
  %v177 = vadd.f32 %v44, %v176
  %v178 = vpop.f32.mrb[0].mxu0
  %v179 = vpop.f32.mrb[0].mxu0
  %v180 = vadd.f32 %v44, %v179
  %v181 = vpop.f32.mrb[0].mxu0
  %182 = vdwg.mxu0
  %v183 = vpack.c.bf16 %v156, %v153
  %v184 = vpack.c.bf16 %v164, %v161
  %v185 = vpack.c.bf16 %v172, %v169
  %v186 = vpack.c.bf16 %v180, %v177
  %v191 = vunpack.c.l.b16 %v183
  %v192 = vunpack.c.h.b16 %v183
  %v193 = vunpack.c.l.b16 %v184
  %v194 = vunpack.c.h.b16 %v184
  %v195 = vunpack.c.l.b16 %v185
  %v196 = vunpack.c.h.b16 %v185
  %v197 = vunpack.c.l.b16 %v186
  %v198 = vunpack.c.h.b16 %v186
  %v199 = vpack.c.b16 %v191, %v191
  %v200 = vpack.c.b16 %v192, %v192
  %v201 = vpack.c.b16 %v193, %v193
  %v202 = vpack.c.b16 %v194, %v194
  %v203 = vpack.c.b16 %v195, %v195
  %v204 = vpack.c.b16 %v196, %v196
  %v205 = vpack.c.b16 %v197, %v197
  %v206 = vpack.c.b16 %v198, %v198
  %vm215 = vcmask 519168
  %216 = vst.msk [vmem:[%s3] sm:$0xf] %vm215, %v199
  %217 = vst.msk [vmem:[%s3 + $0x4] sm:$0xf] %vm215, %v200
  %218 = vst.msk [vmem:[%s3 + $0x8] sm:$0xf] %vm215, %v201
  %219 = vst.msk [vmem:[%s3 + $0xc] sm:$0xf] %vm215, %v202
  %220 = vst.msk [vmem:[%s3 + $0x10] sm:$0xf] %vm215, %v203
  %221 = vst.msk [vmem:[%s3 + $0x14] sm:$0xf] %vm215, %v204
  %222 = vst.msk [vmem:[%s3 + $0x18] sm:$0xf] %vm215, %v205
  %223 = vst.msk [vmem:[%s3 + $0x1c] sm:$0xf] %vm215, %v206
  // Predicated region
  $region14: #{rnn_model_forward.9} parent=0 // pred_check
    _
  $region15: #{rnn_model_forward.9} parent=0 // pred_check_branch
    %225 = sbr.rel (0) target = $region17
  $region16: #{rnn_model_forward.9} parent=0 // pred_region
    _
  $region17: #{rnn_model_forward.9} parent=0 // pred_fallthru
    _
  // Predicated region
  $region18: #{rnn_model_forward.9} parent=0 // pred_check
    _
  $region19: #{rnn_model_forward.9} parent=0 // pred_check_branch
    %227 = sbr.rel (0) target = $region21
  $region20: #{rnn_model_forward.9} parent=0 // pred_region
    _
  $region21: #{rnn_model_forward.9} parent=0 // pred_fallthru
    _

// kernel: rnn_model_forward.6
$region0: #{rnn_model_forward.6}
  #allocation0 [shape = 'u32[]', space=smem, size = 0x4, offset = 0x4, fixed_abs, tag = 'smem constant byte address 0x4 - core index']
  #allocation1 [shape = 'u32[144,128]{1,0:T(1,128)}', space=vmem, size = 0x12000, scoped, tag = 'internal scratch']
  #allocation2 [shape = 'bf16[128,512]{1,0:T(16,128)(2,1)}', space=vmem, size = 0x20000, scoped, tag = 'scratch operand']
  #allocation3 [shape = 's32[1]{0}', space=sflag, size = 0x4, scoped, tag = 'scratch operand']
  #allocation4 [shape = 's32[]', space=sflag, size = 0x4, offset = 0, fixed_abs, tag = 'sflag constant byte address 0x0 - dummy sync flag']
  %s0 = inlined_call_operand.vmem [shape: bf16[8,8,512], index: 0, kind: input, shape index: {}]
  %s1 = inlined_call_operand.vmem [shape: f32[8,128], index: 1, kind: input, shape index: {}]
  %s2 = inlined_call_operand.vmem [shape: f32[8,128], index: 2, kind: input, shape index: {}]
  %s3 = inlined_call_operand.vmem [shape: bf16[128,512], index: 3, kind: input, shape index: {}]
  %s4 = inlined_call_operand.vmem [shape: bf16[8,8,128], index: 4, kind: output, shape index: {0}]
  %s5 = inlined_call_operand.vmem [shape: f32[8,128], index: 5, kind: output, shape index: {1}]
  %s6 = inlined_call_operand.vmem [shape: f32[8,128], index: 6, kind: output, shape index: {2}]
  %7 = xla_tuple %s4, %s5, %s6
  %s8 = sld [smem:[#allocation0]]
  $region79: #{rnn_model_forward.6} parent=0
    _
  %s10 = ssub.s32 1, %s8
  %s11 = scalar_select 0, %s10, %s8
  // Predicated region
  $region2: #{rnn_model_forward.6} parent=0 // pred_check
    _
  $region3: #{rnn_model_forward.6} parent=0 // pred_check_branch
    %13 = sbr.rel (0) target = $region5
  $region4: #{rnn_model_forward.6} parent=0 // pred_region
    _
  $region5: #{rnn_model_forward.6} parent=0 // pred_fallthru
    _
  // Predicated region
  $region6: #{rnn_model_forward.6} parent=0 // pred_check
    _
  $region7: #{rnn_model_forward.6} parent=0 // pred_check_branch
    %15 = sbr.rel (0) target = $region9
  $region8: #{rnn_model_forward.6} parent=0 // pred_region
    _
  $region9: #{rnn_model_forward.6} parent=0 // pred_fallthru
    _
  // Predicated region
  $region10: #{rnn_model_forward.6} parent=0 // pred_check
    _
  $region11: #{rnn_model_forward.6} parent=0 // pred_check_branch
    %17 = sbr.rel (0) target = $region13
  $region12: #{rnn_model_forward.6} parent=0 // pred_region
    _
  $region13: #{rnn_model_forward.6} parent=0 // pred_fallthru
    _
  %p19 = scmp.eq.s32.totalorder 0, 0
  // Predicated region
  $region14: #{rnn_model_forward.6} parent=0 // pred_check
    %p20 = pneg %p19
  $region15: #{rnn_model_forward.6} parent=0 // pred_check_branch
    %22 = sbr.rel (%p20) target = $region17
  $region16: #{rnn_model_forward.6} parent=0 // pred_region
    %p24 = scmp.lt.u32.totalorder 4, 8
    %p25 = pneg %p24
    // Predicated region
    $region18: #{rnn_model_forward.6} parent=16 // pred_check
      _
    $region19: #{rnn_model_forward.6} parent=16 // pred_check_branch
      %27 = sbr.rel (%p24) target = $region21
    $region20: #{rnn_model_forward.6} parent=16 // pred_region
      %s168 = sand.u32 4, 7
      %p169 = scmp.eq.s32.totalorder %s168, 0
      %p170 = pneg %p169
      // Predicated region
      $region33: #{rnn_model_forward.6} parent=20 // pred_check
        _
      $region34: #{rnn_model_forward.6} parent=20 // pred_check_branch
        %172 = sbr.rel (%p169) target = $region36
      $region35: #{rnn_model_forward.6} parent=20 // pred_region
        %s173 = sand.u32 4, 7
        %s174 = ssub.s32 4, %s173
        %s175 = scalar_lea.vmem %s3, %s174
        %s176 = ssub.s32 4, %s173
        %s177 = scalar_lea.vmem [#allocation2], %s176
        loop: start=0, step=1, limit=1
        $region37: #{rnn_model_forward.6} parent=35 // loop_pre_header
          _
        $region38: #{rnn_model_forward.6} parent=35 // loop_header
          %s179 = sphi 0, %s183
          %p180 = scmp.ge.s32.totalorder %s179, 1
          %s184 = sphi %s3, %s3
          %s185 = sphi [#allocation2], [#allocation2]
        $region39: #{rnn_model_forward.6} parent=35 // loop_header_branch
          %182 = sbr.rel (%p180) target = $region43
        $region40: #{rnn_model_forward.6} parent=35 // loop_body
          _
        $region41: #{rnn_model_forward.6} parent=35 // loop_footer
          %s183 = sadd.s32 1, %s179
        $region42: #{rnn_model_forward.6} parent=35 // loop_footer_branch
          %178 = sbr.rel target = $region38
        $region43: #{rnn_model_forward.6} parent=35 // loop_exit
          _
        %s186 = sshllo.u32 0, %s173
        loop: start=0, step=1, limit=1
        $region44: #{rnn_model_forward.6} parent=35 // loop_pre_header
          _
        $region45: #{rnn_model_forward.6} parent=35 // loop_header
          %s188 = sphi 0, %s192
          %p189 = scmp.ge.s32.totalorder %s188, 1
          %s193 = sphi %s175, %s175
          %s194 = sphi %s177, %s177
        $region46: #{rnn_model_forward.6} parent=35 // loop_header_branch
          %191 = sbr.rel (%p189) target = $region50
        $region47: #{rnn_model_forward.6} parent=35 // loop_body
          %v195 = vld [vmem:[%s193] sm:%s186]
          %196 = vst [vmem:[%s194] sm:%s186] %v195
          %v197 = vld [vmem:[%s193 + $0x10] sm:%s186]
          %198 = vst [vmem:[%s194 + $0x4] sm:%s186] %v197
          %v199 = vld [vmem:[%s193 + $0x4] sm:%s186]
          %200 = vst [vmem:[%s194 + $0x8] sm:%s186] %v199
          %v201 = vld [vmem:[%s193 + $0x14] sm:%s186]
          %202 = vst [vmem:[%s194 + $0xc] sm:%s186] %v201
          %v203 = vld [vmem:[%s193 + $0x8] sm:%s186]
          %204 = vst [vmem:[%s194 + $0x10] sm:%s186] %v203
          %v205 = vld [vmem:[%s193 + $0x18] sm:%s186]
          %206 = vst [vmem:[%s194 + $0x14] sm:%s186] %v205
          %v207 = vld [vmem:[%s193 + $0xc] sm:%s186]
          %208 = vst [vmem:[%s194 + $0x18] sm:%s186] %v207
          %v209 = vld [vmem:[%s193 + $0x1c] sm:%s186]
          %210 = vst [vmem:[%s194 + $0x1c] sm:%s186] %v209
          %v211 = vld [vmem:[%s193 + $0x20] sm:%s186]
          %212 = vst [vmem:[%s194 + $0x20] sm:%s186] %v211
          %v213 = vld [vmem:[%s193 + $0x30] sm:%s186]
          %214 = vst [vmem:[%s194 + $0x24] sm:%s186] %v213
          %v215 = vld [vmem:[%s193 + $0x24] sm:%s186]
          %216 = vst [vmem:[%s194 + $0x28] sm:%s186] %v215
          %v217 = vld [vmem:[%s193 + $0x34] sm:%s186]
          %218 = vst [vmem:[%s194 + $0x2c] sm:%s186] %v217
          %v219 = vld [vmem:[%s193 + $0x28] sm:%s186]
          %220 = vst [vmem:[%s194 + $0x30] sm:%s186] %v219
          %v221 = vld [vmem:[%s193 + $0x38] sm:%s186]
          %222 = vst [vmem:[%s194 + $0x34] sm:%s186] %v221
          %v223 = vld [vmem:[%s193 + $0x2c] sm:%s186]
          %224 = vst [vmem:[%s194 + $0x38] sm:%s186] %v223
          %v225 = vld [vmem:[%s193 + $0x3c] sm:%s186]
          %226 = vst [vmem:[%s194 + $0x3c] sm:%s186] %v225
          %v227 = vld [vmem:[%s193 + $0x40] sm:%s186]
          %228 = vst [vmem:[%s194 + $0x40] sm:%s186] %v227
          %v229 = vld [vmem:[%s193 + $0x50] sm:%s186]
          %230 = vst [vmem:[%s194 + $0x44] sm:%s186] %v229
          %v231 = vld [vmem:[%s193 + $0x44] sm:%s186]
          %232 = vst [vmem:[%s194 + $0x48] sm:%s186] %v231
          %v233 = vld [vmem:[%s193 + $0x54] sm:%s186]
          %234 = vst [vmem:[%s194 + $0x4c] sm:%s186] %v233
          %v235 = vld [vmem:[%s193 + $0x48] sm:%s186]
          %236 = vst [vmem:[%s194 + $0x50] sm:%s186] %v235
          %v237 = vld [vmem:[%s193 + $0x58] sm:%s186]
          %238 = vst [vmem:[%s194 + $0x54] sm:%s186] %v237
          %v239 = vld [vmem:[%s193 + $0x4c] sm:%s186]
          %240 = vst [vmem:[%s194 + $0x58] sm:%s186] %v239
          %v241 = vld [vmem:[%s193 + $0x5c] sm:%s186]
          %242 = vst [vmem:[%s194 + $0x5c] sm:%s186] %v241
          %v243 = vld [vmem:[%s193 + $0x60] sm:%s186]
          %244 = vst [vmem:[%s194 + $0x60] sm:%s186] %v243
          %v245 = vld [vmem:[%s193 + $0x70] sm:%s186]
          %246 = vst [vmem:[%s194 + $0x64] sm:%s186] %v245
          %v247 = vld [vmem:[%s193 + $0x64] sm:%s186]
          %248 = vst [vmem:[%s194 + $0x68] sm:%s186] %v247
          %v249 = vld [vmem:[%s193 + $0x74] sm:%s186]
          %250 = vst [vmem:[%s194 + $0x6c] sm:%s186] %v249
          %v251 = vld [vmem:[%s193 + $0x68] sm:%s186]
          %252 = vst [vmem:[%s194 + $0x70] sm:%s186] %v251
          %v253 = vld [vmem:[%s193 + $0x78] sm:%s186]
          %254 = vst [vmem:[%s194 + $0x74] sm:%s186] %v253
          %v255 = vld [vmem:[%s193 + $0x6c] sm:%s186]
          %256 = vst [vmem:[%s194 + $0x78] sm:%s186] %v255
          %v257 = vld [vmem:[%s193 + $0x7c] sm:%s186]
          %258 = vst [vmem:[%s194 + $0x7c] sm:%s186] %v257
          %v259 = vld [vmem:[%s193 + $0x80] sm:%s186]
          %260 = vst [vmem:[%s194 + $0x80] sm:%s186] %v259
          %v261 = vld [vmem:[%s193 + $0x90] sm:%s186]
          %262 = vst [vmem:[%s194 + $0x84] sm:%s186] %v261
          %v263 = vld [vmem:[%s193 + $0x84] sm:%s186]
          %264 = vst [vmem:[%s194 + $0x88] sm:%s186] %v263
          %v265 = vld [vmem:[%s193 + $0x94] sm:%s186]
          %266 = vst [vmem:[%s194 + $0x8c] sm:%s186] %v265
          %v267 = vld [vmem:[%s193 + $0x88] sm:%s186]
          %268 = vst [vmem:[%s194 + $0x90] sm:%s186] %v267
          %v269 = vld [vmem:[%s193 + $0x98] sm:%s186]
          %270 = vst [vmem:[%s194 + $0x94] sm:%s186] %v269
          %v271 = vld [vmem:[%s193 + $0x8c] sm:%s186]
          %272 = vst [vmem:[%s194 + $0x98] sm:%s186] %v271
          %v273 = vld [vmem:[%s193 + $0x9c] sm:%s186]
          %274 = vst [vmem:[%s194 + $0x9c] sm:%s186] %v273
          %v275 = vld [vmem:[%s193 + $0xa0] sm:%s186]
          %276 = vst [vmem:[%s194 + $0xa0] sm:%s186] %v275
          %v277 = vld [vmem:[%s193 + $0xb0] sm:%s186]
          %278 = vst [vmem:[%s194 + $0xa4] sm:%s186] %v277
          %v279 = vld [vmem:[%s193 + $0xa4] sm:%s186]
          %280 = vst [vmem:[%s194 + $0xa8] sm:%s186] %v279
          %v281 = vld [vmem:[%s193 + $0xb4] sm:%s186]
          %282 = vst [vmem:[%s194 + $0xac] sm:%s186] %v281
          %v283 = vld [vmem:[%s193 + $0xa8] sm:%s186]
          %284 = vst [vmem:[%s194 + $0xb0] sm:%s186] %v283
          %v285 = vld [vmem:[%s193 + $0xb8] sm:%s186]
          %286 = vst [vmem:[%s194 + $0xb4] sm:%s186] %v285
          %v287 = vld [vmem:[%s193 + $0xac] sm:%s186]
          %288 = vst [vmem:[%s194 + $0xb8] sm:%s186] %v287
          %v289 = vld [vmem:[%s193 + $0xbc] sm:%s186]
          %290 = vst [vmem:[%s194 + $0xbc] sm:%s186] %v289
          %v291 = vld [vmem:[%s193 + $0xc0] sm:%s186]
          %292 = vst [vmem:[%s194 + $0xc0] sm:%s186] %v291
          %v293 = vld [vmem:[%s193 + $0xd0] sm:%s186]
          %294 = vst [vmem:[%s194 + $0xc4] sm:%s186] %v293
          %v295 = vld [vmem:[%s193 + $0xc4] sm:%s186]
          %296 = vst [vmem:[%s194 + $0xc8] sm:%s186] %v295
          %v297 = vld [vmem:[%s193 + $0xd4] sm:%s186]
          %298 = vst [vmem:[%s194 + $0xcc] sm:%s186] %v297
          %v299 = vld [vmem:[%s193 + $0xc8] sm:%s186]
          %300 = vst [vmem:[%s194 + $0xd0] sm:%s186] %v299
          %v301 = vld [vmem:[%s193 + $0xd8] sm:%s186]
          %302 = vst [vmem:[%s194 + $0xd4] sm:%s186] %v301
          %v303 = vld [vmem:[%s193 + $0xcc] sm:%s186]
          %304 = vst [vmem:[%s194 + $0xd8] sm:%s186] %v303
          %v305 = vld [vmem:[%s193 + $0xdc] sm:%s186]
          %306 = vst [vmem:[%s194 + $0xdc] sm:%s186] %v305
          %v307 = vld [vmem:[%s193 + $0xe0] sm:%s186]
          %308 = vst [vmem:[%s194 + $0xe0] sm:%s186] %v307
          %v309 = vld [vmem:[%s193 + $0xf0] sm:%s186]
          %310 = vst [vmem:[%s194 + $0xe4] sm:%s186] %v309
          %v311 = vld [vmem:[%s193 + $0xe4] sm:%s186]
          %312 = vst [vmem:[%s194 + $0xe8] sm:%s186] %v311
          %v313 = vld [vmem:[%s193 + $0xf4] sm:%s186]
          %314 = vst [vmem:[%s194 + $0xec] sm:%s186] %v313
          %v315 = vld [vmem:[%s193 + $0xe8] sm:%s186]
          %316 = vst [vmem:[%s194 + $0xf0] sm:%s186] %v315
          %v317 = vld [vmem:[%s193 + $0xf8] sm:%s186]
          %318 = vst [vmem:[%s194 + $0xf4] sm:%s186] %v317
          %v319 = vld [vmem:[%s193 + $0xec] sm:%s186]
          %320 = vst [vmem:[%s194 + $0xf8] sm:%s186] %v319
          %v321 = vld [vmem:[%s193 + $0xfc] sm:%s186]
          %322 = vst [vmem:[%s194 + $0xfc] sm:%s186] %v321
        $region48: #{rnn_model_forward.6} parent=35 // loop_footer
          %s192 = sadd.s32 1, %s188
        $region49: #{rnn_model_forward.6} parent=35 // loop_footer_branch
          %187 = sbr.rel target = $region45
        $region50: #{rnn_model_forward.6} parent=35 // loop_exit
          _
      $region36: #{rnn_model_forward.6} parent=20 // pred_fallthru
        _
    $region21: #{rnn_model_forward.6} parent=16 // pred_fallthru
      _
    // Predicated region
    $region22: #{rnn_model_forward.6} parent=16 // pred_check
      %p28 = pneg %p24
    $region23: #{rnn_model_forward.6} parent=16 // pred_check_branch
      %30 = sbr.rel (%p28) target = $region25
    $region24: #{rnn_model_forward.6} parent=16 // pred_region
      %s31 = sshllo.u32 0, 4
      loop: start=0, step=1, limit=1
      $region26: #{rnn_model_forward.6} parent=24 // loop_pre_header
        _
      $region27: #{rnn_model_forward.6} parent=24 // loop_header
        %s33 = sphi 0, %s37
        %p34 = scmp.ge.s32.totalorder %s33, 1
        %s38 = sphi %s3, %s3
        %s39 = sphi [#allocation2], [#allocation2]
      $region28: #{rnn_model_forward.6} parent=24 // loop_header_branch
        %36 = sbr.rel (%p34) target = $region32
      $region29: #{rnn_model_forward.6} parent=24 // loop_body
        %v40 = vld [vmem:[%s38] sm:%s31]
        %41 = vst [vmem:[%s39] sm:%s31] %v40
        %v42 = vld [vmem:[%s38 + $0x10] sm:%s31]
        %43 = vst [vmem:[%s39 + $0x4] sm:%s31] %v42
        %v44 = vld [vmem:[%s38 + $0x4] sm:%s31]
        %45 = vst [vmem:[%s39 + $0x8] sm:%s31] %v44
        %v46 = vld [vmem:[%s38 + $0x14] sm:%s31]
        %47 = vst [vmem:[%s39 + $0xc] sm:%s31] %v46
        %v48 = vld [vmem:[%s38 + $0x8] sm:%s31]
        %49 = vst [vmem:[%s39 + $0x10] sm:%s31] %v48
        %v50 = vld [vmem:[%s38 + $0x18] sm:%s31]
        %51 = vst [vmem:[%s39 + $0x14] sm:%s31] %v50
        %v52 = vld [vmem:[%s38 + $0xc] sm:%s31]
        %53 = vst [vmem:[%s39 + $0x18] sm:%s31] %v52
        %v54 = vld [vmem:[%s38 + $0x1c] sm:%s31]
        %55 = vst [vmem:[%s39 + $0x1c] sm:%s31] %v54
        %v56 = vld [vmem:[%s38 + $0x20] sm:%s31]
        %57 = vst [vmem:[%s39 + $0x20] sm:%s31] %v56
        %v58 = vld [vmem:[%s38 + $0x30] sm:%s31]
        %59 = vst [vmem:[%s39 + $0x24] sm:%s31] %v58
        %v60 = vld [vmem:[%s38 + $0x24] sm:%s31]
        %61 = vst [vmem:[%s39 + $0x28] sm:%s31] %v60
        %v62 = vld [vmem:[%s38 + $0x34] sm:%s31]
        %63 = vst [vmem:[%s39 + $0x2c] sm:%s31] %v62
        %v64 = vld [vmem:[%s38 + $0x28] sm:%s31]
        %65 = vst [vmem:[%s39 + $0x30] sm:%s31] %v64
        %v66 = vld [vmem:[%s38 + $0x38] sm:%s31]
        %67 = vst [vmem:[%s39 + $0x34] sm:%s31] %v66
        %v68 = vld [vmem:[%s38 + $0x2c] sm:%s31]
        %69 = vst [vmem:[%s39 + $0x38] sm:%s31] %v68
        %v70 = vld [vmem:[%s38 + $0x3c] sm:%s31]
        %71 = vst [vmem:[%s39 + $0x3c] sm:%s31] %v70
        %v72 = vld [vmem:[%s38 + $0x40] sm:%s31]
        %73 = vst [vmem:[%s39 + $0x40] sm:%s31] %v72
        %v74 = vld [vmem:[%s38 + $0x50] sm:%s31]
        %75 = vst [vmem:[%s39 + $0x44] sm:%s31] %v74
        %v76 = vld [vmem:[%s38 + $0x44] sm:%s31]
        %77 = vst [vmem:[%s39 + $0x48] sm:%s31] %v76
        %v78 = vld [vmem:[%s38 + $0x54] sm:%s31]
        %79 = vst [vmem:[%s39 + $0x4c] sm:%s31] %v78
        %v80 = vld [vmem:[%s38 + $0x48] sm:%s31]
        %81 = vst [vmem:[%s39 + $0x50] sm:%s31] %v80
        %v82 = vld [vmem:[%s38 + $0x58] sm:%s31]
        %83 = vst [vmem:[%s39 + $0x54] sm:%s31] %v82
        %v84 = vld [vmem:[%s38 + $0x4c] sm:%s31]
        %85 = vst [vmem:[%s39 + $0x58] sm:%s31] %v84
        %v86 = vld [vmem:[%s38 + $0x5c] sm:%s31]
        %87 = vst [vmem:[%s39 + $0x5c] sm:%s31] %v86
        %v88 = vld [vmem:[%s38 + $0x60] sm:%s31]
        %89 = vst [vmem:[%s39 + $0x60] sm:%s31] %v88
        %v90 = vld [vmem:[%s38 + $0x70] sm:%s31]
        %91 = vst [vmem:[%s39 + $0x64] sm:%s31] %v90
        %v92 = vld [vmem:[%s38 + $0x64] sm:%s31]
        %93 = vst [vmem:[%s39 + $0x68] sm:%s31] %v92
        %v94 = vld [vmem:[%s38 + $0x74] sm:%s31]
        %95 = vst [vmem:[%s39 + $0x6c] sm:%s31] %v94
        %v96 = vld [vmem:[%s38 + $0x68] sm:%s31]
        %97 = vst [vmem:[%s39 + $0x70] sm:%s31] %v96
        %v98 = vld [vmem:[%s38 + $0x78] sm:%s31]
        %99 = vst [vmem:[%s39 + $0x74] sm:%s31] %v98
        %v100 = vld [vmem:[%s38 + $0x6c] sm:%s31]
        %101 = vst [vmem:[%s39 + $0x78] sm:%s31] %v100
        %v102 = vld [vmem:[%s38 + $0x7c] sm:%s31]
        %103 = vst [vmem:[%s39 + $0x7c] sm:%s31] %v102
        %v104 = vld [vmem:[%s38 + $0x80] sm:%s31]
        %105 = vst [vmem:[%s39 + $0x80] sm:%s31] %v104
        %v106 = vld [vmem:[%s38 + $0x90] sm:%s31]
        %107 = vst [vmem:[%s39 + $0x84] sm:%s31] %v106
        %v108 = vld [vmem:[%s38 + $0x84] sm:%s31]
        %109 = vst [vmem:[%s39 + $0x88] sm:%s31] %v108
        %v110 = vld [vmem:[%s38 + $0x94] sm:%s31]
        %111 = vst [vmem:[%s39 + $0x8c] sm:%s31] %v110
        %v112 = vld [vmem:[%s38 + $0x88] sm:%s31]
        %113 = vst [vmem:[%s39 + $0x90] sm:%s31] %v112
        %v114 = vld [vmem:[%s38 + $0x98] sm:%s31]
        %115 = vst [vmem:[%s39 + $0x94] sm:%s31] %v114
        %v116 = vld [vmem:[%s38 + $0x8c] sm:%s31]
        %117 = vst [vmem:[%s39 + $0x98] sm:%s31] %v116
        %v118 = vld [vmem:[%s38 + $0x9c] sm:%s31]
        %119 = vst [vmem:[%s39 + $0x9c] sm:%s31] %v118
        %v120 = vld [vmem:[%s38 + $0xa0] sm:%s31]
        %121 = vst [vmem:[%s39 + $0xa0] sm:%s31] %v120
        %v122 = vld [vmem:[%s38 + $0xb0] sm:%s31]
        %123 = vst [vmem:[%s39 + $0xa4] sm:%s31] %v122
        %v124 = vld [vmem:[%s38 + $0xa4] sm:%s31]
        %125 = vst [vmem:[%s39 + $0xa8] sm:%s31] %v124
        %v126 = vld [vmem:[%s38 + $0xb4] sm:%s31]
        %127 = vst [vmem:[%s39 + $0xac] sm:%s31] %v126
        %v128 = vld [vmem:[%s38 + $0xa8] sm:%s31]
        %129 = vst [vmem:[%s39 + $0xb0] sm:%s31] %v128
        %v130 = vld [vmem:[%s38 + $0xb8] sm:%s31]
        %131 = vst [vmem:[%s39 + $0xb4] sm:%s31] %v130
        %v132 = vld [vmem:[%s38 + $0xac] sm:%s31]
        %133 = vst [vmem:[%s39 + $0xb8] sm:%s31] %v132
        %v134 = vld [vmem:[%s38 + $0xbc] sm:%s31]
        %135 = vst [vmem:[%s39 + $0xbc] sm:%s31] %v134
        %v136 = vld [vmem:[%s38 + $0xc0] sm:%s31]
        %137 = vst [vmem:[%s39 + $0xc0] sm:%s31] %v136
        %v138 = vld [vmem:[%s38 + $0xd0] sm:%s31]
        %139 = vst [vmem:[%s39 + $0xc4] sm:%s31] %v138
        %v140 = vld [vmem:[%s38 + $0xc4] sm:%s31]
        %141 = vst [vmem:[%s39 + $0xc8] sm:%s31] %v140
        %v142 = vld [vmem:[%s38 + $0xd4] sm:%s31]
        %143 = vst [vmem:[%s39 + $0xcc] sm:%s31] %v142
        %v144 = vld [vmem:[%s38 + $0xc8] sm:%s31]
        %145 = vst [vmem:[%s39 + $0xd0] sm:%s31] %v144
        %v146 = vld [vmem:[%s38 + $0xd8] sm:%s31]
        %147 = vst [vmem:[%s39 + $0xd4] sm:%s31] %v146
        %v148 = vld [vmem:[%s38 + $0xcc] sm:%s31]
        %149 = vst [vmem:[%s39 + $0xd8] sm:%s31] %v148
        %v150 = vld [vmem:[%s38 + $0xdc] sm:%s31]
        %151 = vst [vmem:[%s39 + $0xdc] sm:%s31] %v150
        %v152 = vld [vmem:[%s38 + $0xe0] sm:%s31]
        %153 = vst [vmem:[%s39 + $0xe0] sm:%s31] %v152
        %v154 = vld [vmem:[%s38 + $0xf0] sm:%s31]
        %155 = vst [vmem:[%s39 + $0xe4] sm:%s31] %v154
        %v156 = vld [vmem:[%s38 + $0xe4] sm:%s31]
        %157 = vst [vmem:[%s39 + $0xe8] sm:%s31] %v156
        %v158 = vld [vmem:[%s38 + $0xf4] sm:%s31]
        %159 = vst [vmem:[%s39 + $0xec] sm:%s31] %v158
        %v160 = vld [vmem:[%s38 + $0xe8] sm:%s31]
        %161 = vst [vmem:[%s39 + $0xf0] sm:%s31] %v160
        %v162 = vld [vmem:[%s38 + $0xf8] sm:%s31]
        %163 = vst [vmem:[%s39 + $0xf4] sm:%s31] %v162
        %v164 = vld [vmem:[%s38 + $0xec] sm:%s31]
        %165 = vst [vmem:[%s39 + $0xf8] sm:%s31] %v164
        %v166 = vld [vmem:[%s38 + $0xfc] sm:%s31]
        %167 = vst [vmem:[%s39 + $0xfc] sm:%s31] %v166
      $region30: #{rnn_model_forward.6} parent=24 // loop_footer
        %s37 = sadd.s32 1, %s33
      $region31: #{rnn_model_forward.6} parent=24 // loop_footer_branch
        %32 = sbr.rel target = $region27
      $region32: #{rnn_model_forward.6} parent=24 // loop_exit
        _
    $region25: #{rnn_model_forward.6} parent=16 // pred_fallthru
      _
    // Predicated region
    $region51: #{rnn_model_forward.6} parent=16 // pred_check
      _
    $region52: #{rnn_model_forward.6} parent=16 // pred_check_branch
      %325 = sbr.rel (0) target = $region54
    $region53: #{rnn_model_forward.6} parent=16 // pred_region
      %326 = vsyncadd [#allocation3], 4096
    $region54: #{rnn_model_forward.6} parent=16 // pred_fallthru
      _
    %s327 = smul.u32 4, 16
    %s328 = smul.u32 %s327, 4
    %s329 = sshll.u32 %s328, 4
    %330 = dma.done [#allocation3], %s329
    %v331 = vld [vmem:[%s1] sm:$0xff]
    %332 = vst [vmem:[%s5] sm:$0xff] %v331
    %v333 = vld [vmem:[%s2] sm:$0xff]
    %334 = vst [vmem:[%s6] sm:$0xff] %v333
  $region17: #{rnn_model_forward.6} parent=0 // pred_fallthru
    _
  %v335 = vld [vmem:[#allocation2] sm:$0xff]
  %v336 = vld [vmem:[#allocation2 + $0x8] sm:$0xff]
  %v337 = vld [vmem:[#allocation2 + $0x10] sm:$0xff]
  %v338 = vld [vmem:[#allocation2 + $0x18] sm:$0xff]
  %v339 = vld [vmem:[#allocation2 + $0x20] sm:$0xff]
  %v340 = vld [vmem:[#allocation2 + $0x28] sm:$0xff]
  %v341 = vld [vmem:[#allocation2 + $0x30] sm:$0xff]
  %v342 = vld [vmem:[#allocation2 + $0x38] sm:$0xff]
  %v343 = vld [vmem:[#allocation2 + $0x40] sm:$0xff]
  %v344 = vld [vmem:[#allocation2 + $0x48] sm:$0xff]
  %v345 = vld [vmem:[#allocation2 + $0x50] sm:$0xff]
  %v346 = vld [vmem:[#allocation2 + $0x58] sm:$0xff]
  %v347 = vld [vmem:[#allocation2 + $0x60] sm:$0xff]
  %v348 = vld [vmem:[#allocation2 + $0x68] sm:$0xff]
  %v349 = vld [vmem:[#allocation2 + $0x70] sm:$0xff]
  %v350 = vld [vmem:[#allocation2 + $0x78] sm:$0xff]
  %v351 = vld [vmem:[#allocation2 + $0x80] sm:$0xff]
  %v352 = vld [vmem:[#allocation2 + $0x88] sm:$0xff]
  %v353 = vld [vmem:[#allocation2 + $0x90] sm:$0xff]
  %v354 = vld [vmem:[#allocation2 + $0x98] sm:$0xff]
  %v355 = vld [vmem:[#allocation2 + $0xa0] sm:$0xff]
  %v356 = vld [vmem:[#allocation2 + $0xa8] sm:$0xff]
  %v357 = vld [vmem:[#allocation2 + $0xb0] sm:$0xff]
  %v358 = vld [vmem:[#allocation2 + $0xb8] sm:$0xff]
  %v359 = vld [vmem:[#allocation2 + $0xc0] sm:$0xff]
  %v360 = vld [vmem:[#allocation2 + $0xc8] sm:$0xff]
  %v361 = vld [vmem:[#allocation2 + $0xd0] sm:$0xff]
  %v362 = vld [vmem:[#allocation2 + $0xd8] sm:$0xff]
  %v363 = vld [vmem:[#allocation2 + $0xe0] sm:$0xff]
  %v364 = vld [vmem:[#allocation2 + $0xe8] sm:$0xff]
  %v365 = vld [vmem:[#allocation2 + $0xf0] sm:$0xff]
  %v366 = vld [vmem:[#allocation2 + $0xf8] sm:$0xff]
  %v367 = vld [vmem:[%s5] sm:$0xff]
  %v368 = vld [vmem:[%s6] sm:$0xff]
  %v369 = vld [vmem:[%s0] sm:$0xff]
  %v370 = vld [vmem:[%s0 + $0x8] sm:$0xff]
  %v371 = vunpack.c.l.bf16 %v369
  %v372 = vunpack.c.h.bf16 %v369
  %v373 = vunpack.c.l.bf16 %v370
  %v374 = vunpack.c.h.bf16 %v370
  %v375 = vpack.c.bf16 %v367, %v367
  %376 = vmatprep.subr.bf16.mxu0 %v336
  %377 = vmatpush1.bf16.msra.mxu0 %v335
  %378 = vmatprep.subr.bf16.mxu0 %v340
  %379 = vmatpush1.bf16.msra.mxu0 %v339
  %380 = vmatprep.subr.bf16.mxu0 %v344
  %381 = vmatpush1.bf16.msra.mxu0 %v343
  %382 = vmatprep.subr.bf16.mxu0 %v348
  %383 = vmatpush1.bf16.msra.mxu0 %v347
  %384 = vmatprep.subr.bf16.mxu0 %v352
  %385 = vmatpush1.bf16.msra.mxu0 %v351
  %386 = vmatprep.subr.bf16.mxu0 %v356
  %387 = vmatpush1.bf16.msra.mxu0 %v355
  %388 = vmatprep.subr.bf16.mxu0 %v360
  %389 = vmatpush1.bf16.msra.mxu0 %v359
  %390 = vmatprep.subr.bf16.mxu0 %v364
  %391 = vmatpush1.bf16.msra.mxu0 %v363
  %392 = vmatprep.subr.bf16.mxu0 0
  %393 = vmatpush1.bf16.msra.mxu0 0
  %394 = vmatprep.subr.bf16.mxu0 0
  %395 = vmatpush1.bf16.msra.mxu0 0
  %396 = vmatprep.subr.bf16.mxu0 0
  %397 = vmatpush1.bf16.msra.mxu0 0
  %398 = vmatprep.subr.bf16.mxu0 0
  %399 = vmatpush1.bf16.msra.mxu0 0
  %400 = vmatprep.subr.bf16.mxu0 0
  %401 = vmatpush1.bf16.msra.mxu0 0
  %402 = vmatprep.subr.bf16.mxu0 0
  %403 = vmatpush1.bf16.msra.mxu0 0
  %404 = vmatprep.subr.bf16.mxu0 0
  %405 = vmatpush1.bf16.msra.mxu0 0
  %406 = vmatprep.subr.bf16.mxu0 0
  %407 = vmatpush1.bf16.msra.mxu0 0
  %408 = vmatprep.mubr.bf16.mxu0 0
  %409 = vmatmul.mubr.bf16.gmra.mrb[0].mxu0 %v375
  %v410 = vpop.f32.mrb[0].mxu0
  %v411 = vadd.f32 0.0, %v410
  %v412 = vpop.f32.mrb[0].mxu0
  %v413 = vadd.f32 0.0, %v412
  %v414 = vpop.f32.mrb[0].mxu0
  %v415 = vpop.f32.mrb[0].mxu0
  %416 = vdwg.mxu0
  %417 = vmatprep.subr.bf16.mxu0 %v338
  %418 = vmatpush1.bf16.msra.mxu0 %v337
  %419 = vmatprep.subr.bf16.mxu0 %v342
  %420 = vmatpush1.bf16.msra.mxu0 %v341
  %421 = vmatprep.subr.bf16.mxu0 %v346
  %422 = vmatpush1.bf16.msra.mxu0 %v345
  %423 = vmatprep.subr.bf16.mxu0 %v350
  %424 = vmatpush1.bf16.msra.mxu0 %v349
  %425 = vmatprep.subr.bf16.mxu0 %v354
  %426 = vmatpush1.bf16.msra.mxu0 %v353
  %427 = vmatprep.subr.bf16.mxu0 %v358
  %428 = vmatpush1.bf16.msra.mxu0 %v357
  %429 = vmatprep.subr.bf16.mxu0 %v362
  %430 = vmatpush1.bf16.msra.mxu0 %v361
  %431 = vmatprep.subr.bf16.mxu0 %v366
  %432 = vmatpush1.bf16.msra.mxu0 %v365
  %433 = vmatprep.subr.bf16.mxu0 0
  %434 = vmatpush1.bf16.msra.mxu0 0
  %435 = vmatprep.subr.bf16.mxu0 0
  %436 = vmatpush1.bf16.msra.mxu0 0
  %437 = vmatprep.subr.bf16.mxu0 0
  %438 = vmatpush1.bf16.msra.mxu0 0
  %439 = vmatprep.subr.bf16.mxu0 0
  %440 = vmatpush1.bf16.msra.mxu0 0
  %441 = vmatprep.subr.bf16.mxu0 0
  %442 = vmatpush1.bf16.msra.mxu0 0
  %443 = vmatprep.subr.bf16.mxu0 0
  %444 = vmatpush1.bf16.msra.mxu0 0
  %445 = vmatprep.subr.bf16.mxu0 0
  %446 = vmatpush1.bf16.msra.mxu0 0
  %447 = vmatprep.subr.bf16.mxu0 0
  %448 = vmatpush1.bf16.msra.mxu0 0
  %449 = vmatprep.mubr.bf16.mxu0 0
  %450 = vmatmul.mubr.bf16.gmra.mrb[0].mxu0 %v375
  %v451 = vpop.f32.mrb[0].mxu0
  %v452 = vadd.f32 0.0, %v451
  %v453 = vpop.f32.mrb[0].mxu0
  %v454 = vadd.f32 0.0, %v453
  %v455 = vpop.f32.mrb[0].mxu0
  %v456 = vpop.f32.mrb[0].mxu0
  %457 = vdwg.mxu0
  %v458 = vadd.f32 %v371, %v411
  %v459 = vadd.f32 %v372, %v413
  %v460 = vadd.f32 %v373, %v452
  %v461 = vadd.f32 %v374, %v454
  %v462 = vxor.u32 %v458, 2147483648
  %v463 = vmul.f32 %v462, 1.442695
  %v464 = vpow.pop %v463
  %v465 = vadd.f32 %v464, 1.0
  %v466 = vrcp.pop %v465
  %v467 = vmul.f32 1.0, %v466
  %v468 = vxor.u32 %v459, 2147483648
  %v469 = vmul.f32 %v468, 1.442695
  %v470 = vpow.pop %v469
  %v471 = vadd.f32 %v470, 1.0
  %v472 = vrcp.pop %v471
  %v473 = vmul.f32 1.0, %v472
  %v474 = vtanh.pop %v460
  %v475 = vxor.u32 %v461, 2147483648
  %v476 = vmul.f32 %v475, 1.442695
  %v477 = vpow.pop %v476
  %v478 = vadd.f32 %v477, 1.0
  %v479 = vrcp.pop %v478
  %v480 = vmul.f32 1.0, %v479
  %v481 = vmul.f32 %v473, %v368
  %v482 = vmul.f32 %v467, %v474
  %v483 = vadd.f32 %v481, %v482
  %v484 = vtanh.pop %v483
  %v485 = vmul.f32 %v480, %v484
  %v486 = vpack.c.bf16 %v485, %v485
  %487 = vst [vmem:[%s4] sm:$0xf] %v486
  %s488 = scalar_lea.vmem %s0, 16
  %v489 = vld [vmem:[%s488] sm:$0xff]
  %v490 = vld [vmem:[%s488 + $0x8] sm:$0xff]
  %v491 = vunpack.c.l.bf16 %v489
  %v492 = vunpack.c.h.bf16 %v489
  %v493 = vunpack.c.l.bf16 %v490
  %v494 = vunpack.c.h.bf16 %v490
  %495 = vmatprep.subr.bf16.mxu0 %v336
  %496 = vmatpush1.bf16.msra.mxu0 %v335
  %497 = vmatprep.subr.bf16.mxu0 %v340
  %498 = vmatpush1.bf16.msra.mxu0 %v339
  %499 = vmatprep.subr.bf16.mxu0 %v344
  %500 = vmatpush1.bf16.msra.mxu0 %v343
  %501 = vmatprep.subr.bf16.mxu0 %v348
  %502 = vmatpush1.bf16.msra.mxu0 %v347
  %503 = vmatprep.subr.bf16.mxu0 %v352
  %504 = vmatpush1.bf16.msra.mxu0 %v351
  %505 = vmatprep.subr.bf16.mxu0 %v356
  %506 = vmatpush1.bf16.msra.mxu0 %v355
  %507 = vmatprep.subr.bf16.mxu0 %v360
  %508 = vmatpush1.bf16.msra.mxu0 %v359
  %509 = vmatprep.subr.bf16.mxu0 %v364
  %510 = vmatpush1.bf16.msra.mxu0 %v363
  %511 = vmatprep.subr.bf16.mxu0 0
  %512 = vmatpush1.bf16.msra.mxu0 0
  %513 = vmatprep.subr.bf16.mxu0 0
  %514 = vmatpush1.bf16.msra.mxu0 0
  %515 = vmatprep.subr.bf16.mxu0 0
  %516 = vmatpush1.bf16.msra.mxu0 0
  %517 = vmatprep.subr.bf16.mxu0 0
  %518 = vmatpush1.bf16.msra.mxu0 0
  %519 = vmatprep.subr.bf16.mxu0 0
  %520 = vmatpush1.bf16.msra.mxu0 0
  %521 = vmatprep.subr.bf16.mxu0 0
  %522 = vmatpush1.bf16.msra.mxu0 0
  %523 = vmatprep.subr.bf16.mxu0 0
  %524 = vmatpush1.bf16.msra.mxu0 0
  %525 = vmatprep.subr.bf16.mxu0 0
  %526 = vmatpush1.bf16.msra.mxu0 0
  %527 = vmatprep.mubr.bf16.mxu0 0
  %528 = vmatmul.mubr.bf16.gmra.mrb[0].mxu0 %v486
  %v529 = vpop.f32.mrb[0].mxu0
  %v530 = vadd.f32 0.0, %v529
  %v531 = vpop.f32.mrb[0].mxu0
  %v532 = vadd.f32 0.0, %v531
  %v533 = vpop.f32.mrb[0].mxu0
  %v534 = vpop.f32.mrb[0].mxu0
  %535 = vdwg.mxu0
  %536 = vmatprep.subr.bf16.mxu0 %v338
  %537 = vmatpush1.bf16.msra.mxu0 %v337
  %538 = vmatprep.subr.bf16.mxu0 %v342
  %539 = vmatpush1.bf16.msra.mxu0 %v341
  %540 = vmatprep.subr.bf16.mxu0 %v346
  %541 = vmatpush1.bf16.msra.mxu0 %v345
  %542 = vmatprep.subr.bf16.mxu0 %v350
  %543 = vmatpush1.bf16.msra.mxu0 %v349
  %544 = vmatprep.subr.bf16.mxu0 %v354
  %545 = vmatpush1.bf16.msra.mxu0 %v353
  %546 = vmatprep.subr.bf16.mxu0 %v358
  %547 = vmatpush1.bf16.msra.mxu0 %v357
  %548 = vmatprep.subr.bf16.mxu0 %v362
  %549 = vmatpush1.bf16.msra.mxu0 %v361
  %550 = vmatprep.subr.bf16.mxu0 %v366
  %551 = vmatpush1.bf16.msra.mxu0 %v365
  %552 = vmatprep.subr.bf16.mxu0 0
  %553 = vmatpush1.bf16.msra.mxu0 0
  %554 = vmatprep.subr.bf16.mxu0 0
  %555 = vmatpush1.bf16.msra.mxu0 0
  %556 = vmatprep.subr.bf16.mxu0 0
  %557 = vmatpush1.bf16.msra.mxu0 0
  %558 = vmatprep.subr.bf16.mxu0 0
  %559 = vmatpush1.bf16.msra.mxu0 0
  %560 = vmatprep.subr.bf16.mxu0 0
  %561 = vmatpush1.bf16.msra.mxu0 0
  %562 = vmatprep.subr.bf16.mxu0 0
  %563 = vmatpush1.bf16.msra.mxu0 0
  %564 = vmatprep.subr.bf16.mxu0 0
  %565 = vmatpush1.bf16.msra.mxu0 0
  %566 = vmatprep.subr.bf16.mxu0 0
  %567 = vmatpush1.bf16.msra.mxu0 0
  %568 = vmatprep.mubr.bf16.mxu0 0
  %569 = vmatmul.mubr.bf16.gmra.mrb[0].mxu0 %v486
  %v570 = vpop.f32.mrb[0].mxu0
  %v571 = vadd.f32 0.0, %v570
  %v572 = vpop.f32.mrb[0].mxu0
  %v573 = vadd.f32 0.0, %v572
  %v574 = vpop.f32.mrb[0].mxu0
  %v575 = vpop.f32.mrb[0].mxu0
  %576 = vdwg.mxu0
  %v577 = vadd.f32 %v491, %v530
  %v578 = vadd.f32 %v492, %v532
  %v579 = vadd.f32 %v493, %v571
  %v580 = vadd.f32 %v494, %v573
  %v581 = vxor.u32 %v577, 2147483648
  %v582 = vmul.f32 %v581, 1.442695
  %v583 = vpow.pop %v582
  %v584 = vadd.f32 %v583, 1.0
  %v585 = vrcp.pop %v584
  %v586 = vmul.f32 1.0, %v585
  %v587 = vxor.u32 %v578, 2147483648
  %v588 = vmul.f32 %v587, 1.442695
  %v589 = vpow.pop %v588
  %v590 = vadd.f32 %v589, 1.0
  %v591 = vrcp.pop %v590
  %v592 = vmul.f32 1.0, %v591
  %v593 = vtanh.pop %v579
  %v594 = vxor.u32 %v580, 2147483648
  %v595 = vmul.f32 %v594, 1.442695
  %v596 = vpow.pop %v595
  %v597 = vadd.f32 %v596, 1.0
  %v598 = vrcp.pop %v597
  %v599 = vmul.f32 1.0, %v598
  %v600 = vmul.f32 %v592, %v483
  %v601 = vmul.f32 %v586, %v593
  %v602 = vadd.f32 %v600, %v601
  %v603 = vtanh.pop %v602
  %v604 = vmul.f32 %v599, %v603
  %v605 = vpack.c.bf16 %v604, %v604
  %s606 = scalar_lea.vmem %s4, 4
  %607 = vst [vmem:[%s606] sm:$0xf] %v605
  %s608 = scalar_lea.vmem %s0, 32
  %v609 = vld [vmem:[%s608] sm:$0xff]
  %v610 = vld [vmem:[%s608 + $0x8] sm:$0xff]
  %v611 = vunpack.c.l.bf16 %v609
  %v612 = vunpack.c.h.bf16 %v609
  %v613 = vunpack.c.l.bf16 %v610
  %v614 = vunpack.c.h.bf16 %v610
  %615 = vmatprep.subr.bf16.mxu0 %v336
  %616 = vmatpush1.bf16.msra.mxu0 %v335
  %617 = vmatprep.subr.bf16.mxu0 %v340
  %618 = vmatpush1.bf16.msra.mxu0 %v339
  %619 = vmatprep.subr.bf16.mxu0 %v344
  %620 = vmatpush1.bf16.msra.mxu0 %v343
  %621 = vmatprep.subr.bf16.mxu0 %v348
  %622 = vmatpush1.bf16.msra.mxu0 %v347
  %623 = vmatprep.subr.bf16.mxu0 %v352
  %624 = vmatpush1.bf16.msra.mxu0 %v351
  %625 = vmatprep.subr.bf16.mxu0 %v356
  %626 = vmatpush1.bf16.msra.mxu0 %v355
  %627 = vmatprep.subr.bf16.mxu0 %v360
  %628 = vmatpush1.bf16.msra.mxu0 %v359
  %629 = vmatprep.subr.bf16.mxu0 %v364
  %630 = vmatpush1.bf16.msra.mxu0 %v363
  %631 = vmatprep.subr.bf16.mxu0 0
  %632 = vmatpush1.bf16.msra.mxu0 0
  %633 = vmatprep.subr.bf16.mxu0 0
  %634 = vmatpush1.bf16.msra.mxu0 0
  %635 = vmatprep.subr.bf16.mxu0 0
  %636 = vmatpush1.bf16.msra.mxu0 0
  %637 = vmatprep.subr.bf16.mxu0 0
  %638 = vmatpush1.bf16.msra.mxu0 0
  %639 = vmatprep.subr.bf16.mxu0 0
  %640 = vmatpush1.bf16.msra.mxu0 0
  %641 = vmatprep.subr.bf16.mxu0 0
  %642 = vmatpush1.bf16.msra.mxu0 0
  %643 = vmatprep.subr.bf16.mxu0 0
  %644 = vmatpush1.bf16.msra.mxu0 0
  %645 = vmatprep.subr.bf16.mxu0 0
  %646 = vmatpush1.bf16.msra.mxu0 0
  %647 = vmatprep.mubr.bf16.mxu0 0
  %648 = vmatmul.mubr.bf16.gmra.mrb[0].mxu0 %v605
  %v649 = vpop.f32.mrb[0].mxu0
  %v650 = vadd.f32 0.0, %v649
  %v651 = vpop.f32.mrb[0].mxu0
  %v652 = vadd.f32 0.0, %v651
  %v653 = vpop.f32.mrb[0].mxu0
  %v654 = vpop.f32.mrb[0].mxu0
  %655 = vdwg.mxu0
  %656 = vmatprep.subr.bf16.mxu0 %v338
  %657 = vmatpush1.bf16.msra.mxu0 %v337
  %658 = vmatprep.subr.bf16.mxu0 %v342
  %659 = vmatpush1.bf16.msra.mxu0 %v341
  %660 = vmatprep.subr.bf16.mxu0 %v346
  %661 = vmatpush1.bf16.msra.mxu0 %v345
  %662 = vmatprep.subr.bf16.mxu0 %v350
  %663 = vmatpush1.bf16.msra.mxu0 %v349
  %664 = vmatprep.subr.bf16.mxu0 %v354
  %665 = vmatpush1.bf16.msra.mxu0 %v353
  %666 = vmatprep.subr.bf16.mxu0 %v358
  %667 = vmatpush1.bf16.msra.mxu0 %v357
  %668 = vmatprep.subr.bf16.mxu0 %v362
  %669 = vmatpush1.bf16.msra.mxu0 %v361
  %670 = vmatprep.subr.bf16.mxu0 %v366
  %671 = vmatpush1.bf16.msra.mxu0 %v365
  %672 = vmatprep.subr.bf16.mxu0 0
  %673 = vmatpush1.bf16.msra.mxu0 0
  %674 = vmatprep.subr.bf16.mxu0 0
  %675 = vmatpush1.bf16.msra.mxu0 0
  %676 = vmatprep.subr.bf16.mxu0 0
  %677 = vmatpush1.bf16.msra.mxu0 0
  %678 = vmatprep.subr.bf16.mxu0 0
  %679 = vmatpush1.bf16.msra.mxu0 0
  %680 = vmatprep.subr.bf16.mxu0 0
  %681 = vmatpush1.bf16.msra.mxu0 0
  %682 = vmatprep.subr.bf16.mxu0 0
  %683 = vmatpush1.bf16.msra.mxu0 0
  %684 = vmatprep.subr.bf16.mxu0 0
  %685 = vmatpush1.bf16.msra.mxu0 0
  %686 = vmatprep.subr.bf16.mxu0 0
  %687 = vmatpush1.bf16.msra.mxu0 0
  %688 = vmatprep.mubr.bf16.mxu0 0
  %689 = vmatmul.mubr.bf16.gmra.mrb[0].mxu0 %v605
  %v690 = vpop.f32.mrb[0].mxu0
  %v691 = vadd.f32 0.0, %v690
  %v692 = vpop.f32.mrb[0].mxu0
  %v693 = vadd.f32 0.0, %v692
  %v694 = vpop.f32.mrb[0].mxu0
  %v695 = vpop.f32.mrb[0].mxu0
  %696 = vdwg.mxu0
  %v697 = vadd.f32 %v611, %v650
  %v698 = vadd.f32 %v612, %v652
  %v699 = vadd.f32 %v613, %v691
  %v700 = vadd.f32 %v614, %v693
  %v701 = vxor.u32 %v697, 2147483648
  %v702 = vmul.f32 %v701, 1.442695
  %v703 = vpow.pop %v702
  %v704 = vadd.f32 %v703, 1.0
  %v705 = vrcp.pop %v704
  %v706 = vmul.f32 1.0, %v705
  %v707 = vxor.u32 %v698, 2147483648
  %v708 = vmul.f32 %v707, 1.442695
  %v709 = vpow.pop %v708
  %v710 = vadd.f32 %v709, 1.0
  %v711 = vrcp.pop %v710
  %v712 = vmul.f32 1.0, %v711
  %v713 = vtanh.pop %v699
  %v714 = vxor.u32 %v700, 2147483648
  %v715 = vmul.f32 %v714, 1.442695
  %v716 = vpow.pop %v715
  %v717 = vadd.f32 %v716, 1.0
  %v718 = vrcp.pop %v717
  %v719 = vmul.f32 1.0, %v718
  %v720 = vmul.f32 %v712, %v602
  %v721 = vmul.f32 %v706, %v713
  %v722 = vadd.f32 %v720, %v721
  %v723 = vtanh.pop %v722
  %v724 = vmul.f32 %v719, %v723
  %v725 = vpack.c.bf16 %v724, %v724
  %s726 = scalar_lea.vmem %s4, 8
  %727 = vst [vmem:[%s726] sm:$0xf] %v725
  %s728 = scalar_lea.vmem %s0, 48
  %v729 = vld [vmem:[%s728] sm:$0xff]
  %v730 = vld [vmem:[%s728 + $0x8] sm:$0xff]
  %v731 = vunpack.c.l.bf16 %v729
  %v732 = vunpack.c.h.bf16 %v729
  %v733 = vunpack.c.l.bf16 %v730
  %v734 = vunpack.c.h.bf16 %v730
  %735 = vmatprep.subr.bf16.mxu0 %v336
  %736 = vmatpush1.bf16.msra.mxu0 %v335
  %737 = vmatprep.subr.bf16.mxu0 %v340
  %738 = vmatpush1.bf16.msra.mxu0 %v339
  %739 = vmatprep.subr.bf16.mxu0 %v344
  %740 = vmatpush1.bf16.msra.mxu0 %v343
  %741 = vmatprep.subr.bf16.mxu0 %v348
  %742 = vmatpush1.bf16.msra.mxu0 %v347
  %743 = vmatprep.subr.bf16.mxu0 %v352
  %744 = vmatpush1.bf16.msra.mxu0 %v351
  %745 = vmatprep.subr.bf16.mxu0 %v356
  %746 = vmatpush1.bf16.msra.mxu0 %v355
  %747 = vmatprep.subr.bf16.mxu0 %v360
  %748 = vmatpush1.bf16.msra.mxu0 %v359
  %749 = vmatprep.subr.bf16.mxu0 %v364
  %750 = vmatpush1.bf16.msra.mxu0 %v363
  %751 = vmatprep.subr.bf16.mxu0 0
  %752 = vmatpush1.bf16.msra.mxu0 0
  %753 = vmatprep.subr.bf16.mxu0 0
  %754 = vmatpush1.bf16.msra.mxu0 0
  %755 = vmatprep.subr.bf16.mxu0 0
  %756 = vmatpush1.bf16.msra.mxu0 0
  %757 = vmatprep.subr.bf16.mxu0 0
  %758 = vmatpush1.bf16.msra.mxu0 0
  %759 = vmatprep.subr.bf16.mxu0 0
  %760 = vmatpush1.bf16.msra.mxu0 0
  %761 = vmatprep.subr.bf16.mxu0 0
  %762 = vmatpush1.bf16.msra.mxu0 0
  %763 = vmatprep.subr.bf16.mxu0 0
  %764 = vmatpush1.bf16.msra.mxu0 0
  %765 = vmatprep.subr.bf16.mxu0 0
  %766 = vmatpush1.bf16.msra.mxu0 0
  %767 = vmatprep.mubr.bf16.mxu0 0
  %768 = vmatmul.mubr.bf16.gmra.mrb[0].mxu0 %v725
  %v769 = vpop.f32.mrb[0].mxu0
  %v770 = vadd.f32 0.0, %v769
  %v771 = vpop.f32.mrb[0].mxu0
  %v772 = vadd.f32 0.0, %v771
  %v773 = vpop.f32.mrb[0].mxu0
  %v774 = vpop.f32.mrb[0].mxu0
  %775 = vdwg.mxu0
  %776 = vmatprep.subr.bf16.mxu0 %v338
  %777 = vmatpush1.bf16.msra.mxu0 %v337
  %778 = vmatprep.subr.bf16.mxu0 %v342
  %779 = vmatpush1.bf16.msra.mxu0 %v341
  %780 = vmatprep.subr.bf16.mxu0 %v346
  %781 = vmatpush1.bf16.msra.mxu0 %v345
  %782 = vmatprep.subr.bf16.mxu0 %v350
  %783 = vmatpush1.bf16.msra.mxu0 %v349
  %784 = vmatprep.subr.bf16.mxu0 %v354
  %785 = vmatpush1.bf16.msra.mxu0 %v353
  %786 = vmatprep.subr.bf16.mxu0 %v358
  %787 = vmatpush1.bf16.msra.mxu0 %v357
  %788 = vmatprep.subr.bf16.mxu0 %v362
  %789 = vmatpush1.bf16.msra.mxu0 %v361
  %790 = vmatprep.subr.bf16.mxu0 %v366
  %791 = vmatpush1.bf16.msra.mxu0 %v365
  %792 = vmatprep.subr.bf16.mxu0 0
  %793 = vmatpush1.bf16.msra.mxu0 0
  %794 = vmatprep.subr.bf16.mxu0 0
  %795 = vmatpush1.bf16.msra.mxu0 0
  %796 = vmatprep.subr.bf16.mxu0 0
  %797 = vmatpush1.bf16.msra.mxu0 0
  %798 = vmatprep.subr.bf16.mxu0 0
  %799 = vmatpush1.bf16.msra.mxu0 0
  %800 = vmatprep.subr.bf16.mxu0 0
  %801 = vmatpush1.bf16.msra.mxu0 0
  %802 = vmatprep.subr.bf16.mxu0 0
  %803 = vmatpush1.bf16.msra.mxu0 0
  %804 = vmatprep.subr.bf16.mxu0 0
  %805 = vmatpush1.bf16.msra.mxu0 0
  %806 = vmatprep.subr.bf16.mxu0 0
  %807 = vmatpush1.bf16.msra.mxu0 0
  %808 = vmatprep.mubr.bf16.mxu0 0
  %809 = vmatmul.mubr.bf16.gmra.mrb[0].mxu0 %v725
  %v810 = vpop.f32.mrb[0].mxu0
  %v811 = vadd.f32 0.0, %v810
  %v812 = vpop.f32.mrb[0].mxu0
  %v813 = vadd.f32 0.0, %v812
  %v814 = vpop.f32.mrb[0].mxu0
  %v815 = vpop.f32.mrb[0].mxu0
  %816 = vdwg.mxu0
  %v817 = vadd.f32 %v731, %v770
  %v818 = vadd.f32 %v732, %v772
  %v819 = vadd.f32 %v733, %v811
  %v820 = vadd.f32 %v734, %v813
  %v821 = vxor.u32 %v817, 2147483648
  %v822 = vmul.f32 %v821, 1.442695
  %v823 = vpow.pop %v822
  %v824 = vadd.f32 %v823, 1.0
  %v825 = vrcp.pop %v824
  %v826 = vmul.f32 1.0, %v825
  %v827 = vxor.u32 %v818, 2147483648
  %v828 = vmul.f32 %v827, 1.442695
  %v829 = vpow.pop %v828
  %v830 = vadd.f32 %v829, 1.0
  %v831 = vrcp.pop %v830
  %v832 = vmul.f32 1.0, %v831
  %v833 = vtanh.pop %v819
  %v834 = vxor.u32 %v820, 2147483648
  %v835 = vmul.f32 %v834, 1.442695
  %v836 = vpow.pop %v835
  %v837 = vadd.f32 %v836, 1.0
  %v838 = vrcp.pop %v837
  %v839 = vmul.f32 1.0, %v838
  %v840 = vmul.f32 %v832, %v722
  %v841 = vmul.f32 %v826, %v833
  %v842 = vadd.f32 %v840, %v841
  %v843 = vtanh.pop %v842
  %v844 = vmul.f32 %v839, %v843
  %v845 = vpack.c.bf16 %v844, %v844
  %s846 = scalar_lea.vmem %s4, 12
  %847 = vst [vmem:[%s846] sm:$0xf] %v845
  %s848 = scalar_lea.vmem %s0, 64
  %v849 = vld [vmem:[%s848] sm:$0xff]
  %v850 = vld [vmem:[%s848 + $0x8] sm:$0xff]
  %v851 = vunpack.c.l.bf16 %v849
  %v852 = vunpack.c.h.bf16 %v849
  %v853 = vunpack.c.l.bf16 %v850
  %v854 = vunpack.c.h.bf16 %v850
  %855 = vmatprep.subr.bf16.mxu0 %v336
  %856 = vmatpush1.bf16.msra.mxu0 %v335
  %857 = vmatprep.subr.bf16.mxu0 %v340
  %858 = vmatpush1.bf16.msra.mxu0 %v339
  %859 = vmatprep.subr.bf16.mxu0 %v344
  %860 = vmatpush1.bf16.msra.mxu0 %v343
  %861 = vmatprep.subr.bf16.mxu0 %v348
  %862 = vmatpush1.bf16.msra.mxu0 %v347
  %863 = vmatprep.subr.bf16.mxu0 %v352
  %864 = vmatpush1.bf16.msra.mxu0 %v351
  %865 = vmatprep.subr.bf16.mxu0 %v356
  %866 = vmatpush1.bf16.msra.mxu0 %v355
  %867 = vmatprep.subr.bf16.mxu0 %v360
  %868 = vmatpush1.bf16.msra.mxu0 %v359
  %869 = vmatprep.subr.bf16.mxu0 %v364
  %870 = vmatpush1.bf16.msra.mxu0 %v363
  %871 = vmatprep.subr.bf16.mxu0 0
  %872 = vmatpush1.bf16.msra.mxu0 0
  %873 = vmatprep.subr.bf16.mxu0 0
  %874 = vmatpush1.bf16.msra.mxu0 0
  %875 = vmatprep.subr.bf16.mxu0 0
  %876 = vmatpush1.bf16.msra.mxu0 0
  %877 = vmatprep.subr.bf16.mxu0 0
  %878 = vmatpush1.bf16.msra.mxu0 0
  %879 = vmatprep.subr.bf16.mxu0 0
  %880 = vmatpush1.bf16.msra.mxu0 0
  %881 = vmatprep.subr.bf16.mxu0 0
  %882 = vmatpush1.bf16.msra.mxu0 0
  %883 = vmatprep.subr.bf16.mxu0 0
  %884 = vmatpush1.bf16.msra.mxu0 0
  %885 = vmatprep.subr.bf16.mxu0 0
  %886 = vmatpush1.bf16.msra.mxu0 0
  %887 = vmatprep.mubr.bf16.mxu0 0
  %888 = vmatmul.mubr.bf16.gmra.mrb[0].mxu0 %v845
  %v889 = vpop.f32.mrb[0].mxu0
  %v890 = vadd.f32 0.0, %v889
  %v891 = vpop.f32.mrb[0].mxu0
  %v892 = vadd.f32 0.0, %v891
  %v893 = vpop.f32.mrb[0].mxu0
  %v894 = vpop.f32.mrb[0].mxu0
  %895 = vdwg.mxu0
  %896 = vmatprep.subr.bf16.mxu0 %v338
  %897 = vmatpush1.bf16.msra.mxu0 %v337
  %898 = vmatprep.subr.bf16.mxu0 %v342
  %899 = vmatpush1.bf16.msra.mxu0 %v341
  %900 = vmatprep.subr.bf16.mxu0 %v346
  %901 = vmatpush1.bf16.msra.mxu0 %v345
  %902 = vmatprep.subr.bf16.mxu0 %v350
  %903 = vmatpush1.bf16.msra.mxu0 %v349
  %904 = vmatprep.subr.bf16.mxu0 %v354
  %905 = vmatpush1.bf16.msra.mxu0 %v353
  %906 = vmatprep.subr.bf16.mxu0 %v358
  %907 = vmatpush1.bf16.msra.mxu0 %v357
  %908 = vmatprep.subr.bf16.mxu0 %v362
  %909 = vmatpush1.bf16.msra.mxu0 %v361
  %910 = vmatprep.subr.bf16.mxu0 %v366
  %911 = vmatpush1.bf16.msra.mxu0 %v365
  %912 = vmatprep.subr.bf16.mxu0 0
  %913 = vmatpush1.bf16.msra.mxu0 0
  %914 = vmatprep.subr.bf16.mxu0 0
  %915 = vmatpush1.bf16.msra.mxu0 0
  %916 = vmatprep.subr.bf16.mxu0 0
  %917 = vmatpush1.bf16.msra.mxu0 0
  %918 = vmatprep.subr.bf16.mxu0 0
  %919 = vmatpush1.bf16.msra.mxu0 0
  %920 = vmatprep.subr.bf16.mxu0 0
  %921 = vmatpush1.bf16.msra.mxu0 0
  %922 = vmatprep.subr.bf16.mxu0 0
  %923 = vmatpush1.bf16.msra.mxu0 0
  %924 = vmatprep.subr.bf16.mxu0 0
  %925 = vmatpush1.bf16.msra.mxu0 0
  %926 = vmatprep.subr.bf16.mxu0 0
  %927 = vmatpush1.bf16.msra.mxu0 0
  %928 = vmatprep.mubr.bf16.mxu0 0
  %929 = vmatmul.mubr.bf16.gmra.mrb[0].mxu0 %v845
  %v930 = vpop.f32.mrb[0].mxu0
  %v931 = vadd.f32 0.0, %v930
  %v932 = vpop.f32.mrb[0].mxu0
  %v933 = vadd.f32 0.0, %v932
  %v934 = vpop.f32.mrb[0].mxu0
  %v935 = vpop.f32.mrb[0].mxu0
  %936 = vdwg.mxu0
  %v937 = vadd.f32 %v851, %v890
  %v938 = vadd.f32 %v852, %v892
  %v939 = vadd.f32 %v853, %v931
  %v940 = vadd.f32 %v854, %v933
  %v941 = vxor.u32 %v937, 2147483648
  %v942 = vmul.f32 %v941, 1.442695
  %v943 = vpow.pop %v942
  %v944 = vadd.f32 %v943, 1.0
  %v945 = vrcp.pop %v944
  %v946 = vmul.f32 1.0, %v945
  %v947 = vxor.u32 %v938, 2147483648
  %v948 = vmul.f32 %v947, 1.442695
  %v949 = vpow.pop %v948
  %v950 = vadd.f32 %v949, 1.0
  %v951 = vrcp.pop %v950
  %v952 = vmul.f32 1.0, %v951
  %v953 = vtanh.pop %v939
  %v954 = vxor.u32 %v940, 2147483648
  %v955 = vmul.f32 %v954, 1.442695
  %v956 = vpow.pop %v955
  %v957 = vadd.f32 %v956, 1.0
  %v958 = vrcp.pop %v957
  %v959 = vmul.f32 1.0, %v958
  %v960 = vmul.f32 %v952, %v842
  %v961 = vmul.f32 %v946, %v953
  %v962 = vadd.f32 %v960, %v961
  %v963 = vtanh.pop %v962
  %v964 = vmul.f32 %v959, %v963
  %v965 = vpack.c.bf16 %v964, %v964
  %s966 = scalar_lea.vmem %s4, 16
  %967 = vst [vmem:[%s966] sm:$0xf] %v965
  %s968 = scalar_lea.vmem %s0, 80
  %v969 = vld [vmem:[%s968] sm:$0xff]
  %v970 = vld [vmem:[%s968 + $0x8] sm:$0xff]
  %v971 = vunpack.c.l.bf16 %v969
  %v972 = vunpack.c.h.bf16 %v969
  %v973 = vunpack.c.l.bf16 %v970
  %v974 = vunpack.c.h.bf16 %v970
  %975 = vmatprep.subr.bf16.mxu0 %v336
  %976 = vmatpush1.bf16.msra.mxu0 %v335
  %977 = vmatprep.subr.bf16.mxu0 %v340
  %978 = vmatpush1.bf16.msra.mxu0 %v339
  %979 = vmatprep.subr.bf16.mxu0 %v344
  %980 = vmatpush1.bf16.msra.mxu0 %v343
  %981 = vmatprep.subr.bf16.mxu0 %v348
  %982 = vmatpush1.bf16.msra.mxu0 %v347
  %983 = vmatprep.subr.bf16.mxu0 %v352
  %984 = vmatpush1.bf16.msra.mxu0 %v351
  %985 = vmatprep.subr.bf16.mxu0 %v356
  %986 = vmatpush1.bf16.msra.mxu0 %v355
  %987 = vmatprep.subr.bf16.mxu0 %v360
  %988 = vmatpush1.bf16.msra.mxu0 %v359
  %989 = vmatprep.subr.bf16.mxu0 %v364
  %990 = vmatpush1.bf16.msra.mxu0 %v363
  %991 = vmatprep.subr.bf16.mxu0 0
  %992 = vmatpush1.bf16.msra.mxu0 0
  %993 = vmatprep.subr.bf16.mxu0 0
  %994 = vmatpush1.bf16.msra.mxu0 0
  %995 = vmatprep.subr.bf16.mxu0 0
  %996 = vmatpush1.bf16.msra.mxu0 0
  %997 = vmatprep.subr.bf16.mxu0 0
  %998 = vmatpush1.bf16.msra.mxu0 0
  %999 = vmatprep.subr.bf16.mxu0 0
  %1000 = vmatpush1.bf16.msra.mxu0 0
  %1001 = vmatprep.subr.bf16.mxu0 0
  %1002 = vmatpush1.bf16.msra.mxu0 0
  %1003 = vmatprep.subr.bf16.mxu0 0
  %1004 = vmatpush1.bf16.msra.mxu0 0
  %1005 = vmatprep.subr.bf16.mxu0 0
  %1006 = vmatpush1.bf16.msra.mxu0 0
  %1007 = vmatprep.mubr.bf16.mxu0 0
  %1008 = vmatmul.mubr.bf16.gmra.mrb[0].mxu0 %v965
  %v1009 = vpop.f32.mrb[0].mxu0
  %v1010 = vadd.f32 0.0, %v1009
  %v1011 = vpop.f32.mrb[0].mxu0
  %v1012 = vadd.f32 0.0, %v1011
  %v1013 = vpop.f32.mrb[0].mxu0
  %v1014 = vpop.f32.mrb[0].mxu0
  %1015 = vdwg.mxu0
  %1016 = vmatprep.subr.bf16.mxu0 %v338
  %1017 = vmatpush1.bf16.msra.mxu0 %v337
  %1018 = vmatprep.subr.bf16.mxu0 %v342
  %1019 = vmatpush1.bf16.msra.mxu0 %v341
  %1020 = vmatprep.subr.bf16.mxu0 %v346
  %1021 = vmatpush1.bf16.msra.mxu0 %v345
  %1022 = vmatprep.subr.bf16.mxu0 %v350
  %1023 = vmatpush1.bf16.msra.mxu0 %v349
  %1024 = vmatprep.subr.bf16.mxu0 %v354
  %1025 = vmatpush1.bf16.msra.mxu0 %v353
  %1026 = vmatprep.subr.bf16.mxu0 %v358
  %1027 = vmatpush1.bf16.msra.mxu0 %v357
  %1028 = vmatprep.subr.bf16.mxu0 %v362
  %1029 = vmatpush1.bf16.msra.mxu0 %v361
  %1030 = vmatprep.subr.bf16.mxu0 %v366
  %1031 = vmatpush1.bf16.msra.mxu0 %v365
  %1032 = vmatprep.subr.bf16.mxu0 0
  %1033 = vmatpush1.bf16.msra.mxu0 0
  %1034 = vmatprep.subr.bf16.mxu0 0
  %1035 = vmatpush1.bf16.msra.mxu0 0
  %1036 = vmatprep.subr.bf16.mxu0 0
  %1037 = vmatpush1.bf16.msra.mxu0 0
  %1038 = vmatprep.subr.bf16.mxu0 0
  %1039 = vmatpush1.bf16.msra.mxu0 0
  %1040 = vmatprep.subr.bf16.mxu0 0
  %1041 = vmatpush1.bf16.msra.mxu0 0
  %1042 = vmatprep.subr.bf16.mxu0 0
  %1043 = vmatpush1.bf16.msra.mxu0 0
  %1044 = vmatprep.subr.bf16.mxu0 0
  %1045 = vmatpush1.bf16.msra.mxu0 0
  %1046 = vmatprep.subr.bf16.mxu0 0
  %1047 = vmatpush1.bf16.msra.mxu0 0
  %1048 = vmatprep.mubr.bf16.mxu0 0
  %1049 = vmatmul.mubr.bf16.gmra.mrb[0].mxu0 %v965
  %v1050 = vpop.f32.mrb[0].mxu0
  %v1051 = vadd.f32 0.0, %v1050
  %v1052 = vpop.f32.mrb[0].mxu0
  %v1053 = vadd.f32 0.0, %v1052
  %v1054 = vpop.f32.mrb[0].mxu0
  %v1055 = vpop.f32.mrb[0].mxu0
  %1056 = vdwg.mxu0
  %v1057 = vadd.f32 %v971, %v1010
  %v1058 = vadd.f32 %v972, %v1012
  %v1059 = vadd.f32 %v973, %v1051
  %v1060 = vadd.f32 %v974, %v1053
  %v1061 = vxor.u32 %v1057, 2147483648
  %v1062 = vmul.f32 %v1061, 1.442695
  %v1063 = vpow.pop %v1062
  %v1064 = vadd.f32 %v1063, 1.0
  %v1065 = vrcp.pop %v1064
  %v1066 = vmul.f32 1.0, %v1065
  %v1067 = vxor.u32 %v1058, 2147483648
  %v1068 = vmul.f32 %v1067, 1.442695
  %v1069 = vpow.pop %v1068
  %v1070 = vadd.f32 %v1069, 1.0
  %v1071 = vrcp.pop %v1070
  %v1072 = vmul.f32 1.0, %v1071
  %v1073 = vtanh.pop %v1059
  %v1074 = vxor.u32 %v1060, 2147483648
  %v1075 = vmul.f32 %v1074, 1.442695
  %v1076 = vpow.pop %v1075
  %v1077 = vadd.f32 %v1076, 1.0
  %v1078 = vrcp.pop %v1077
  %v1079 = vmul.f32 1.0, %v1078
  %v1080 = vmul.f32 %v1072, %v962
  %v1081 = vmul.f32 %v1066, %v1073
  %v1082 = vadd.f32 %v1080, %v1081
  %v1083 = vtanh.pop %v1082
  %v1084 = vmul.f32 %v1079, %v1083
  %v1085 = vpack.c.bf16 %v1084, %v1084
  %s1086 = scalar_lea.vmem %s4, 20
  %1087 = vst [vmem:[%s1086] sm:$0xf] %v1085
  %s1088 = scalar_lea.vmem %s0, 96
  %v1089 = vld [vmem:[%s1088] sm:$0xff]
  %v1090 = vld [vmem:[%s1088 + $0x8] sm:$0xff]
  %v1091 = vunpack.c.l.bf16 %v1089
  %v1092 = vunpack.c.h.bf16 %v1089
  %v1093 = vunpack.c.l.bf16 %v1090
  %v1094 = vunpack.c.h.bf16 %v1090
  %1095 = vmatprep.subr.bf16.mxu0 %v336
  %1096 = vmatpush1.bf16.msra.mxu0 %v335
  %1097 = vmatprep.subr.bf16.mxu0 %v340
  %1098 = vmatpush1.bf16.msra.mxu0 %v339
  %1099 = vmatprep.subr.bf16.mxu0 %v344
  %1100 = vmatpush1.bf16.msra.mxu0 %v343
  %1101 = vmatprep.subr.bf16.mxu0 %v348
  %1102 = vmatpush1.bf16.msra.mxu0 %v347
  %1103 = vmatprep.subr.bf16.mxu0 %v352
  %1104 = vmatpush1.bf16.msra.mxu0 %v351
  %1105 = vmatprep.subr.bf16.mxu0 %v356
  %1106 = vmatpush1.bf16.msra.mxu0 %v355
  %1107 = vmatprep.subr.bf16.mxu0 %v360
  %1108 = vmatpush1.bf16.msra.mxu0 %v359
  %1109 = vmatprep.subr.bf16.mxu0 %v364
  %1110 = vmatpush1.bf16.msra.mxu0 %v363
  %1111 = vmatprep.subr.bf16.mxu0 0
  %1112 = vmatpush1.bf16.msra.mxu0 0
  %1113 = vmatprep.subr.bf16.mxu0 0
  %1114 = vmatpush1.bf16.msra.mxu0 0
  %1115 = vmatprep.subr.bf16.mxu0 0
  %1116 = vmatpush1.bf16.msra.mxu0 0
  %1117 = vmatprep.subr.bf16.mxu0 0
  %1118 = vmatpush1.bf16.msra.mxu0 0
  %1119 = vmatprep.subr.bf16.mxu0 0
  %1120 = vmatpush1.bf16.msra.mxu0 0
  %1121 = vmatprep.subr.bf16.mxu0 0
  %1122 = vmatpush1.bf16.msra.mxu0 0
  %1123 = vmatprep.subr.bf16.mxu0 0
  %1124 = vmatpush1.bf16.msra.mxu0 0
  %1125 = vmatprep.subr.bf16.mxu0 0
  %1126 = vmatpush1.bf16.msra.mxu0 0
  %1127 = vmatprep.mubr.bf16.mxu0 0
  %1128 = vmatmul.mubr.bf16.gmra.mrb[0].mxu0 %v1085
  %v1129 = vpop.f32.mrb[0].mxu0
  %v1130 = vadd.f32 0.0, %v1129
  %v1131 = vpop.f32.mrb[0].mxu0
  %v1132 = vadd.f32 0.0, %v1131
  %v1133 = vpop.f32.mrb[0].mxu0
  %v1134 = vpop.f32.mrb[0].mxu0
  %1135 = vdwg.mxu0
  %1136 = vmatprep.subr.bf16.mxu0 %v338
  %1137 = vmatpush1.bf16.msra.mxu0 %v337
  %1138 = vmatprep.subr.bf16.mxu0 %v342
  %1139 = vmatpush1.bf16.msra.mxu0 %v341
  %1140 = vmatprep.subr.bf16.mxu0 %v346
  %1141 = vmatpush1.bf16.msra.mxu0 %v345
  %1142 = vmatprep.subr.bf16.mxu0 %v350
  %1143 = vmatpush1.bf16.msra.mxu0 %v349
  %1144 = vmatprep.subr.bf16.mxu0 %v354
  %1145 = vmatpush1.bf16.msra.mxu0 %v353
  %1146 = vmatprep.subr.bf16.mxu0 %v358
  %1147 = vmatpush1.bf16.msra.mxu0 %v357
  %1148 = vmatprep.subr.bf16.mxu0 %v362
  %1149 = vmatpush1.bf16.msra.mxu0 %v361
  %1150 = vmatprep.subr.bf16.mxu0 %v366
  %1151 = vmatpush1.bf16.msra.mxu0 %v365
  %1152 = vmatprep.subr.bf16.mxu0 0
  %1153 = vmatpush1.bf16.msra.mxu0 0
  %1154 = vmatprep.subr.bf16.mxu0 0
  %1155 = vmatpush1.bf16.msra.mxu0 0
  %1156 = vmatprep.subr.bf16.mxu0 0
  %1157 = vmatpush1.bf16.msra.mxu0 0
  %1158 = vmatprep.subr.bf16.mxu0 0
  %1159 = vmatpush1.bf16.msra.mxu0 0
  %1160 = vmatprep.subr.bf16.mxu0 0
  %1161 = vmatpush1.bf16.msra.mxu0 0
  %1162 = vmatprep.subr.bf16.mxu0 0
  %1163 = vmatpush1.bf16.msra.mxu0 0
  %1164 = vmatprep.subr.bf16.mxu0 0
  %1165 = vmatpush1.bf16.msra.mxu0 0
  %1166 = vmatprep.subr.bf16.mxu0 0
  %1167 = vmatpush1.bf16.msra.mxu0 0
  %1168 = vmatprep.mubr.bf16.mxu0 0
  %1169 = vmatmul.mubr.bf16.gmra.mrb[0].mxu0 %v1085
  %v1170 = vpop.f32.mrb[0].mxu0
  %v1171 = vadd.f32 0.0, %v1170
  %v1172 = vpop.f32.mrb[0].mxu0
  %v1173 = vadd.f32 0.0, %v1172
  %v1174 = vpop.f32.mrb[0].mxu0
  %v1175 = vpop.f32.mrb[0].mxu0
  %1176 = vdwg.mxu0
  %v1177 = vadd.f32 %v1091, %v1130
  %v1178 = vadd.f32 %v1092, %v1132
  %v1179 = vadd.f32 %v1093, %v1171
  %v1180 = vadd.f32 %v1094, %v1173
  %v1181 = vxor.u32 %v1177, 2147483648
  %v1182 = vmul.f32 %v1181, 1.442695
  %v1183 = vpow.pop %v1182
  %v1184 = vadd.f32 %v1183, 1.0
  %v1185 = vrcp.pop %v1184
  %v1186 = vmul.f32 1.0, %v1185
  %v1187 = vxor.u32 %v1178, 2147483648
  %v1188 = vmul.f32 %v1187, 1.442695
  %v1189 = vpow.pop %v1188
  %v1190 = vadd.f32 %v1189, 1.0
  %v1191 = vrcp.pop %v1190
  %v1192 = vmul.f32 1.0, %v1191
  %v1193 = vtanh.pop %v1179
  %v1194 = vxor.u32 %v1180, 2147483648
  %v1195 = vmul.f32 %v1194, 1.442695
  %v1196 = vpow.pop %v1195
  %v1197 = vadd.f32 %v1196, 1.0
  %v1198 = vrcp.pop %v1197
  %v1199 = vmul.f32 1.0, %v1198
  %v1200 = vmul.f32 %v1192, %v1082
  %v1201 = vmul.f32 %v1186, %v1193
  %v1202 = vadd.f32 %v1200, %v1201
  %v1203 = vtanh.pop %v1202
  %v1204 = vmul.f32 %v1199, %v1203
  %v1205 = vpack.c.bf16 %v1204, %v1204
  %s1206 = scalar_lea.vmem %s4, 24
  %1207 = vst [vmem:[%s1206] sm:$0xf] %v1205
  %s1208 = scalar_lea.vmem %s0, 112
  %v1209 = vld [vmem:[%s1208] sm:$0xff]
  %v1210 = vld [vmem:[%s1208 + $0x8] sm:$0xff]
  %v1211 = vunpack.c.l.bf16 %v1209
  %v1212 = vunpack.c.h.bf16 %v1209
  %v1213 = vunpack.c.l.bf16 %v1210
  %v1214 = vunpack.c.h.bf16 %v1210
  %1215 = vmatprep.subr.bf16.mxu0 %v336
  %1216 = vmatpush1.bf16.msra.mxu0 %v335
  %1217 = vmatprep.subr.bf16.mxu0 %v340
  %1218 = vmatpush1.bf16.msra.mxu0 %v339
  %1219 = vmatprep.subr.bf16.mxu0 %v344
  %1220 = vmatpush1.bf16.msra.mxu0 %v343
  %1221 = vmatprep.subr.bf16.mxu0 %v348
  %1222 = vmatpush1.bf16.msra.mxu0 %v347
  %1223 = vmatprep.subr.bf16.mxu0 %v352
  %1224 = vmatpush1.bf16.msra.mxu0 %v351
  %1225 = vmatprep.subr.bf16.mxu0 %v356
  %1226 = vmatpush1.bf16.msra.mxu0 %v355
  %1227 = vmatprep.subr.bf16.mxu0 %v360
  %1228 = vmatpush1.bf16.msra.mxu0 %v359
  %1229 = vmatprep.subr.bf16.mxu0 %v364
  %1230 = vmatpush1.bf16.msra.mxu0 %v363
  %1231 = vmatprep.subr.bf16.mxu0 0
  %1232 = vmatpush1.bf16.msra.mxu0 0
  %1233 = vmatprep.subr.bf16.mxu0 0
  %1234 = vmatpush1.bf16.msra.mxu0 0
  %1235 = vmatprep.subr.bf16.mxu0 0
  %1236 = vmatpush1.bf16.msra.mxu0 0
  %1237 = vmatprep.subr.bf16.mxu0 0
  %1238 = vmatpush1.bf16.msra.mxu0 0
  %1239 = vmatprep.subr.bf16.mxu0 0
  %1240 = vmatpush1.bf16.msra.mxu0 0
  %1241 = vmatprep.subr.bf16.mxu0 0
  %1242 = vmatpush1.bf16.msra.mxu0 0
  %1243 = vmatprep.subr.bf16.mxu0 0
  %1244 = vmatpush1.bf16.msra.mxu0 0
  %1245 = vmatprep.subr.bf16.mxu0 0
  %1246 = vmatpush1.bf16.msra.mxu0 0
  %1247 = vmatprep.mubr.bf16.mxu0 0
  %1248 = vmatmul.mubr.bf16.gmra.mrb[0].mxu0 %v1205
  %v1249 = vpop.f32.mrb[0].mxu0
  %v1250 = vadd.f32 0.0, %v1249
  %v1251 = vpop.f32.mrb[0].mxu0
  %v1252 = vadd.f32 0.0, %v1251
  %v1253 = vpop.f32.mrb[0].mxu0
  %v1254 = vpop.f32.mrb[0].mxu0
  %1255 = vdwg.mxu0
  %1256 = vmatprep.subr.bf16.mxu0 %v338
  %1257 = vmatpush1.bf16.msra.mxu0 %v337
  %1258 = vmatprep.subr.bf16.mxu0 %v342
  %1259 = vmatpush1.bf16.msra.mxu0 %v341
  %1260 = vmatprep.subr.bf16.mxu0 %v346
  %1261 = vmatpush1.bf16.msra.mxu0 %v345
  %1262 = vmatprep.subr.bf16.mxu0 %v350
  %1263 = vmatpush1.bf16.msra.mxu0 %v349
  %1264 = vmatprep.subr.bf16.mxu0 %v354
  %1265 = vmatpush1.bf16.msra.mxu0 %v353
  %1266 = vmatprep.subr.bf16.mxu0 %v358
  %1267 = vmatpush1.bf16.msra.mxu0 %v357
  %1268 = vmatprep.subr.bf16.mxu0 %v362
  %1269 = vmatpush1.bf16.msra.mxu0 %v361
  %1270 = vmatprep.subr.bf16.mxu0 %v366
  %1271 = vmatpush1.bf16.msra.mxu0 %v365
  %1272 = vmatprep.subr.bf16.mxu0 0
  %1273 = vmatpush1.bf16.msra.mxu0 0
  %1274 = vmatprep.subr.bf16.mxu0 0
  %1275 = vmatpush1.bf16.msra.mxu0 0
  %1276 = vmatprep.subr.bf16.mxu0 0
  %1277 = vmatpush1.bf16.msra.mxu0 0
  %1278 = vmatprep.subr.bf16.mxu0 0
  %1279 = vmatpush1.bf16.msra.mxu0 0
  %1280 = vmatprep.subr.bf16.mxu0 0
  %1281 = vmatpush1.bf16.msra.mxu0 0
  %1282 = vmatprep.subr.bf16.mxu0 0
  %1283 = vmatpush1.bf16.msra.mxu0 0
  %1284 = vmatprep.subr.bf16.mxu0 0
  %1285 = vmatpush1.bf16.msra.mxu0 0
  %1286 = vmatprep.subr.bf16.mxu0 0
  %1287 = vmatpush1.bf16.msra.mxu0 0
  %1288 = vmatprep.mubr.bf16.mxu0 0
  %1289 = vmatmul.mubr.bf16.gmra.mrb[0].mxu0 %v1205
  %v1290 = vpop.f32.mrb[0].mxu0
  %v1291 = vadd.f32 0.0, %v1290
  %v1292 = vpop.f32.mrb[0].mxu0
  %v1293 = vadd.f32 0.0, %v1292
  %v1294 = vpop.f32.mrb[0].mxu0
  %v1295 = vpop.f32.mrb[0].mxu0
  %1296 = vdwg.mxu0
  %v1297 = vadd.f32 %v1211, %v1250
  %v1298 = vadd.f32 %v1212, %v1252
  %v1299 = vadd.f32 %v1213, %v1291
  %v1300 = vadd.f32 %v1214, %v1293
  %v1301 = vxor.u32 %v1297, 2147483648
  %v1302 = vmul.f32 %v1301, 1.442695
  %v1303 = vpow.pop %v1302
  %v1304 = vadd.f32 %v1303, 1.0
  %v1305 = vrcp.pop %v1304
  %v1306 = vmul.f32 1.0, %v1305
  %v1307 = vxor.u32 %v1298, 2147483648
  %v1308 = vmul.f32 %v1307, 1.442695
  %v1309 = vpow.pop %v1308
  %v1310 = vadd.f32 %v1309, 1.0
  %v1311 = vrcp.pop %v1310
  %v1312 = vmul.f32 1.0, %v1311
  %v1313 = vtanh.pop %v1299
  %v1314 = vxor.u32 %v1300, 2147483648
  %v1315 = vmul.f32 %v1314, 1.442695
  %v1316 = vpow.pop %v1315
  %v1317 = vadd.f32 %v1316, 1.0
  %v1318 = vrcp.pop %v1317
  %v1319 = vmul.f32 1.0, %v1318
  %v1320 = vmul.f32 %v1312, %v1202
  %v1321 = vmul.f32 %v1306, %v1313
  %v1322 = vadd.f32 %v1320, %v1321
  %v1323 = vtanh.pop %v1322
  %v1324 = vmul.f32 %v1319, %v1323
  %v1325 = vpack.c.bf16 %v1324, %v1324
  %s1326 = scalar_lea.vmem %s4, 28
  %1327 = vst [vmem:[%s1326] sm:$0xf] %v1325
  %1328 = vst [vmem:[%s5] sm:$0xff] %v1324
  %1329 = vst [vmem:[%s6] sm:$0xff] %v1322
  // Predicated region
  $region55: #{rnn_model_forward.6} parent=0 // pred_check
    _
  $region56: #{rnn_model_forward.6} parent=0 // pred_check_branch
    %1331 = sbr.rel (0) target = $region58
  $region57: #{rnn_model_forward.6} parent=0 // pred_region
    _
  $region58: #{rnn_model_forward.6} parent=0 // pred_fallthru
    _
  // Predicated region
  $region59: #{rnn_model_forward.6} parent=0 // pred_check
    _
  $region60: #{rnn_model_forward.6} parent=0 // pred_check_branch
    %1333 = sbr.rel (0) target = $region62
  $region61: #{rnn_model_forward.6} parent=0 // pred_region
    _
  $region62: #{rnn_model_forward.6} parent=0 // pred_fallthru
    _
  // Predicated region
  $region63: #{rnn_model_forward.6} parent=0 // pred_check
    _
  $region64: #{rnn_model_forward.6} parent=0 // pred_check_branch
    %1335 = sbr.rel (0) target = $region66
  $region65: #{rnn_model_forward.6} parent=0 // pred_region
    _
  $region66: #{rnn_model_forward.6} parent=0 // pred_fallthru
    _
  // Predicated region
  $region67: #{rnn_model_forward.6} parent=0 // pred_check
    _
  $region68: #{rnn_model_forward.6} parent=0 // pred_check_branch
    %1337 = sbr.rel (0) target = $region70
  $region69: #{rnn_model_forward.6} parent=0 // pred_region
    _
  $region70: #{rnn_model_forward.6} parent=0 // pred_fallthru
    _
  // Predicated region
  $region71: #{rnn_model_forward.6} parent=0 // pred_check
    _
  $region72: #{rnn_model_forward.6} parent=0 // pred_check_branch
    %1339 = sbr.rel (0) target = $region74
  $region73: #{rnn_model_forward.6} parent=0 // pred_region
    _
  $region74: #{rnn_model_forward.6} parent=0 // pred_fallthru
    _
  // Predicated region
  $region75: #{rnn_model_forward.6} parent=0 // pred_check
    _
  $region76: #{rnn_model_forward.6} parent=0 // pred_check_branch
    %1341 = sbr.rel (0) target = $region78
  $region77: #{rnn_model_forward.6} parent=0 // pred_region
    _
  $region78: #{rnn_model_forward.6} parent=0 // pred_fallthru
    _
  %1342 = vsyncmov [#allocation3]
  %s1343 = vpop.sfrf %1342
  %p1344 = scmp.eq.s32.totalorder %s1343, 0
  %p1345 = pneg %p1344
  %1347 = shalt.err (%p1345)

</llo_original>
